<compile_context>
chip_gen: v6e
topology: v6e:2x2x1
jax: 0.10.0
libtpu: 0.0.40
codegen_flags: <defaults>
</compile_context>

<pallas_src>
import math
import functools

import numpy as np
import jax
import jax.numpy as jnp
from jax import lax
from jax.experimental import pallas as pl
from jax.experimental.pallas import tpu as pltpu


GROUP = 2  # kv blocks processed per grid step (two K/V refs in the kernel)


# ----------------------------- Pallas kernel -----------------------------

def _block_sparse_attn_kernel(row_ref, kv0_ref, kv1_ref, flag_ref,
                              q_ref, k0_ref, v0_ref, k1_ref, v1_ref,
                              o_ref, acc_ref, *, scale):
    # grid = (B, T): T walks the flattened list of active work items
    # (one query-block row x up to GROUP active kv blocks per item).
    t = pl.program_id(1)
    flags = flag_ref[t]
    is_first = (flags & 1) != 0        # first work item of this query row
    is_last = (flags & 2) != 0         # last  work item of this query row
    has_second = (flags & 4) != 0      # kv slot 1 is a real (non-pad) block

    @pl.when(is_first)
    def _init():
        acc_ref[...] = jnp.zeros_like(acc_ref)

    q = q_ref[...]                                             # (H, bs, D) bf16

    def one_block(k_ref, v_ref):
        # Per-block softmax(Q K^T / sqrt(D)) @ V, exactly as the reference:
        # no cross-block renormalization.  1/sqrt(D) is folded into the exp
        # argument (q stays resident/unscaled across the row); the normalizing
        # reciprocal (EUP, approx) is applied to the (bs, D) PV output rather
        # than the (bs, bs) probability tile.
        s = jnp.einsum('hqd,hkd->hqk', q, k_ref[...],
                       preferred_element_type=jnp.float32)     # (H, bs, bs)
        m = jnp.max(s, axis=-1, keepdims=True)
        p = jnp.exp((s - m) * scale)
        denom = jnp.sum(p, axis=-1, keepdims=True)
        out = jnp.einsum('hqk,hkd->hqd', p.astype(v_ref.dtype), v_ref[...],
                         preferred_element_type=jnp.float32)   # (H, bs, D)
        return out * pl.reciprocal(denom, approx=True)

    acc_ref[...] += one_block(k0_ref, v0_ref)

    @pl.when(has_second)
    def _second():
        acc_ref[...] += one_block(k1_ref, v1_ref)

    @pl.when(is_last)
    def _finalize():
        o_ref[...] = acc_ref[...].astype(o_ref.dtype)


# --------------------- compressed active-block work list --------------------

def _compress_block_mask(mask_np):
    """bool [nbq, nbk] -> flattened active-work-item arrays.

    Each work item covers one query-block row and up to GROUP active kv
    blocks.  Returns (row_ids, kv0, kv1, flags), all int32 of length
    T = sum_i ceil(count_i / GROUP).  flags: bit0 = first item of its row,
    bit1 = last item of its row, bit2 = kv slot 1 is valid (not a pad)."""
    mask = np.asarray(mask_np, dtype=bool)
    nbq, _ = mask.shape
    row_ids, kv0, kv1, flags = [], [], [], []
    for i in range(nbq):
        idx = np.nonzero(mask[i])[0].astype(np.int32)
        # The block-level causal part of the mask guarantees >= 1 active block
        # per query row (so every output block gets written exactly once).
        assert idx.size > 0, "every query-block row must have an active block"
        n_items = (idx.size + GROUP - 1) // GROUP
        for s in range(n_items):
            a = int(idx[GROUP * s])
            second_ok = GROUP * s + 1 < idx.size
            b = int(idx[GROUP * s + 1]) if second_ok else a
            f = ((1 if s == 0 else 0)
                 | (2 if s == n_items - 1 else 0)
                 | (4 if second_ok else 0))
            row_ids.append(i)
            kv0.append(a)
            kv1.append(b)
            flags.append(f)
    return (np.asarray(row_ids, np.int32), np.asarray(kv0, np.int32),
            np.asarray(kv1, np.int32), np.asarray(flags, np.int32))


def block_sparse_attention(q, k, v, block_mask, block_size):
    """q, k, v: [B, H, S, D].  block_mask: host-side bool [nbq, nbk]."""
    B, H, S, D = q.shape
    Sk = k.shape[2]
    assert S % block_size == 0 and Sk % block_size == 0
    assert block_size % 8 == 0 and D % 128 == 0
    row_ids, kv0, kv1, flags = _compress_block_mask(block_mask)
    T = int(row_ids.shape[0])
    scale = 1.0 / math.sqrt(D)

    # MXU wants bf16 operands; accumulation stays f32 via
    # preferred_element_type + the f32 VMEM scratch accumulator.
    qb = q.astype(jnp.bfloat16)
    kb = k.astype(jnp.bfloat16)
    vb = v.astype(jnp.bfloat16)

    kernel = functools.partial(_block_sparse_attn_kernel, scale=scale)

    def qo_map(b, t, rows, kv0s, kv1s, flgs):
        return (b, 0, rows[t], 0)

    def kv0_map(b, t, rows, kv0s, kv1s, flgs):
        return (b, 0, kv0s[t], 0)

    def kv1_map(b, t, rows, kv0s, kv1s, flgs):
        return (b, 0, kv1s[t], 0)

    # Heads are batched into every tile; B is squeezed; (block_size, D) are
    # the lane/sublane dims -> (128, 128) MXU-native, lane-dense output.
    tile = (None, H, block_size, D)
    kv_spec0 = pl.BlockSpec(tile, kv0_map)
    kv_spec1 = pl.BlockSpec(tile, kv1_map)
    # TODO(synk): on v5e consider pipeline_mode=pl.Buffered(3) on the K/V
    # specs to ride out latency spikes from the gathered kv-block fetches.

    return pl.pallas_call(
        kernel,
        out_shape=jax.ShapeDtypeStruct((B, H, S, D), q.dtype),
        grid_spec=pltpu.PrefetchScalarGridSpec(
            num_scalar_prefetch=4,
            grid=(B, T),
            in_specs=[
                pl.BlockSpec(tile, qo_map),   # q (resident across the row)
                kv_spec0,                     # k, slot 0
                kv_spec0,                     # v, slot 0
                kv_spec1,                     # k, slot 1
                kv_spec1,                     # v, slot 1
            ],
            out_specs=pl.BlockSpec(tile, qo_map),
            scratch_shapes=[pltpu.VMEM((H, block_size, D), jnp.float32)],
        ),
        compiler_params=pltpu.CompilerParams(
            dimension_semantics=("parallel", "arbitrary")),
    )(jnp.asarray(row_ids), jnp.asarray(kv0), jnp.asarray(kv1),
      jnp.asarray(flags), qb, kb, vb, kb, vb)


# ------------------------- block-sparse mask gen --------------------------

def generate_block_sparse_mask(rows, cols, block_size, sparsity, key):
    """Host-side (numpy) block mask: block-level causal + random extras,
    matching BlockSparseMaskGenerator."""
    nbr = -(-rows // block_size)
    nbc = -(-cols // block_size)
    mask = np.zeros((nbr, nbc), dtype=bool)
    for i in range(min(nbr, nbc)):
        mask[i, :i + 1] = True
    if sparsity < 1.0:
        n_active = int((1.0 - sparsity) * nbr * nbc)
        if n_active > 0:
            perm = np.asarray(jax.random.permutation(key, nbr * nbc))[:n_active]
            mask[perm // nbc, perm % nbc] = True
    return mask


# ------------------------------ module glue -------------------------------

class BlockSparseAttentionJAX:
    """JAX/Pallas port of the PyTorch BlockSparseAttention module."""

    def __init__(self, n_embd, n_head, block_size=128, sparsity=0.8, key=None):
        assert n_embd % n_head == 0
        self.n_embd = n_embd
        self.n_head = n_head
        self.head_dim = n_embd // n_head
        self.block_size = block_size
        self.sparsity = sparsity
        if key is None:
            key = jax.random.PRNGKey(0)
        ks = jax.random.split(key, 9)
        init = lambda kk: 0.02 * jax.random.normal(kk, (n_embd, n_embd),
                                                   jnp.float32)
        # Linear params stored as (in, out): y = x @ W + b
        self.wq, self.wk = init(ks[0]), init(ks[1])
        self.wv, self.wo = init(ks[2]), init(ks[3])
        self.bq = 0.02 * jax.random.normal(ks[4], (n_embd,), jnp.float32)
        self.bk = 0.02 * jax.random.normal(ks[5], (n_embd,), jnp.float32)
        self.bv = 0.02 * jax.random.normal(ks[6], (n_embd,), jnp.float32)
        self.bo = 0.02 * jax.random.normal(ks[7], (n_embd,), jnp.float32)
        self.mask_key = ks[8]

    def __call__(self, x):
        B, S, E = x.shape
        H, D = self.n_head, self.head_dim

        q = (x @ self.wq + self.bq).reshape(B, S, H, D).transpose(0, 2, 1, 3)
        k = (x @ self.wk + self.bk).reshape(B, S, H, D).transpose(0, 2, 1, 3)
        v = (x @ self.wv + self.bv).reshape(B, S, H, D).transpose(0, 2, 1, 3)

        block_mask = generate_block_sparse_mask(
            S, S, self.block_size, self.sparsity, self.mask_key)

        attn = block_sparse_attention(q, k, v, block_mask, self.block_size)
        attn = attn.transpose(0, 2, 1, 3).reshape(B, S, E)
        return attn @ self.wo + self.bo, block_mask, (q, k, v)


# ----------------------------- pure-JAX reference -------------------------

def ref_block_sparse_attention(q, k, v, block_mask_np, block_size):
    B, H, S, D = q.shape
    scale = 1.0 / math.sqrt(D)
    out = jnp.zeros_like(q)
    mask = np.asarray(block_mask_np, dtype=bool)
    nbq, nbk = mask.shape
    for i in range(nbq):
        for j in range(nbk):
            if mask[i, j]:
                rs, re = i * block_size, (i + 1) * block_size
                cs, ce = j * block_size, (j + 1) * block_size
                s = jnp.einsum('bhqd,bhkd->bhqk',
                               q[:, :, rs:re], k[:, :, cs:ce]) * scale
                p = jax.nn.softmax(s, axis=-1)
                out = out.at[:, :, rs:re].add(
                    jnp.einsum('bhqk,bhkd->bhqd', p, v[:, :, cs:ce]))
    return out


# --------------------------------- main ------------------------------------

if __name__ == "__main__":
    key = jax.random.PRNGKey(0)
    k_params, k_x = jax.random.split(key)

    # MXU/lane-friendly small shapes: head_dim = 128 (lane-dense output),
    # block_size = 128 (128x128 score matmuls), nbq = nbk = 4 blocks.
    B, S, E, H = 2, 512, 512, 4
    block_size = 128
    sparsity = 0.8

    model = BlockSparseAttentionJAX(E, H, block_size=block_size,
                                    sparsity=sparsity, key=k_params)
    x = jax.random.normal(k_x, (B, S, E), jnp.float32)

    out, block_mask, (q, k, v) = model(x)
    out = jax.block_until_ready(out)

    # correctness check of the Pallas hot path against a pure-JAX f32 reference
    attn_pallas = jax.block_until_ready(
        block_sparse_attention(q, k, v, block_mask, block_size))
    attn_ref = ref_block_sparse_attention(q, k, v, block_mask, block_size)
    # tolerance accounts for the bf16 MXU operands + approx-reciprocal softmax
    np.testing.assert_allclose(np.asarray(attn_pallas), np.asarray(attn_ref),
                               rtol=2e-2, atol=2e-2)

    print("KERNEL_OK")
</pallas_src>

<mosaic_0001>
module attributes {stable_mosaic.version = 11 : i64} {
  func.func @_block_sparse_attn_kernel(%arg0: i32, %arg1: i32, %arg2: memref<6xi32, #tpu.memory_space<smem>>, %arg3: memref<6xi32, #tpu.memory_space<smem>>, %arg4: memref<6xi32, #tpu.memory_space<smem>>, %arg5: memref<6xi32, #tpu.memory_space<smem>>, %arg6: memref<1x4x128x128xbf16, #tpu.memory_space<vmem>>, %arg7: memref<1x4x128x128xbf16, #tpu.memory_space<vmem>>, %arg8: memref<1x4x128x128xbf16, #tpu.memory_space<vmem>>, %arg9: memref<1x4x128x128xbf16, #tpu.memory_space<vmem>>, %arg10: memref<1x4x128x128xbf16, #tpu.memory_space<vmem>>, %arg11: memref<1x4x128x128xf32, #tpu.memory_space<vmem>>, %arg12: memref<4x128x128xf32, #tpu.memory_space<vmem>>) attributes {dimension_semantics = [#tpu.dimension_semantics<parallel>, #tpu.dimension_semantics<arbitrary>], iteration_bounds = array<i64: 2, 6>, scalar_prefetch = 4 : i64, scratch_operands = 1 : i64, tpu.core_type = #tpu.core_type<tc>, window_params = [{transform_indices = @transform_0, window_bounds = array<i64: 1, 4, 128, 128>}, {transform_indices = @transform_1, window_bounds = array<i64: 1, 4, 128, 128>}, {transform_indices = @transform_2, window_bounds = array<i64: 1, 4, 128, 128>}, {transform_indices = @transform_3, window_bounds = array<i64: 1, 4, 128, 128>}, {transform_indices = @transform_4, window_bounds = array<i64: 1, 4, 128, 128>}, {transform_indices = @transform_5, window_bounds = array<i64: 1, 4, 128, 128>}]} {
    %0 = arith.index_cast %arg1 : i32 to index
    %1 = memref.load %arg5[%0] : memref<6xi32, #tpu.memory_space<smem>>
    %c1_i32 = arith.constant 1 : i32
    %2 = arith.andi %1, %c1_i32 : i32
    %c0_i32 = arith.constant 0 : i32
    %3 = arith.cmpi ne, %2, %c0_i32 : i32
    %c2_i32 = arith.constant 2 : i32
    %4 = arith.andi %1, %c2_i32 : i32
    %c0_i32_0 = arith.constant 0 : i32
    %5 = arith.cmpi ne, %4, %c0_i32_0 : i32
    %c4_i32 = arith.constant 4 : i32
    %6 = arith.andi %1, %c4_i32 : i32
    %c0_i32_1 = arith.constant 0 : i32
    %7 = arith.cmpi ne, %6, %c0_i32_1 : i32
    %8 = arith.extui %3 : i1 to i32
    %c0_i32_2 = arith.constant 0 : i32
    %9 = arith.cmpi ne, %8, %c0_i32_2 : i32
    scf.if %9 {
      %cst_26 = arith.constant 0.000000e+00 : f32
      %38 = vector.broadcast %cst_26 : f32 to vector<4x128x128xf32>
      %c0_27 = arith.constant 0 : index
      %c0_28 = arith.constant 0 : index
      %c0_29 = arith.constant 0 : index
      %39 = vector.load %arg12[%c0_27, %c0_28, %c0_29] : memref<4x128x128xf32, #tpu.memory_space<vmem>>, vector<4x128x128xf32>
      tpu.vector_store %arg12[%c0_27, %c0_28, %c0_29], %38 {strides = array<i32>} : memref<4x128x128xf32, #tpu.memory_space<vmem>>, vector<4x128x128xf32>,
    } else {
    }
    %c0 = arith.constant 0 : index
    %c0_3 = arith.constant 0 : index
    %c0_4 = arith.constant 0 : index
    %c0_5 = arith.constant 0 : index
    %10 = vector.load %arg6[%c0, %c0_3, %c0_4, %c0_5] : memref<1x4x128x128xbf16, #tpu.memory_space<vmem>>, vector<1x4x128x128xbf16>
    %11 = vector.shape_cast %10 : vector<1x4x128x128xbf16> to vector<4x128x128xbf16>
    %c0_6 = arith.constant 0 : index
    %c0_7 = arith.constant 0 : index
    %c0_8 = arith.constant 0 : index
    %12 = vector.load %arg12[%c0_6, %c0_7, %c0_8] : memref<4x128x128xf32, #tpu.memory_space<vmem>>, vector<4x128x128xf32>
    %c0_9 = arith.constant 0 : index
    %c0_10 = arith.constant 0 : index
    %c0_11 = arith.constant 0 : index
    %c0_12 = arith.constant 0 : index
    %13 = vector.load %arg7[%c0_9, %c0_10, %c0_11, %c0_12] : memref<1x4x128x128xbf16, #tpu.memory_space<vmem>>, vector<1x4x128x128xbf16>
    %14 = vector.shape_cast %13 : vector<1x4x128x128xbf16> to vector<4x128x128xbf16>
    "tpu.trace_start"() <{level = 10 : i32, message = "hqd,hkd->hqk"}> : () -> ()
    %cst = arith.constant dense<0.000000e+00> : vector<4x128x128xf32>
    %15 = tpu.matmul %11, %14, %cst {dimension_numbers = #tpu.dot_dimension_numbers<[2], [2], [1], [1], [0, 0, 0, 1, 1, 1], [0], [0]>} : vector<4x128x128xbf16>, vector<4x128x128xbf16>, vector<4x128x128xf32> -> vector<4x128x128xf32>
    "tpu.trace_stop"() : () -> ()
    %cst_13 = arith.constant dense<0xFF800000> : vector<4x128xf32>
    %16 = vector.multi_reduction <maximumf>, %15, %cst_13 [2] : vector<4x128x128xf32> to vector<4x128xf32>
    %17 = vector.shape_cast %16 : vector<4x128xf32> to vector<4x128x1xf32>
    %18 = vector.broadcast %17 : vector<4x128x1xf32> to vector<4x128x128xf32>
    %19 = arith.subf %15, %18 : vector<4x128x128xf32>
    %cst_14 = arith.constant 0.0883883461 : f32
    %20 = vector.broadcast %cst_14 : f32 to vector<4x128x128xf32>
    %21 = arith.mulf %19, %20 : vector<4x128x128xf32>
    %22 = math.exp %21 : vector<4x128x128xf32>
    %cst_15 = arith.constant dense<0.000000e+00> : vector<4x128xf32>
    %23 = vector.multi_reduction <add>, %22, %cst_15 [2] : vector<4x128x128xf32> to vector<4x128xf32>
    %24 = vector.shape_cast %23 : vector<4x128xf32> to vector<4x128x1xf32>
    %25 = arith.truncf %22 : vector<4x128x128xf32> to vector<4x128x128xbf16>
    %c0_16 = arith.constant 0 : index
    %c0_17 = arith.constant 0 : index
    %c0_18 = arith.constant 0 : index
    %c0_19 = arith.constant 0 : index
    %26 = vector.load %arg8[%c0_16, %c0_17, %c0_18, %c0_19] : memref<1x4x128x128xbf16, #tpu.memory_space<vmem>>, vector<1x4x128x128xbf16>
    %27 = vector.shape_cast %26 : vector<1x4x128x128xbf16> to vector<4x128x128xbf16>
    "tpu.trace_start"() <{level = 10 : i32, message = "hqk,hkd->hqd"}> : () -> ()
    %cst_20 = arith.constant dense<0.000000e+00> : vector<4x128x128xf32>
    %28 = tpu.matmul %25, %27, %cst_20 {dimension_numbers = #tpu.dot_dimension_numbers<[2], [1], [1], [2], [0, 0, 0, 1, 1, 2], [0], [0]>} : vector<4x128x128xbf16>, vector<4x128x128xbf16>, vector<4x128x128xf32> -> vector<4x128x128xf32>
    "tpu.trace_stop"() : () -> ()
    %29 = tpu.reciprocal %24 {approx = true} : vector<4x128x1xf32> -> vector<4x128x1xf32>
    %30 = vector.broadcast %29 : vector<4x128x1xf32> to vector<4x128x128xf32>
    %31 = arith.mulf %28, %30 : vector<4x128x128xf32>
    %32 = arith.addf %12, %31 : vector<4x128x128xf32>
    %c0_21 = arith.constant 0 : index
    %c0_22 = arith.constant 0 : index
    %c0_23 = arith.constant 0 : index
    %33 = vector.load %arg12[%c0_21, %c0_22, %c0_23] : memref<4x128x128xf32, #tpu.memory_space<vmem>>, vector<4x128x128xf32>
    tpu.vector_store %arg12[%c0_21, %c0_22, %c0_23], %32 {strides = array<i32>} : memref<4x128x128xf32, #tpu.memory_space<vmem>>, vector<4x128x128xf32>,
    %34 = arith.extui %7 : i1 to i32
    %c0_i32_24 = arith.constant 0 : i32
    %35 = arith.cmpi ne, %34, %c0_i32_24 : i32
    scf.if %35 {
      %c0_26 = arith.constant 0 : index
      %c0_27 = arith.constant 0 : index
      %c0_28 = arith.constant 0 : index
      %38 = vector.load %arg12[%c0_26, %c0_27, %c0_28] : memref<4x128x128xf32, #tpu.memory_space<vmem>>, vector<4x128x128xf32>
      %c0_29 = arith.constant 0 : index
      %c0_30 = arith.constant 0 : index
      %c0_31 = arith.constant 0 : index
      %c0_32 = arith.constant 0 : index
      %39 = vector.load %arg9[%c0_29, %c0_30, %c0_31, %c0_32] : memref<1x4x128x128xbf16, #tpu.memory_space<vmem>>, vector<1x4x128x128xbf16>
      %40 = vector.shape_cast %39 : vector<1x4x128x128xbf16> to vector<4x128x128xbf16>
      "tpu.trace_start"() <{level = 10 : i32, message = "hqd,hkd->hqk"}> : () -> ()
      %cst_33 = arith.constant dense<0.000000e+00> : vector<4x128x128xf32>
      %41 = tpu.matmul %11, %40, %cst_33 {dimension_numbers = #tpu.dot_dimension_numbers<[2], [2], [1], [1], [0, 0, 0, 1, 1, 1], [0], [0]>} : vector<4x128x128xbf16>, vector<4x128x128xbf16>, vector<4x128x128xf32> -> vector<4x128x128xf32>
      "tpu.trace_stop"() : () -> ()
      %cst_34 = arith.constant dense<0xFF800000> : vector<4x128xf32>
      %42 = vector.multi_reduction <maximumf>, %41, %cst_34 [2] : vector<4x128x128xf32> to vector<4x128xf32>
      %43 = vector.shape_cast %42 : vector<4x128xf32> to vector<4x128x1xf32>
      %44 = vector.broadcast %43 : vector<4x128x1xf32> to vector<4x128x128xf32>
      %45 = arith.subf %41, %44 : vector<4x128x128xf32>
      %cst_35 = arith.constant 0.0883883461 : f32
      %46 = vector.broadcast %cst_35 : f32 to vector<4x128x128xf32>
      %47 = arith.mulf %45, %46 : vector<4x128x128xf32>
      %48 = math.exp %47 : vector<4x128x128xf32>
      %cst_36 = arith.constant dense<0.000000e+00> : vector<4x128xf32>
      %49 = vector.multi_reduction <add>, %48, %cst_36 [2] : vector<4x128x128xf32> to vector<4x128xf32>
      %50 = vector.shape_cast %49 : vector<4x128xf32> to vector<4x128x1xf32>
      %51 = arith.truncf %48 : vector<4x128x128xf32> to vector<4x128x128xbf16>
      %c0_37 = arith.constant 0 : index
      %c0_38 = arith.constant 0 : index
      %c0_39 = arith.constant 0 : index
      %c0_40 = arith.constant 0 : index
      %52 = vector.load %arg10[%c0_37, %c0_38, %c0_39, %c0_40] : memref<1x4x128x128xbf16, #tpu.memory_space<vmem>>, vector<1x4x128x128xbf16>
      %53 = vector.shape_cast %52 : vector<1x4x128x128xbf16> to vector<4x128x128xbf16>
      "tpu.trace_start"() <{level = 10 : i32, message = "hqk,hkd->hqd"}> : () -> ()
      %cst_41 = arith.constant dense<0.000000e+00> : vector<4x128x128xf32>
      %54 = tpu.matmul %51, %53, %cst_41 {dimension_numbers = #tpu.dot_dimension_numbers<[2], [1], [1], [2], [0, 0, 0, 1, 1, 2], [0], [0]>} : vector<4x128x128xbf16>, vector<4x128x128xbf16>, vector<4x128x128xf32> -> vector<4x128x128xf32>
      "tpu.trace_stop"() : () -> ()
      %55 = tpu.reciprocal %50 {approx = true} : vector<4x128x1xf32> -> vector<4x128x1xf32>
      %56 = vector.broadcast %55 : vector<4x128x1xf32> to vector<4x128x128xf32>
      %57 = arith.mulf %54, %56 : vector<4x128x128xf32>
      %58 = arith.addf %38, %57 : vector<4x128x128xf32>
      %c0_42 = arith.constant 0 : index
      %c0_43 = arith.constant 0 : index
      %c0_44 = arith.constant 0 : index
      %59 = vector.load %arg12[%c0_42, %c0_43, %c0_44] : memref<4x128x128xf32, #tpu.memory_space<vmem>>, vector<4x128x128xf32>
      tpu.vector_store %arg12[%c0_42, %c0_43, %c0_44], %58 {strides = array<i32>} : memref<4x128x128xf32, #tpu.memory_space<vmem>>, vector<4x128x128xf32>,
    } else {
    }
    %36 = arith.extui %5 : i1 to i32
    %c0_i32_25 = arith.constant 0 : i32
    %37 = arith.cmpi ne, %36, %c0_i32_25 : i32
    scf.if %37 {
      %c0_26 = arith.constant 0 : index
      %c0_27 = arith.constant 0 : index
      %c0_28 = arith.constant 0 : index
      %38 = vector.load %arg12[%c0_26, %c0_27, %c0_28] : memref<4x128x128xf32, #tpu.memory_space<vmem>>, vector<4x128x128xf32>
      %c0_29 = arith.constant 0 : index
      %c0_30 = arith.constant 0 : index
      %c0_31 = arith.constant 0 : index
      %c0_32 = arith.constant 0 : index
      %39 = vector.load %arg11[%c0_29, %c0_30, %c0_31, %c0_32] : memref<1x4x128x128xf32, #tpu.memory_space<vmem>>, vector<1x4x128x128xf32>
      %40 = vector.shape_cast %39 : vector<1x4x128x128xf32> to vector<4x128x128xf32>
      %41 = vector.shape_cast %38 : vector<4x128x128xf32> to vector<1x4x128x128xf32>
      tpu.vector_store %arg11[%c0_29, %c0_30, %c0_31, %c0_32], %41 {strides = array<i32>} : memref<1x4x128x128xf32, #tpu.memory_space<vmem>>, vector<1x4x128x128xf32>,
    } else {
    }
    return
  }
  func.func @transform_0(%arg0: i32, %arg1: i32, %arg2: memref<6xi32, #tpu.memory_space<smem>>, %arg3: memref<6xi32, #tpu.memory_space<smem>>, %arg4: memref<6xi32, #tpu.memory_space<smem>>, %arg5: memref<6xi32, #tpu.memory_space<smem>>) -> (i32, i32, i32, i32) {
    %0 = arith.index_cast %arg1 : i32 to index
    %1 = memref.load %arg2[%0] : memref<6xi32, #tpu.memory_space<smem>>
    %c0_i32 = arith.constant 0 : i32
    %c0_i32_0 = arith.constant 0 : i32
    %c0_i32_1 = arith.constant 0 : i32
    return %arg0, %c0_i32, %1, %c0_i32_0 : i32, i32, i32, i32
  }
  func.func @transform_1(%arg0: i32, %arg1: i32, %arg2: memref<6xi32, #tpu.memory_space<smem>>, %arg3: memref<6xi32, #tpu.memory_space<smem>>, %arg4: memref<6xi32, #tpu.memory_space<smem>>, %arg5: memref<6xi32, #tpu.memory_space<smem>>) -> (i32, i32, i32, i32) {
    %0 = arith.index_cast %arg1 : i32 to index
    %1 = memref.load %arg3[%0] : memref<6xi32, #tpu.memory_space<smem>>
    %c0_i32 = arith.constant 0 : i32
    %c0_i32_0 = arith.constant 0 : i32
    %c0_i32_1 = arith.constant 0 : i32
    return %arg0, %c0_i32, %1, %c0_i32_0 : i32, i32, i32, i32
  }
  func.func @transform_2(%arg0: i32, %arg1: i32, %arg2: memref<6xi32, #tpu.memory_space<smem>>, %arg3: memref<6xi32, #tpu.memory_space<smem>>, %arg4: memref<6xi32, #tpu.memory_space<smem>>, %arg5: memref<6xi32, #tpu.memory_space<smem>>) -> (i32, i32, i32, i32) {
    %0 = arith.index_cast %arg1 : i32 to index
    %1 = memref.load %arg3[%0] : memref<6xi32, #tpu.memory_space<smem>>
    %c0_i32 = arith.constant 0 : i32
    %c0_i32_0 = arith.constant 0 : i32
    %c0_i32_1 = arith.constant 0 : i32
    return %arg0, %c0_i32, %1, %c0_i32_0 : i32, i32, i32, i32
  }
  func.func @transform_3(%arg0: i32, %arg1: i32, %arg2: memref<6xi32, #tpu.memory_space<smem>>, %arg3: memref<6xi32, #tpu.memory_space<smem>>, %arg4: memref<6xi32, #tpu.memory_space<smem>>, %arg5: memref<6xi32, #tpu.memory_space<smem>>) -> (i32, i32, i32, i32) {
    %0 = arith.index_cast %arg1 : i32 to index
    %1 = memref.load %arg4[%0] : memref<6xi32, #tpu.memory_space<smem>>
    %c0_i32 = arith.constant 0 : i32
    %c0_i32_0 = arith.constant 0 : i32
    %c0_i32_1 = arith.constant 0 : i32
    return %arg0, %c0_i32, %1, %c0_i32_0 : i32, i32, i32, i32
  }
  func.func @transform_4(%arg0: i32, %arg1: i32, %arg2: memref<6xi32, #tpu.memory_space<smem>>, %arg3: memref<6xi32, #tpu.memory_space<smem>>, %arg4: memref<6xi32, #tpu.memory_space<smem>>, %arg5: memref<6xi32, #tpu.memory_space<smem>>) -> (i32, i32, i32, i32) {
    %0 = arith.index_cast %arg1 : i32 to index
    %1 = memref.load %arg4[%0] : memref<6xi32, #tpu.memory_space<smem>>
    %c0_i32 = arith.constant 0 : i32
    %c0_i32_0 = arith.constant 0 : i32
    %c0_i32_1 = arith.constant 0 : i32
    return %arg0, %c0_i32, %1, %c0_i32_0 : i32, i32, i32, i32
  }
  func.func @transform_5(%arg0: i32, %arg1: i32, %arg2: memref<6xi32, #tpu.memory_space<smem>>, %arg3: memref<6xi32, #tpu.memory_space<smem>>, %arg4: memref<6xi32, #tpu.memory_space<smem>>, %arg5: memref<6xi32, #tpu.memory_space<smem>>) -> (i32, i32, i32, i32) {
    %0 = arith.index_cast %arg1 : i32 to index
    %1 = memref.load %arg2[%0] : memref<6xi32, #tpu.memory_space<smem>>
    %c0_i32 = arith.constant 0 : i32
    %c0_i32_0 = arith.constant 0 : i32
    %c0_i32_1 = arith.constant 0 : i32
    return %arg0, %c0_i32, %1, %c0_i32_0 : i32, i32, i32, i32
  }
}

</mosaic_0001>

<llo_original>
// kernel: tpu_custom_call.1
$region0: #{tpu_custom_call.1}
  #allocation0 [shape = 'u32[]', space=smem, size = 0x4, offset = 0x4, fixed_abs, tag = 'smem constant byte address 0x4 - core index']
  #allocation1 [shape = 'u32[144,128]{1,0:T(1,128)}', space=vmem, size = 0x12000, scoped, tag = 'internal scratch']
  #allocation2 [shape = 'f32[4,128,128]{2,1,0:T(8,128)}', space=vmem, size = 0x40000, scoped, tag = 'scratch operand']
  #allocation3 [shape = 's32[1]{0}', space=sflag, size = 0x4, scoped, tag = 'scoped memory for tpu_custom_call.1']
  #allocation4 [shape = 'u8[512]{0}', space=smem, size = 0x200, scoped, tag = 'prefetched SMEM operand 0']
  #allocation5 [shape = 'u8[512]{0}', space=smem, size = 0x200, scoped, tag = 'prefetched SMEM operand 1']
  #allocation6 [shape = 'u8[512]{0}', space=smem, size = 0x200, scoped, tag = 'prefetched SMEM operand 2']
  #allocation7 [shape = 'u8[512]{0}', space=smem, size = 0x200, scoped, tag = 'prefetched SMEM operand 3']
  #allocation18 [shape = 's32[]', space=sflag, size = 0x4, offset = 0, fixed_abs, tag = 'sflag constant byte address 0x0 - dummy sync flag']
  #allocation20 [shape = 's32[]', space=sflag, size = 0x4, offset = 0, fixed_abs, tag = 'sflag constant byte address 0x0 - dummy sync flag']
  #allocation22 [shape = 's32[]', space=sflag, size = 0x4, offset = 0, fixed_abs, tag = 'sflag constant byte address 0x0 - dummy sync flag']
  #allocation24 [shape = 's32[]', space=sflag, size = 0x4, offset = 0, fixed_abs, tag = 'sflag constant byte address 0x0 - dummy sync flag']
  #allocation26 [shape = 's32[]', space=sflag, size = 0x4, offset = 0, fixed_abs, tag = 'sflag constant byte address 0x0 - dummy sync flag']
  #allocation28 [shape = 's32[]', space=sflag, size = 0x4, offset = 0, fixed_abs, tag = 'sflag constant byte address 0x0 - dummy sync flag']
  %s0 = inlined_call_operand.hbm [shape: s32[6], index: 0, kind: input, shape index: {}]
  %s1 = inlined_call_operand.hbm [shape: s32[6], index: 1, kind: input, shape index: {}]
  %s2 = inlined_call_operand.hbm [shape: s32[6], index: 2, kind: input, shape index: {}]
  %s3 = inlined_call_operand.hbm [shape: s32[6], index: 3, kind: input, shape index: {}]
  %s4 = inlined_call_operand.hbm [shape: bf16[2,4,512,128], index: 4, kind: input, shape index: {}]
  %s5 = inlined_call_operand.hbm [shape: bf16[2,4,512,128], index: 5, kind: input, shape index: {}]
  %s6 = inlined_call_operand.hbm [shape: bf16[2,4,512,128], index: 6, kind: input, shape index: {}]
  %s7 = inlined_call_operand.hbm [shape: bf16[2,4,512,128], index: 7, kind: input, shape index: {}]
  %s8 = inlined_call_operand.hbm [shape: bf16[2,4,512,128], index: 8, kind: input, shape index: {}]
  %s9 = inlined_call_operand.hbm [shape: f32[2,4,512,128], index: 9, kind: output, shape index: {}]
  %s10 = sld [smem:[#allocation0]]
  $region85: #{tpu_custom_call.1} parent=0
    _
  %s12 = ssub.s32 1, %s10
  %s13 = scalar_select 0, %s12, %s10
  %15 = dma.hbm_to_smem %s0, 16, [#allocation4], [#allocation3]
  %17 = dma.hbm_to_smem %s1, 16, [#allocation5], [#allocation3]
  %19 = dma.hbm_to_smem %s2, 16, [#allocation6], [#allocation3]
  %21 = dma.hbm_to_smem %s3, 16, [#allocation7], [#allocation3]
  %22 = dma.done [#allocation3], 64
  %23 = sfence
  $region1: #{tpu_custom_call.1} parent=0
    #allocation8 [shape = 'u8[262144]{0}', space=vmem, size = 0x40000, scoped, tag = 'input window, operand 4']
    #allocation9 [shape = 's32[2]{0}', space=sflag, size = 0x8, scoped, tag = 'scoped memory for tpu_custom_call.1']
    #allocation10 [shape = 's32[2]{0}', space=sflag, size = 0x8, scoped, tag = 'scoped memory for tpu_custom_call.1']
    #allocation11 [shape = 'u8[262144]{0}', space=vmem, size = 0x40000, scoped, tag = 'input window, operand 5']
    #allocation12 [shape = 's32[2]{0}', space=sflag, size = 0x8, scoped, tag = 'scoped memory for tpu_custom_call.1']
    #allocation13 [shape = 'u8[262144]{0}', space=vmem, size = 0x40000, scoped, tag = 'input window, operand 6']
    #allocation14 [shape = 'u8[262144]{0}', space=vmem, size = 0x40000, scoped, tag = 'input window, operand 7']
    #allocation15 [shape = 's32[2]{0}', space=sflag, size = 0x8, scoped, tag = 'scoped memory for tpu_custom_call.1']
    #allocation16 [shape = 'u8[262144]{0}', space=vmem, size = 0x40000, scoped, tag = 'input window, operand 8']
    #allocation17 [shape = 'u8[524288]{0}', space=vmem, size = 0x80000, scoped, tag = 'output window, operand 0']
    %24 = vsyncpa [#allocation9], 0
    %s25 = scalar_lea.sflag [#allocation9], 1
    %26 = vsyncpa %s25, 0
    %27 = vsyncpa [#allocation12], 0
    %s28 = scalar_lea.sflag [#allocation12], 1
    %29 = vsyncpa %s28, 0
    %30 = vsyncpa [#allocation15], 0
    %s31 = scalar_lea.sflag [#allocation15], 1
    %32 = vsyncpa %s31, 0
    %33 = vsyncpa [#allocation10], 0
    %s34 = scalar_lea.sflag [#allocation10], 1
    %35 = vsyncpa %s34, 0
    loop: start=0, step=1, limit=14
    $region2: #{tpu_custom_call.1} parent=1 // loop_pre_header
      _
    $region3: #{tpu_custom_call.1} parent=1 // loop_header
      %s37 = sphi 0, %s41
      %p38 = scmp.ge.s32.totalorder %s37, 14
      %s44 = sphi 0, %s56
      %s45 = sphi 0, %s52
      %s46 = sphi 0, %s44
      %s47 = sphi 0, %s45
      %s48 = sphi 0, %s46
      %s49 = sphi 0, %s47
      %s63 = sphi 0, %s65
      %s66 = sphi 0, %s63
      %s67 = sphi 0, %s66
      %s83 = sphi 0, %s67
      %s93 = sphi 0, %s95
      %s96 = sphi 0, %s93
      %s97 = sphi 0, %s96
      %s113 = sphi 0, %s97
      %s123 = sphi 0, %s125
      %s126 = sphi 0, %s123
      %s127 = sphi 0, %s126
      %s143 = sphi 0, %s127
      %s153 = sphi 0, %s155
      %s156 = sphi 0, %s153
      %s157 = sphi 0, %s156
      %s173 = sphi 0, %s157
      %s183 = sphi 0, %s185
      %s186 = sphi 0, %s183
      %s187 = sphi 0, %s186
      %s203 = sphi 0, %s187
      %s213 = sphi 0, %s215
      %s216 = sphi 0, %s213
      %s217 = sphi 0, %s216
      %s233 = sphi 0, %s217
    $region4: #{tpu_custom_call.1} parent=1 // loop_header_branch
      %40 = sbr.rel (%p38) target = $region8
    $region5: #{tpu_custom_call.1} parent=1 // loop_body
      %s42 = ssub.s32 %s37, 1
      %s43 = ssub.s32 %s37, 2
      %s50 = sadd.s32 1, %s45
      %p51 = scmp.ge.s32.totalorder %s50, 6
      %s52 = scalar_select %p51, 0, %s50
      %s53 = sadd.s32 1, %s44
      %s54 = scalar_select %p51, %s53, %s44
      %p55 = scmp.ge.s32.totalorder %s54, 2
      %s56 = scalar_select %p55, 0, %s54
      %s57 = sld [smem:[#allocation4 + %s45]]
      %s58 = sld [smem:[#allocation4 + %s52]]
      %s59 = ssub.s32 %s44, %s56
      %s60 = ssub.s32 %s57, %s58
      %s61 = sor.u32 %s59, %s60
      %p62 = scmp.eq.s32.totalorder %s61, 0
      %s64 = sadd.s32 %s63, 1
      %s65 = scalar_select %p62, %s63, %s64
      %p68 = pneg %p62
      %p69 = scmp.eq.s32.totalorder %s37, 11
      %p70 = por %p68, %p69
      %p71 = scmp.ne.s32.totalorder %s63, %s66
      %p72 = scmp.eq.s32.totalorder %s37, 0
      %p73 = por %p71, %p72
      %p74 = scmp.ne.s32.totalorder %s63, %s66
      %p75 = scmp.eq.s32.totalorder %s42, 11
      %p76 = por %p74, %p75
      %p77 = scmp.ne.s32.totalorder %s66, %s67
      %p78 = scmp.eq.s32.totalorder %s42, 0
      %p79 = por %p77, %p78
      %p80 = scmp.ne.s32.totalorder %s66, %s67
      %p81 = scmp.eq.s32.totalorder %s43, 11
      %p82 = por %p80, %p81
      %p84 = scmp.ne.s32.totalorder %s67, %s83
      %p85 = scmp.eq.s32.totalorder %s43, 0
      %p86 = por %p84, %p85
      %s87 = sld [smem:[#allocation5 + %s45]]
      %s88 = sld [smem:[#allocation5 + %s52]]
      %s89 = ssub.s32 %s44, %s56
      %s90 = ssub.s32 %s87, %s88
      %s91 = sor.u32 %s89, %s90
      %p92 = scmp.eq.s32.totalorder %s91, 0
      %s94 = sadd.s32 %s93, 1
      %s95 = scalar_select %p92, %s93, %s94
      %p98 = pneg %p92
      %p99 = scmp.eq.s32.totalorder %s37, 11
      %p100 = por %p98, %p99
      %p101 = scmp.ne.s32.totalorder %s93, %s96
      %p102 = scmp.eq.s32.totalorder %s37, 0
      %p103 = por %p101, %p102
      %p104 = scmp.ne.s32.totalorder %s93, %s96
      %p105 = scmp.eq.s32.totalorder %s42, 11
      %p106 = por %p104, %p105
      %p107 = scmp.ne.s32.totalorder %s96, %s97
      %p108 = scmp.eq.s32.totalorder %s42, 0
      %p109 = por %p107, %p108
      %p110 = scmp.ne.s32.totalorder %s96, %s97
      %p111 = scmp.eq.s32.totalorder %s43, 11
      %p112 = por %p110, %p111
      %p114 = scmp.ne.s32.totalorder %s97, %s113
      %p115 = scmp.eq.s32.totalorder %s43, 0
      %p116 = por %p114, %p115
      %s117 = sld [smem:[#allocation5 + %s45]]
      %s118 = sld [smem:[#allocation5 + %s52]]
      %s119 = ssub.s32 %s44, %s56
      %s120 = ssub.s32 %s117, %s118
      %s121 = sor.u32 %s119, %s120
      %p122 = scmp.eq.s32.totalorder %s121, 0
      %s124 = sadd.s32 %s123, 1
      %s125 = scalar_select %p122, %s123, %s124
      %p128 = pneg %p122
      %p129 = scmp.eq.s32.totalorder %s37, 11
      %p130 = por %p128, %p129
      %p131 = scmp.ne.s32.totalorder %s123, %s126
      %p132 = scmp.eq.s32.totalorder %s37, 0
      %p133 = por %p131, %p132
      %p134 = scmp.ne.s32.totalorder %s123, %s126
      %p135 = scmp.eq.s32.totalorder %s42, 11
      %p136 = por %p134, %p135
      %p137 = scmp.ne.s32.totalorder %s126, %s127
      %p138 = scmp.eq.s32.totalorder %s42, 0
      %p139 = por %p137, %p138
      %p140 = scmp.ne.s32.totalorder %s126, %s127
      %p141 = scmp.eq.s32.totalorder %s43, 11
      %p142 = por %p140, %p141
      %p144 = scmp.ne.s32.totalorder %s127, %s143
      %p145 = scmp.eq.s32.totalorder %s43, 0
      %p146 = por %p144, %p145
      %s147 = sld [smem:[#allocation6 + %s45]]
      %s148 = sld [smem:[#allocation6 + %s52]]
      %s149 = ssub.s32 %s44, %s56
      %s150 = ssub.s32 %s147, %s148
      %s151 = sor.u32 %s149, %s150
      %p152 = scmp.eq.s32.totalorder %s151, 0
      %s154 = sadd.s32 %s153, 1
      %s155 = scalar_select %p152, %s153, %s154
      %p158 = pneg %p152
      %p159 = scmp.eq.s32.totalorder %s37, 11
      %p160 = por %p158, %p159
      %p161 = scmp.ne.s32.totalorder %s153, %s156
      %p162 = scmp.eq.s32.totalorder %s37, 0
      %p163 = por %p161, %p162
      %p164 = scmp.ne.s32.totalorder %s153, %s156
      %p165 = scmp.eq.s32.totalorder %s42, 11
      %p166 = por %p164, %p165
      %p167 = scmp.ne.s32.totalorder %s156, %s157
      %p168 = scmp.eq.s32.totalorder %s42, 0
      %p169 = por %p167, %p168
      %p170 = scmp.ne.s32.totalorder %s156, %s157
      %p171 = scmp.eq.s32.totalorder %s43, 11
      %p172 = por %p170, %p171
      %p174 = scmp.ne.s32.totalorder %s157, %s173
      %p175 = scmp.eq.s32.totalorder %s43, 0
      %p176 = por %p174, %p175
      %s177 = sld [smem:[#allocation6 + %s45]]
      %s178 = sld [smem:[#allocation6 + %s52]]
      %s179 = ssub.s32 %s44, %s56
      %s180 = ssub.s32 %s177, %s178
      %s181 = sor.u32 %s179, %s180
      %p182 = scmp.eq.s32.totalorder %s181, 0
      %s184 = sadd.s32 %s183, 1
      %s185 = scalar_select %p182, %s183, %s184
      %p188 = pneg %p182
      %p189 = scmp.eq.s32.totalorder %s37, 11
      %p190 = por %p188, %p189
      %p191 = scmp.ne.s32.totalorder %s183, %s186
      %p192 = scmp.eq.s32.totalorder %s37, 0
      %p193 = por %p191, %p192
      %p194 = scmp.ne.s32.totalorder %s183, %s186
      %p195 = scmp.eq.s32.totalorder %s42, 11
      %p196 = por %p194, %p195
      %p197 = scmp.ne.s32.totalorder %s186, %s187
      %p198 = scmp.eq.s32.totalorder %s42, 0
      %p199 = por %p197, %p198
      %p200 = scmp.ne.s32.totalorder %s186, %s187
      %p201 = scmp.eq.s32.totalorder %s43, 11
      %p202 = por %p200, %p201
      %p204 = scmp.ne.s32.totalorder %s187, %s203
      %p205 = scmp.eq.s32.totalorder %s43, 0
      %p206 = por %p204, %p205
      %s207 = sld [smem:[#allocation4 + %s45]]
      %s208 = sld [smem:[#allocation4 + %s52]]
      %s209 = ssub.s32 %s44, %s56
      %s210 = ssub.s32 %s207, %s208
      %s211 = sor.u32 %s209, %s210
      %p212 = scmp.eq.s32.totalorder %s211, 0
      %s214 = sadd.s32 %s213, 1
      %s215 = scalar_select %p212, %s213, %s214
      %p218 = pneg %p212
      %p219 = scmp.eq.s32.totalorder %s37, 11
      %p220 = por %p218, %p219
      %p221 = scmp.ne.s32.totalorder %s213, %s216
      %p222 = scmp.eq.s32.totalorder %s37, 0
      %p223 = por %p221, %p222
      %p224 = scmp.ne.s32.totalorder %s213, %s216
      %p225 = scmp.eq.s32.totalorder %s42, 11
      %p226 = por %p224, %p225
      %p227 = scmp.ne.s32.totalorder %s216, %s217
      %p228 = scmp.eq.s32.totalorder %s42, 0
      %p229 = por %p227, %p228
      %p230 = scmp.ne.s32.totalorder %s216, %s217
      %p231 = scmp.eq.s32.totalorder %s43, 11
      %p232 = por %p230, %p231
      %p234 = scmp.ne.s32.totalorder %s217, %s233
      %p235 = scmp.eq.s32.totalorder %s43, 0
      %p236 = por %p234, %p235
      %p237 = scmp.le.s32.totalorder 1, %s37
      %p238 = scmp.lt.s32.totalorder %s37, 13
      %p239 = pnand %p237, %p238
      %p240 = pneg %p239
      // Predicated region
      $region9: #{tpu_custom_call.1} parent=5 // pred_check
        _
      $region10: #{tpu_custom_call.1} parent=5 // pred_check_branch
        %242 = sbr.rel (%p239) target = $region12
      $region11: #{tpu_custom_call.1} parent=5 // pred_region
        %s243 = ssub.s32 %s37, 1
      $region12: #{tpu_custom_call.1} parent=5 // pred_fallthru
        _
      %p244 = scmp.lt.s32.totalorder %s37, 12
      // Predicated region
      $region13: #{tpu_custom_call.1} parent=5 // pred_check
        %p245 = pneg %p244
      $region14: #{tpu_custom_call.1} parent=5 // pred_check_branch
        %247 = sbr.rel (%p245) target = $region16
      $region15: #{tpu_custom_call.1} parent=5 // pred_region
        // Predicated region
        $region17: #{tpu_custom_call.1} parent=15 // pred_check
          %p248 = pneg %p73
        $region18: #{tpu_custom_call.1} parent=15 // pred_check_branch
          %250 = sbr.rel (%p248) target = $region20
        $region19: #{tpu_custom_call.1} parent=15 // pred_region
          #allocation19 [shape = 'u32[6]{0}', space=smem, size = 0x18, scoped, tag = 'DMA stride descriptor']
          %s251 = sand.u32 %s63, 1
          %s252 = scalar_lea.sflag [#allocation9], %s251
          %s253 = sand.u32 %s63, 1
          %s254 = smul.addr %s253, 256
          %s255 = scalar_lea.vmem [#allocation8], %s254
          %s256 = sld [smem:[#allocation4 + %s45]]
          %s257 = smul.u32 16, %s256
          %s259 = ssub.s32 4096, 4096
          %260 = vsyncadd %s252, %s259
          %s261 = smul.addr %s44, 256
          %s262 = sadd.s32 %s257, %s261
          %s263 = smul.addr %s262, 64
          %s264 = scalar_lea.hbm %s4, %s263
          %s266 = sshll.u32 1, 14
          %s267 = sxor.u32 4294967295, %s266
          %s269 = sld [smem:[#allocation0]]
          %s270 = sadd.s32 2, %s269
          %s272 = sshll.u32 7, 26
          %s273 = sxor.u32 4294967295, %s272
          %s274 = sand.u32 0, %s273
          %s275 = sshll.u32 %s270, 26
          %s276 = sor.u32 %s274, %s275
          %s277 = sshll.u32 %s255, 4
          %s278 = int_to_ptr.vmem [resolvable:$true] %s277
          %284 = sst [smem:[#allocation19]] 4096
          %s285 = scalar_lea.smem [#allocation19], 1
          %286 = sst [smem:[%s285]] 1024
          %s287 = scalar_lea.smem [#allocation19], 2
          %288 = sst [smem:[%s287]] 16
          %s289 = scalar_lea.smem [#allocation19], 3
          %290 = sst [smem:[%s289]] 64
          %s291 = scalar_lea.smem [#allocation19], 4
          %292 = sst [smem:[%s291]] 64
          %s293 = scalar_lea.smem [#allocation19], 5
          %294 = sst [smem:[%s293]] 4
          %296 = dma.general %s264, 4096, %s278, %s252, 131072, [#allocation19], %s276, 0
        $region20: #{tpu_custom_call.1} parent=15 // pred_fallthru
          _
        // Predicated region
        $region21: #{tpu_custom_call.1} parent=15 // pred_check
          %p297 = pneg %p103
        $region22: #{tpu_custom_call.1} parent=15 // pred_check_branch
          %299 = sbr.rel (%p297) target = $region24
        $region23: #{tpu_custom_call.1} parent=15 // pred_region
          #allocation21 [shape = 'u32[6]{0}', space=smem, size = 0x18, scoped, tag = 'DMA stride descriptor']
          %s300 = sand.u32 %s37, 1
          %s301 = scalar_lea.sflag [#allocation12], %s300
          %s302 = sand.u32 %s93, 1
          %s303 = smul.addr %s302, 256
          %s304 = scalar_lea.vmem [#allocation11], %s303
          %s305 = sld [smem:[#allocation5 + %s45]]
          %s306 = smul.u32 16, %s305
          %s308 = ssub.s32 4096, 4096
          %309 = vsyncadd %s301, %s308
          %s310 = smul.addr %s44, 256
          %s311 = sadd.s32 %s306, %s310
          %s312 = smul.addr %s311, 64
          %s313 = scalar_lea.hbm %s5, %s312
          %s315 = sshll.u32 1, 14
          %s316 = sxor.u32 4294967295, %s315
          %s318 = sld [smem:[#allocation0]]
          %s319 = sadd.s32 2, %s318
          %s321 = sshll.u32 7, 26
          %s322 = sxor.u32 4294967295, %s321
          %s323 = sand.u32 0, %s322
          %s324 = sshll.u32 %s319, 26
          %s325 = sor.u32 %s323, %s324
          %s326 = sshll.u32 %s304, 4
          %s327 = int_to_ptr.vmem [resolvable:$true] %s326
          %333 = sst [smem:[#allocation21]] 4096
          %s334 = scalar_lea.smem [#allocation21], 1
          %335 = sst [smem:[%s334]] 1024
          %s336 = scalar_lea.smem [#allocation21], 2
          %337 = sst [smem:[%s336]] 16
          %s338 = scalar_lea.smem [#allocation21], 3
          %339 = sst [smem:[%s338]] 64
          %s340 = scalar_lea.smem [#allocation21], 4
          %341 = sst [smem:[%s340]] 64
          %s342 = scalar_lea.smem [#allocation21], 5
          %343 = sst [smem:[%s342]] 4
          %345 = dma.general %s313, 4096, %s327, %s301, 131072, [#allocation21], %s325, 0
        $region24: #{tpu_custom_call.1} parent=15 // pred_fallthru
          _
        // Predicated region
        $region25: #{tpu_custom_call.1} parent=15 // pred_check
          %p346 = pneg %p133
        $region26: #{tpu_custom_call.1} parent=15 // pred_check_branch
          %348 = sbr.rel (%p346) target = $region28
        $region27: #{tpu_custom_call.1} parent=15 // pred_region
          #allocation23 [shape = 'u32[6]{0}', space=smem, size = 0x18, scoped, tag = 'DMA stride descriptor']
          %s349 = sand.u32 %s37, 1
          %s350 = scalar_lea.sflag [#allocation12], %s349
          %s351 = sand.u32 %s123, 1
          %s352 = smul.addr %s351, 256
          %s353 = scalar_lea.vmem [#allocation13], %s352
          %s354 = sld [smem:[#allocation5 + %s45]]
          %s355 = smul.u32 16, %s354
          %s357 = ssub.s32 4096, 4096
          %358 = vsyncadd %s350, %s357
          %s359 = smul.addr %s44, 256
          %s360 = sadd.s32 %s355, %s359
          %s361 = smul.addr %s360, 64
          %s362 = scalar_lea.hbm %s6, %s361
          %s364 = sshll.u32 1, 14
          %s365 = sxor.u32 4294967295, %s364
          %s367 = sld [smem:[#allocation0]]
          %s368 = sadd.s32 2, %s367
          %s370 = sshll.u32 7, 26
          %s371 = sxor.u32 4294967295, %s370
          %s372 = sand.u32 0, %s371
          %s373 = sshll.u32 %s368, 26
          %s374 = sor.u32 %s372, %s373
          %s375 = sshll.u32 %s353, 4
          %s376 = int_to_ptr.vmem [resolvable:$true] %s375
          %382 = sst [smem:[#allocation23]] 4096
          %s383 = scalar_lea.smem [#allocation23], 1
          %384 = sst [smem:[%s383]] 1024
          %s385 = scalar_lea.smem [#allocation23], 2
          %386 = sst [smem:[%s385]] 16
          %s387 = scalar_lea.smem [#allocation23], 3
          %388 = sst [smem:[%s387]] 64
          %s389 = scalar_lea.smem [#allocation23], 4
          %390 = sst [smem:[%s389]] 64
          %s391 = scalar_lea.smem [#allocation23], 5
          %392 = sst [smem:[%s391]] 4
          %394 = dma.general %s362, 4096, %s376, %s350, 131072, [#allocation23], %s374, 0
        $region28: #{tpu_custom_call.1} parent=15 // pred_fallthru
          _
        // Predicated region
        $region29: #{tpu_custom_call.1} parent=15 // pred_check
          %p395 = pneg %p163
        $region30: #{tpu_custom_call.1} parent=15 // pred_check_branch
          %397 = sbr.rel (%p395) target = $region32
        $region31: #{tpu_custom_call.1} parent=15 // pred_region
          #allocation25 [shape = 'u32[6]{0}', space=smem, size = 0x18, scoped, tag = 'DMA stride descriptor']
          %s398 = sand.u32 %s37, 1
          %s399 = scalar_lea.sflag [#allocation15], %s398
          %s400 = sand.u32 %s153, 1
          %s401 = smul.addr %s400, 256
          %s402 = scalar_lea.vmem [#allocation14], %s401
          %s403 = sld [smem:[#allocation6 + %s45]]
          %s404 = smul.u32 16, %s403
          %s406 = ssub.s32 4096, 4096
          %407 = vsyncadd %s399, %s406
          %s408 = smul.addr %s44, 256
          %s409 = sadd.s32 %s404, %s408
          %s410 = smul.addr %s409, 64
          %s411 = scalar_lea.hbm %s7, %s410
          %s413 = sshll.u32 1, 14
          %s414 = sxor.u32 4294967295, %s413
          %s416 = sld [smem:[#allocation0]]
          %s417 = sadd.s32 2, %s416
          %s419 = sshll.u32 7, 26
          %s420 = sxor.u32 4294967295, %s419
          %s421 = sand.u32 0, %s420
          %s422 = sshll.u32 %s417, 26
          %s423 = sor.u32 %s421, %s422
          %s424 = sshll.u32 %s402, 4
          %s425 = int_to_ptr.vmem [resolvable:$true] %s424
          %431 = sst [smem:[#allocation25]] 4096
          %s432 = scalar_lea.smem [#allocation25], 1
          %433 = sst [smem:[%s432]] 1024
          %s434 = scalar_lea.smem [#allocation25], 2
          %435 = sst [smem:[%s434]] 16
          %s436 = scalar_lea.smem [#allocation25], 3
          %437 = sst [smem:[%s436]] 64
          %s438 = scalar_lea.smem [#allocation25], 4
          %439 = sst [smem:[%s438]] 64
          %s440 = scalar_lea.smem [#allocation25], 5
          %441 = sst [smem:[%s440]] 4
          %443 = dma.general %s411, 4096, %s425, %s399, 131072, [#allocation25], %s423, 0
        $region32: #{tpu_custom_call.1} parent=15 // pred_fallthru
          _
        // Predicated region
        $region33: #{tpu_custom_call.1} parent=15 // pred_check
          %p444 = pneg %p193
        $region34: #{tpu_custom_call.1} parent=15 // pred_check_branch
          %446 = sbr.rel (%p444) target = $region36
        $region35: #{tpu_custom_call.1} parent=15 // pred_region
          #allocation27 [shape = 'u32[6]{0}', space=smem, size = 0x18, scoped, tag = 'DMA stride descriptor']
          %s447 = sand.u32 %s37, 1
          %s448 = scalar_lea.sflag [#allocation15], %s447
          %s449 = sand.u32 %s183, 1
          %s450 = smul.addr %s449, 256
          %s451 = scalar_lea.vmem [#allocation16], %s450
          %s452 = sld [smem:[#allocation6 + %s45]]
          %s453 = smul.u32 16, %s452
          %s455 = ssub.s32 4096, 4096
          %456 = vsyncadd %s448, %s455
          %s457 = smul.addr %s44, 256
          %s458 = sadd.s32 %s453, %s457
          %s459 = smul.addr %s458, 64
          %s460 = scalar_lea.hbm %s8, %s459
          %s462 = sshll.u32 1, 14
          %s463 = sxor.u32 4294967295, %s462
          %s465 = sld [smem:[#allocation0]]
          %s466 = sadd.s32 2, %s465
          %s468 = sshll.u32 7, 26
          %s469 = sxor.u32 4294967295, %s468
          %s470 = sand.u32 0, %s469
          %s471 = sshll.u32 %s466, 26
          %s472 = sor.u32 %s470, %s471
          %s473 = sshll.u32 %s451, 4
          %s474 = int_to_ptr.vmem [resolvable:$true] %s473
          %480 = sst [smem:[#allocation27]] 4096
          %s481 = scalar_lea.smem [#allocation27], 1
          %482 = sst [smem:[%s481]] 1024
          %s483 = scalar_lea.smem [#allocation27], 2
          %484 = sst [smem:[%s483]] 16
          %s485 = scalar_lea.smem [#allocation27], 3
          %486 = sst [smem:[%s485]] 64
          %s487 = scalar_lea.smem [#allocation27], 4
          %488 = sst [smem:[%s487]] 64
          %s489 = scalar_lea.smem [#allocation27], 5
          %490 = sst [smem:[%s489]] 4
          %492 = dma.general %s460, 4096, %s474, %s448, 131072, [#allocation27], %s472, 0
        $region36: #{tpu_custom_call.1} parent=15 // pred_fallthru
          _
      $region16: #{tpu_custom_call.1} parent=5 // pred_fallthru
        _
      %p493 = scmp.le.s32.totalorder 1, %s37
      %p494 = scmp.lt.s32.totalorder %s37, 13
      %p495 = pnand %p493, %p494
      %p496 = pneg %p495
      // Predicated region
      $region37: #{tpu_custom_call.1} parent=5 // pred_check
        _
      $region38: #{tpu_custom_call.1} parent=5 // pred_check_branch
        %498 = sbr.rel (%p495) target = $region40
      $region39: #{tpu_custom_call.1} parent=5 // pred_region
        %s499 = ssub.s32 %s37, 1
        %s500 = sand.u32 %s66, 1
        %s501 = scalar_lea.sflag [#allocation9], %s500
        %s502 = sand.u32 %s66, 1
        %s503 = smul.addr %s502, 256
        %s504 = scalar_lea.vmem [#allocation8], %s503
        // Predicated region
        $region41: #{tpu_custom_call.1} parent=39 // pred_check
          %p505 = pneg %p79
        $region42: #{tpu_custom_call.1} parent=39 // pred_check_branch
          %507 = sbr.rel (%p505) target = $region44
        $region43: #{tpu_custom_call.1} parent=39 // pred_region
          %508 = dma.done %s501, 4096
        $region44: #{tpu_custom_call.1} parent=39 // pred_fallthru
          _
        %s509 = sand.u32 %s42, 1
        %s510 = scalar_lea.sflag [#allocation12], %s509
        %s511 = sand.u32 %s96, 1
        %s512 = smul.addr %s511, 256
        %s513 = scalar_lea.vmem [#allocation11], %s512
        // Predicated region
        $region45: #{tpu_custom_call.1} parent=39 // pred_check
          %p514 = pneg %p109
        $region46: #{tpu_custom_call.1} parent=39 // pred_check_branch
          %516 = sbr.rel (%p514) target = $region48
        $region47: #{tpu_custom_call.1} parent=39 // pred_region
          %517 = dma.done %s510, 4096
        $region48: #{tpu_custom_call.1} parent=39 // pred_fallthru
          _
        %s518 = sand.u32 %s42, 1
        %s519 = scalar_lea.sflag [#allocation12], %s518
        %s520 = sand.u32 %s126, 1
        %s521 = smul.addr %s520, 256
        %s522 = scalar_lea.vmem [#allocation13], %s521
        // Predicated region
        $region49: #{tpu_custom_call.1} parent=39 // pred_check
          %p523 = pneg %p139
        $region50: #{tpu_custom_call.1} parent=39 // pred_check_branch
          %525 = sbr.rel (%p523) target = $region52
        $region51: #{tpu_custom_call.1} parent=39 // pred_region
          %526 = dma.done %s519, 4096
        $region52: #{tpu_custom_call.1} parent=39 // pred_fallthru
          _
        %s527 = sand.u32 %s42, 1
        %s528 = scalar_lea.sflag [#allocation15], %s527
        %s529 = sand.u32 %s156, 1
        %s530 = smul.addr %s529, 256
        %s531 = scalar_lea.vmem [#allocation14], %s530
        // Predicated region
        $region53: #{tpu_custom_call.1} parent=39 // pred_check
          %p532 = pneg %p169
        $region54: #{tpu_custom_call.1} parent=39 // pred_check_branch
          %534 = sbr.rel (%p532) target = $region56
        $region55: #{tpu_custom_call.1} parent=39 // pred_region
          %535 = dma.done %s528, 4096
        $region56: #{tpu_custom_call.1} parent=39 // pred_fallthru
          _
        %s536 = sand.u32 %s42, 1
        %s537 = scalar_lea.sflag [#allocation15], %s536
        %s538 = sand.u32 %s186, 1
        %s539 = smul.addr %s538, 256
        %s540 = scalar_lea.vmem [#allocation16], %s539
        // Predicated region
        $region57: #{tpu_custom_call.1} parent=39 // pred_check
          %p541 = pneg %p199
        $region58: #{tpu_custom_call.1} parent=39 // pred_check_branch
          %543 = sbr.rel (%p541) target = $region60
        $region59: #{tpu_custom_call.1} parent=39 // pred_region
          %544 = dma.done %s537, 4096
        $region60: #{tpu_custom_call.1} parent=39 // pred_fallthru
          _
        %s545 = sand.u32 %s66, 1
        %s546 = scalar_lea.sflag [#allocation9], %s545
        %s547 = sand.u32 %s66, 1
        %s548 = smul.addr %s547, 256
        %s549 = scalar_lea.vmem [#allocation8], %s548
        %p550 = pneg %p79
        %p551 = pneg %p76
        %s552 = sand.u32 %s42, 1
        %s553 = scalar_lea.sflag [#allocation12], %s552
        %s554 = sand.u32 %s96, 1
        %s555 = smul.addr %s554, 256
        %s556 = scalar_lea.vmem [#allocation11], %s555
        %p557 = pneg %p109
        %p558 = pneg %p106
        %s559 = sand.u32 %s42, 1
        %s560 = scalar_lea.sflag [#allocation12], %s559
        %s561 = sand.u32 %s126, 1
        %s562 = smul.addr %s561, 256
        %s563 = scalar_lea.vmem [#allocation13], %s562
        %p564 = pneg %p139
        %p565 = pneg %p136
        %s566 = sand.u32 %s42, 1
        %s567 = scalar_lea.sflag [#allocation15], %s566
        %s568 = sand.u32 %s156, 1
        %s569 = smul.addr %s568, 256
        %s570 = scalar_lea.vmem [#allocation14], %s569
        %p571 = pneg %p169
        %p572 = pneg %p166
        %s573 = sand.u32 %s42, 1
        %s574 = scalar_lea.sflag [#allocation15], %s573
        %s575 = sand.u32 %s186, 1
        %s576 = smul.addr %s575, 256
        %s577 = scalar_lea.vmem [#allocation16], %s576
        %p578 = pneg %p199
        %p579 = pneg %p196
        %p580 = pneg %p229
        %p581 = pneg %p226
        %s582 = sand.u32 %s216, 1
        %s583 = scalar_lea.sflag [#allocation10], %s582
        %s584 = sand.u32 %s216, 1
        %s585 = smul.addr %s584, 512
        %s586 = scalar_lea.vmem [#allocation17], %s585
        %s587 = sld [smem:[#allocation4 + %s47]]
        %s588 = smul.u32 16, %s587
        %s589 = sld [smem:[#allocation5 + %s47]]
        %s590 = smul.u32 16, %s589
        %s591 = sld [smem:[#allocation5 + %s47]]
        %s592 = smul.u32 16, %s591
        %s593 = sld [smem:[#allocation6 + %s47]]
        %s594 = smul.u32 16, %s593
        %s595 = sld [smem:[#allocation6 + %s47]]
        %s596 = smul.u32 16, %s595
        %s597 = sld [smem:[#allocation4 + %s47]]
        %s598 = smul.u32 16, %s597
        %s600 = sld [smem:[#allocation7 + %s47]]
        %s601 = sand.u32 %s600, 1
        %p602 = scmp.ne.s32.totalorder %s601, 0
        %s603 = sand.u32 %s600, 2
        %p604 = scmp.ne.s32.totalorder %s603, 0
        %s605 = sand.u32 %s600, 4
        %p606 = scmp.ne.s32.totalorder %s605, 0
        // Predicated region
        $region61: #{tpu_custom_call.1} parent=39 // pred_check
          %p607 = pneg %p602
        $region62: #{tpu_custom_call.1} parent=39 // pred_check_branch
          %609 = sbr.rel (%p607) target = $region64
        $region63: #{tpu_custom_call.1} parent=39 // pred_region
          %610 = vst [vmem:[#allocation2] sm:$0xff] 0.0
          %611 = vst [vmem:[#allocation2 + $0x8] sm:$0xff] 0.0
          %612 = vst [vmem:[#allocation2 + $0x10] sm:$0xff] 0.0
          %613 = vst [vmem:[#allocation2 + $0x18] sm:$0xff] 0.0
          %614 = vst [vmem:[#allocation2 + $0x20] sm:$0xff] 0.0
          %615 = vst [vmem:[#allocation2 + $0x28] sm:$0xff] 0.0
          %616 = vst [vmem:[#allocation2 + $0x30] sm:$0xff] 0.0
          %617 = vst [vmem:[#allocation2 + $0x38] sm:$0xff] 0.0
          %618 = vst [vmem:[#allocation2 + $0x40] sm:$0xff] 0.0
          %619 = vst [vmem:[#allocation2 + $0x48] sm:$0xff] 0.0
          %620 = vst [vmem:[#allocation2 + $0x50] sm:$0xff] 0.0
          %621 = vst [vmem:[#allocation2 + $0x58] sm:$0xff] 0.0
          %622 = vst [vmem:[#allocation2 + $0x60] sm:$0xff] 0.0
          %623 = vst [vmem:[#allocation2 + $0x68] sm:$0xff] 0.0
          %624 = vst [vmem:[#allocation2 + $0x70] sm:$0xff] 0.0
          %625 = vst [vmem:[#allocation2 + $0x78] sm:$0xff] 0.0
          %626 = vst [vmem:[#allocation2 + $0x80] sm:$0xff] 0.0
          %627 = vst [vmem:[#allocation2 + $0x88] sm:$0xff] 0.0
          %628 = vst [vmem:[#allocation2 + $0x90] sm:$0xff] 0.0
          %629 = vst [vmem:[#allocation2 + $0x98] sm:$0xff] 0.0
          %630 = vst [vmem:[#allocation2 + $0xa0] sm:$0xff] 0.0
          %631 = vst [vmem:[#allocation2 + $0xa8] sm:$0xff] 0.0
          %632 = vst [vmem:[#allocation2 + $0xb0] sm:$0xff] 0.0
          %633 = vst [vmem:[#allocation2 + $0xb8] sm:$0xff] 0.0
          %634 = vst [vmem:[#allocation2 + $0xc0] sm:$0xff] 0.0
          %635 = vst [vmem:[#allocation2 + $0xc8] sm:$0xff] 0.0
          %636 = vst [vmem:[#allocation2 + $0xd0] sm:$0xff] 0.0
          %637 = vst [vmem:[#allocation2 + $0xd8] sm:$0xff] 0.0
          %638 = vst [vmem:[#allocation2 + $0xe0] sm:$0xff] 0.0
          %639 = vst [vmem:[#allocation2 + $0xe8] sm:$0xff] 0.0
          %640 = vst [vmem:[#allocation2 + $0xf0] sm:$0xff] 0.0
          %641 = vst [vmem:[#allocation2 + $0xf8] sm:$0xff] 0.0
          %642 = vst [vmem:[#allocation2 + $0x100] sm:$0xff] 0.0
          %643 = vst [vmem:[#allocation2 + $0x108] sm:$0xff] 0.0
          %644 = vst [vmem:[#allocation2 + $0x110] sm:$0xff] 0.0
          %645 = vst [vmem:[#allocation2 + $0x118] sm:$0xff] 0.0
          %646 = vst [vmem:[#allocation2 + $0x120] sm:$0xff] 0.0
          %647 = vst [vmem:[#allocation2 + $0x128] sm:$0xff] 0.0
          %648 = vst [vmem:[#allocation2 + $0x130] sm:$0xff] 0.0
          %649 = vst [vmem:[#allocation2 + $0x138] sm:$0xff] 0.0
          %650 = vst [vmem:[#allocation2 + $0x140] sm:$0xff] 0.0
          %651 = vst [vmem:[#allocation2 + $0x148] sm:$0xff] 0.0
          %652 = vst [vmem:[#allocation2 + $0x150] sm:$0xff] 0.0
          %653 = vst [vmem:[#allocation2 + $0x158] sm:$0xff] 0.0
          %654 = vst [vmem:[#allocation2 + $0x160] sm:$0xff] 0.0
          %655 = vst [vmem:[#allocation2 + $0x168] sm:$0xff] 0.0
          %656 = vst [vmem:[#allocation2 + $0x170] sm:$0xff] 0.0
          %657 = vst [vmem:[#allocation2 + $0x178] sm:$0xff] 0.0
          %658 = vst [vmem:[#allocation2 + $0x180] sm:$0xff] 0.0
          %659 = vst [vmem:[#allocation2 + $0x188] sm:$0xff] 0.0
          %660 = vst [vmem:[#allocation2 + $0x190] sm:$0xff] 0.0
          %661 = vst [vmem:[#allocation2 + $0x198] sm:$0xff] 0.0
          %662 = vst [vmem:[#allocation2 + $0x1a0] sm:$0xff] 0.0
          %663 = vst [vmem:[#allocation2 + $0x1a8] sm:$0xff] 0.0
          %664 = vst [vmem:[#allocation2 + $0x1b0] sm:$0xff] 0.0
          %665 = vst [vmem:[#allocation2 + $0x1b8] sm:$0xff] 0.0
          %666 = vst [vmem:[#allocation2 + $0x1c0] sm:$0xff] 0.0
          %667 = vst [vmem:[#allocation2 + $0x1c8] sm:$0xff] 0.0
          %668 = vst [vmem:[#allocation2 + $0x1d0] sm:$0xff] 0.0
          %669 = vst [vmem:[#allocation2 + $0x1d8] sm:$0xff] 0.0
          %670 = vst [vmem:[#allocation2 + $0x1e0] sm:$0xff] 0.0
          %671 = vst [vmem:[#allocation2 + $0x1e8] sm:$0xff] 0.0
          %672 = vst [vmem:[#allocation2 + $0x1f0] sm:$0xff] 0.0
          %673 = vst [vmem:[#allocation2 + $0x1f8] sm:$0xff] 0.0
        $region64: #{tpu_custom_call.1} parent=39 // pred_fallthru
          _
        %v674 = vld [vmem:[%s504] sm:$0xf]
        %v675 = vld [vmem:[%s504 + $0x4] sm:$0xf]
        %v676 = vld [vmem:[%s504 + $0x8] sm:$0xf]
        %v677 = vld [vmem:[%s504 + $0xc] sm:$0xf]
        %v678 = vld [vmem:[%s504 + $0x10] sm:$0xf]
        %v679 = vld [vmem:[%s504 + $0x14] sm:$0xf]
        %v680 = vld [vmem:[%s504 + $0x18] sm:$0xf]
        %v681 = vld [vmem:[%s504 + $0x1c] sm:$0xf]
        %v682 = vld [vmem:[%s504 + $0x20] sm:$0xf]
        %v683 = vld [vmem:[%s504 + $0x24] sm:$0xf]
        %v684 = vld [vmem:[%s504 + $0x28] sm:$0xf]
        %v685 = vld [vmem:[%s504 + $0x2c] sm:$0xf]
        %v686 = vld [vmem:[%s504 + $0x30] sm:$0xf]
        %v687 = vld [vmem:[%s504 + $0x34] sm:$0xf]
        %v688 = vld [vmem:[%s504 + $0x38] sm:$0xf]
        %v689 = vld [vmem:[%s504 + $0x3c] sm:$0xf]
        %v690 = vld [vmem:[%s504 + $0x40] sm:$0xf]
        %v691 = vld [vmem:[%s504 + $0x44] sm:$0xf]
        %v692 = vld [vmem:[%s504 + $0x48] sm:$0xf]
        %v693 = vld [vmem:[%s504 + $0x4c] sm:$0xf]
        %v694 = vld [vmem:[%s504 + $0x50] sm:$0xf]
        %v695 = vld [vmem:[%s504 + $0x54] sm:$0xf]
        %v696 = vld [vmem:[%s504 + $0x58] sm:$0xf]
        %v697 = vld [vmem:[%s504 + $0x5c] sm:$0xf]
        %v698 = vld [vmem:[%s504 + $0x60] sm:$0xf]
        %v699 = vld [vmem:[%s504 + $0x64] sm:$0xf]
        %v700 = vld [vmem:[%s504 + $0x68] sm:$0xf]
        %v701 = vld [vmem:[%s504 + $0x6c] sm:$0xf]
        %v702 = vld [vmem:[%s504 + $0x70] sm:$0xf]
        %v703 = vld [vmem:[%s504 + $0x74] sm:$0xf]
        %v704 = vld [vmem:[%s504 + $0x78] sm:$0xf]
        %v705 = vld [vmem:[%s504 + $0x7c] sm:$0xf]
        %v706 = vld [vmem:[%s504 + $0x80] sm:$0xf]
        %v707 = vld [vmem:[%s504 + $0x84] sm:$0xf]
        %v708 = vld [vmem:[%s504 + $0x88] sm:$0xf]
        %v709 = vld [vmem:[%s504 + $0x8c] sm:$0xf]
        %v710 = vld [vmem:[%s504 + $0x90] sm:$0xf]
        %v711 = vld [vmem:[%s504 + $0x94] sm:$0xf]
        %v712 = vld [vmem:[%s504 + $0x98] sm:$0xf]
        %v713 = vld [vmem:[%s504 + $0x9c] sm:$0xf]
        %v714 = vld [vmem:[%s504 + $0xa0] sm:$0xf]
        %v715 = vld [vmem:[%s504 + $0xa4] sm:$0xf]
        %v716 = vld [vmem:[%s504 + $0xa8] sm:$0xf]
        %v717 = vld [vmem:[%s504 + $0xac] sm:$0xf]
        %v718 = vld [vmem:[%s504 + $0xb0] sm:$0xf]
        %v719 = vld [vmem:[%s504 + $0xb4] sm:$0xf]
        %v720 = vld [vmem:[%s504 + $0xb8] sm:$0xf]
        %v721 = vld [vmem:[%s504 + $0xbc] sm:$0xf]
        %v722 = vld [vmem:[%s504 + $0xc0] sm:$0xf]
        %v723 = vld [vmem:[%s504 + $0xc4] sm:$0xf]
        %v724 = vld [vmem:[%s504 + $0xc8] sm:$0xf]
        %v725 = vld [vmem:[%s504 + $0xcc] sm:$0xf]
        %v726 = vld [vmem:[%s504 + $0xd0] sm:$0xf]
        %v727 = vld [vmem:[%s504 + $0xd4] sm:$0xf]
        %v728 = vld [vmem:[%s504 + $0xd8] sm:$0xf]
        %v729 = vld [vmem:[%s504 + $0xdc] sm:$0xf]
        %v730 = vld [vmem:[%s504 + $0xe0] sm:$0xf]
        %v731 = vld [vmem:[%s504 + $0xe4] sm:$0xf]
        %v732 = vld [vmem:[%s504 + $0xe8] sm:$0xf]
        %v733 = vld [vmem:[%s504 + $0xec] sm:$0xf]
        %v734 = vld [vmem:[%s504 + $0xf0] sm:$0xf]
        %v735 = vld [vmem:[%s504 + $0xf4] sm:$0xf]
        %v736 = vld [vmem:[%s504 + $0xf8] sm:$0xf]
        %v737 = vld [vmem:[%s504 + $0xfc] sm:$0xf]
        %v738 = vld [vmem:[#allocation2] sm:$0xff]
        %v739 = vld [vmem:[#allocation2 + $0x8] sm:$0xff]
        %v740 = vld [vmem:[#allocation2 + $0x10] sm:$0xff]
        %v741 = vld [vmem:[#allocation2 + $0x18] sm:$0xff]
        %v742 = vld [vmem:[#allocation2 + $0x20] sm:$0xff]
        %v743 = vld [vmem:[#allocation2 + $0x28] sm:$0xff]
        %v744 = vld [vmem:[#allocation2 + $0x30] sm:$0xff]
        %v745 = vld [vmem:[#allocation2 + $0x38] sm:$0xff]
        %v746 = vld [vmem:[#allocation2 + $0x40] sm:$0xff]
        %v747 = vld [vmem:[#allocation2 + $0x48] sm:$0xff]
        %v748 = vld [vmem:[#allocation2 + $0x50] sm:$0xff]
        %v749 = vld [vmem:[#allocation2 + $0x58] sm:$0xff]
        %v750 = vld [vmem:[#allocation2 + $0x60] sm:$0xff]
        %v751 = vld [vmem:[#allocation2 + $0x68] sm:$0xff]
        %v752 = vld [vmem:[#allocation2 + $0x70] sm:$0xff]
        %v753 = vld [vmem:[#allocation2 + $0x78] sm:$0xff]
        %v754 = vld [vmem:[#allocation2 + $0x80] sm:$0xff]
        %v755 = vld [vmem:[#allocation2 + $0x88] sm:$0xff]
        %v756 = vld [vmem:[#allocation2 + $0x90] sm:$0xff]
        %v757 = vld [vmem:[#allocation2 + $0x98] sm:$0xff]
        %v758 = vld [vmem:[#allocation2 + $0xa0] sm:$0xff]
        %v759 = vld [vmem:[#allocation2 + $0xa8] sm:$0xff]
        %v760 = vld [vmem:[#allocation2 + $0xb0] sm:$0xff]
        %v761 = vld [vmem:[#allocation2 + $0xb8] sm:$0xff]
        %v762 = vld [vmem:[#allocation2 + $0xc0] sm:$0xff]
        %v763 = vld [vmem:[#allocation2 + $0xc8] sm:$0xff]
        %v764 = vld [vmem:[#allocation2 + $0xd0] sm:$0xff]
        %v765 = vld [vmem:[#allocation2 + $0xd8] sm:$0xff]
        %v766 = vld [vmem:[#allocation2 + $0xe0] sm:$0xff]
        %v767 = vld [vmem:[#allocation2 + $0xe8] sm:$0xff]
        %v768 = vld [vmem:[#allocation2 + $0xf0] sm:$0xff]
        %v769 = vld [vmem:[#allocation2 + $0xf8] sm:$0xff]
        %v770 = vld [vmem:[#allocation2 + $0x100] sm:$0xff]
        %v771 = vld [vmem:[#allocation2 + $0x108] sm:$0xff]
        %v772 = vld [vmem:[#allocation2 + $0x110] sm:$0xff]
        %v773 = vld [vmem:[#allocation2 + $0x118] sm:$0xff]
        %v774 = vld [vmem:[#allocation2 + $0x120] sm:$0xff]
        %v775 = vld [vmem:[#allocation2 + $0x128] sm:$0xff]
        %v776 = vld [vmem:[#allocation2 + $0x130] sm:$0xff]
        %v777 = vld [vmem:[#allocation2 + $0x138] sm:$0xff]
        %v778 = vld [vmem:[#allocation2 + $0x140] sm:$0xff]
        %v779 = vld [vmem:[#allocation2 + $0x148] sm:$0xff]
        %v780 = vld [vmem:[#allocation2 + $0x150] sm:$0xff]
        %v781 = vld [vmem:[#allocation2 + $0x158] sm:$0xff]
        %v782 = vld [vmem:[#allocation2 + $0x160] sm:$0xff]
        %v783 = vld [vmem:[#allocation2 + $0x168] sm:$0xff]
        %v784 = vld [vmem:[#allocation2 + $0x170] sm:$0xff]
        %v785 = vld [vmem:[#allocation2 + $0x178] sm:$0xff]
        %v786 = vld [vmem:[#allocation2 + $0x180] sm:$0xff]
        %v787 = vld [vmem:[#allocation2 + $0x188] sm:$0xff]
        %v788 = vld [vmem:[#allocation2 + $0x190] sm:$0xff]
        %v789 = vld [vmem:[#allocation2 + $0x198] sm:$0xff]
        %v790 = vld [vmem:[#allocation2 + $0x1a0] sm:$0xff]
        %v791 = vld [vmem:[#allocation2 + $0x1a8] sm:$0xff]
        %v792 = vld [vmem:[#allocation2 + $0x1b0] sm:$0xff]
        %v793 = vld [vmem:[#allocation2 + $0x1b8] sm:$0xff]
        %v794 = vld [vmem:[#allocation2 + $0x1c0] sm:$0xff]
        %v795 = vld [vmem:[#allocation2 + $0x1c8] sm:$0xff]
        %v796 = vld [vmem:[#allocation2 + $0x1d0] sm:$0xff]
        %v797 = vld [vmem:[#allocation2 + $0x1d8] sm:$0xff]
        %v798 = vld [vmem:[#allocation2 + $0x1e0] sm:$0xff]
        %v799 = vld [vmem:[#allocation2 + $0x1e8] sm:$0xff]
        %v800 = vld [vmem:[#allocation2 + $0x1f0] sm:$0xff]
        %v801 = vld [vmem:[#allocation2 + $0x1f8] sm:$0xff]
        %v802 = vld [vmem:[%s513] sm:$0xf]
        %v803 = vld [vmem:[%s513 + $0x4] sm:$0xf]
        %v804 = vld [vmem:[%s513 + $0x8] sm:$0xf]
        %v805 = vld [vmem:[%s513 + $0xc] sm:$0xf]
        %v806 = vld [vmem:[%s513 + $0x10] sm:$0xf]
        %v807 = vld [vmem:[%s513 + $0x14] sm:$0xf]
        %v808 = vld [vmem:[%s513 + $0x18] sm:$0xf]
        %v809 = vld [vmem:[%s513 + $0x1c] sm:$0xf]
        %v810 = vld [vmem:[%s513 + $0x20] sm:$0xf]
        %v811 = vld [vmem:[%s513 + $0x24] sm:$0xf]
        %v812 = vld [vmem:[%s513 + $0x28] sm:$0xf]
        %v813 = vld [vmem:[%s513 + $0x2c] sm:$0xf]
        %v814 = vld [vmem:[%s513 + $0x30] sm:$0xf]
        %v815 = vld [vmem:[%s513 + $0x34] sm:$0xf]
        %v816 = vld [vmem:[%s513 + $0x38] sm:$0xf]
        %v817 = vld [vmem:[%s513 + $0x3c] sm:$0xf]
        %v818 = vld [vmem:[%s513 + $0x40] sm:$0xf]
        %v819 = vld [vmem:[%s513 + $0x44] sm:$0xf]
        %v820 = vld [vmem:[%s513 + $0x48] sm:$0xf]
        %v821 = vld [vmem:[%s513 + $0x4c] sm:$0xf]
        %v822 = vld [vmem:[%s513 + $0x50] sm:$0xf]
        %v823 = vld [vmem:[%s513 + $0x54] sm:$0xf]
        %v824 = vld [vmem:[%s513 + $0x58] sm:$0xf]
        %v825 = vld [vmem:[%s513 + $0x5c] sm:$0xf]
        %v826 = vld [vmem:[%s513 + $0x60] sm:$0xf]
        %v827 = vld [vmem:[%s513 + $0x64] sm:$0xf]
        %v828 = vld [vmem:[%s513 + $0x68] sm:$0xf]
        %v829 = vld [vmem:[%s513 + $0x6c] sm:$0xf]
        %v830 = vld [vmem:[%s513 + $0x70] sm:$0xf]
        %v831 = vld [vmem:[%s513 + $0x74] sm:$0xf]
        %v832 = vld [vmem:[%s513 + $0x78] sm:$0xf]
        %v833 = vld [vmem:[%s513 + $0x7c] sm:$0xf]
        %v834 = vld [vmem:[%s513 + $0x80] sm:$0xf]
        %v835 = vld [vmem:[%s513 + $0x84] sm:$0xf]
        %v836 = vld [vmem:[%s513 + $0x88] sm:$0xf]
        %v837 = vld [vmem:[%s513 + $0x8c] sm:$0xf]
        %v838 = vld [vmem:[%s513 + $0x90] sm:$0xf]
        %v839 = vld [vmem:[%s513 + $0x94] sm:$0xf]
        %v840 = vld [vmem:[%s513 + $0x98] sm:$0xf]
        %v841 = vld [vmem:[%s513 + $0x9c] sm:$0xf]
        %v842 = vld [vmem:[%s513 + $0xa0] sm:$0xf]
        %v843 = vld [vmem:[%s513 + $0xa4] sm:$0xf]
        %v844 = vld [vmem:[%s513 + $0xa8] sm:$0xf]
        %v845 = vld [vmem:[%s513 + $0xac] sm:$0xf]
        %v846 = vld [vmem:[%s513 + $0xb0] sm:$0xf]
        %v847 = vld [vmem:[%s513 + $0xb4] sm:$0xf]
        %v848 = vld [vmem:[%s513 + $0xb8] sm:$0xf]
        %v849 = vld [vmem:[%s513 + $0xbc] sm:$0xf]
        %v850 = vld [vmem:[%s513 + $0xc0] sm:$0xf]
        %v851 = vld [vmem:[%s513 + $0xc4] sm:$0xf]
        %v852 = vld [vmem:[%s513 + $0xc8] sm:$0xf]
        %v853 = vld [vmem:[%s513 + $0xcc] sm:$0xf]
        %v854 = vld [vmem:[%s513 + $0xd0] sm:$0xf]
        %v855 = vld [vmem:[%s513 + $0xd4] sm:$0xf]
        %v856 = vld [vmem:[%s513 + $0xd8] sm:$0xf]
        %v857 = vld [vmem:[%s513 + $0xdc] sm:$0xf]
        %v858 = vld [vmem:[%s513 + $0xe0] sm:$0xf]
        %v859 = vld [vmem:[%s513 + $0xe4] sm:$0xf]
        %v860 = vld [vmem:[%s513 + $0xe8] sm:$0xf]
        %v861 = vld [vmem:[%s513 + $0xec] sm:$0xf]
        %v862 = vld [vmem:[%s513 + $0xf0] sm:$0xf]
        %v863 = vld [vmem:[%s513 + $0xf4] sm:$0xf]
        %v864 = vld [vmem:[%s513 + $0xf8] sm:$0xf]
        %v865 = vld [vmem:[%s513 + $0xfc] sm:$0xf]
        %v882 = vunpack.c.l.b16 %v674
        %v883 = vunpack.c.l.b16 %v675
        %v884 = vunpack.c.l.b16 %v676
        %v885 = vunpack.c.l.b16 %v677
        %v886 = vunpack.c.l.b16 %v678
        %v887 = vunpack.c.l.b16 %v679
        %v888 = vunpack.c.l.b16 %v680
        %v889 = vunpack.c.l.b16 %v681
        %v890 = vunpack.c.l.b16 %v682
        %v891 = vunpack.c.l.b16 %v683
        %v892 = vunpack.c.l.b16 %v684
        %v893 = vunpack.c.l.b16 %v685
        %v894 = vunpack.c.l.b16 %v686
        %v895 = vunpack.c.l.b16 %v687
        %v896 = vunpack.c.l.b16 %v688
        %v897 = vunpack.c.l.b16 %v689
        %v898 = vpack.c.b16 %v883, %v882
        %v899 = vpack.c.b16 %v885, %v884
        %v900 = vpack.c.b16 %v887, %v886
        %v901 = vpack.c.b16 %v889, %v888
        %v902 = vpack.c.b16 %v891, %v890
        %v903 = vpack.c.b16 %v893, %v892
        %v904 = vpack.c.b16 %v895, %v894
        %v905 = vpack.c.b16 %v897, %v896
        %v930 = vunpack.c.l.b16 %v802
        %v931 = vunpack.c.l.b16 %v803
        %v932 = vunpack.c.l.b16 %v804
        %v933 = vunpack.c.l.b16 %v805
        %v934 = vunpack.c.l.b16 %v806
        %v935 = vunpack.c.l.b16 %v807
        %v936 = vunpack.c.l.b16 %v808
        %v937 = vunpack.c.l.b16 %v809
        %v938 = vunpack.c.l.b16 %v810
        %v939 = vunpack.c.l.b16 %v811
        %v940 = vunpack.c.l.b16 %v812
        %v941 = vunpack.c.l.b16 %v813
        %v942 = vunpack.c.l.b16 %v814
        %v943 = vunpack.c.l.b16 %v815
        %v944 = vunpack.c.l.b16 %v816
        %v945 = vunpack.c.l.b16 %v817
        %v946 = vpack.c.b16 %v931, %v930
        %v947 = vpack.c.b16 %v933, %v932
        %v948 = vpack.c.b16 %v935, %v934
        %v949 = vpack.c.b16 %v937, %v936
        %v950 = vpack.c.b16 %v939, %v938
        %v951 = vpack.c.b16 %v941, %v940
        %v952 = vpack.c.b16 %v943, %v942
        %v953 = vpack.c.b16 %v945, %v944
        %962 = vmatprep.subr.bf16.mxu0 0
        %963 = vmatpush1.bf16.xpose.msra.mxu0 %v953
        %964 = vmatprep.subr.bf16.mxu0 0
        %965 = vmatpush1.bf16.xpose.msra.mxu0 %v952
        %966 = vmatprep.subr.bf16.mxu0 0
        %967 = vmatpush1.bf16.xpose.msra.mxu0 %v951
        %968 = vmatprep.subr.bf16.mxu0 0
        %969 = vmatpush1.bf16.xpose.msra.mxu0 %v950
        %970 = vmatprep.subr.bf16.mxu0 0
        %971 = vmatpush1.bf16.xpose.msra.mxu0 %v949
        %972 = vmatprep.subr.bf16.mxu0 0
        %973 = vmatpush1.bf16.xpose.msra.mxu0 %v948
        %974 = vmatprep.subr.bf16.mxu0 0
        %975 = vmatpush1.bf16.xpose.msra.mxu0 %v947
        %976 = vmatprep.subr.bf16.mxu0 0
        %977 = vmatpush1.bf16.xpose.msra.mxu0 %v946
        %978 = vmatprep.subr.bf16.mxu0 0
        %979 = vmatpush2.bf16.xpose.msra.mxu0 0
        %980 = vmatprep.subr.bf16.mxu0 0
        %981 = vmatpush2.bf16.xpose.msra.mxu0 0
        %982 = vmatprep.subr.bf16.mxu0 0
        %983 = vmatpush2.bf16.xpose.msra.mxu0 0
        %984 = vmatprep.subr.bf16.mxu0 0
        %985 = vmatpush2.bf16.xpose.msra.mxu0 0
        %986 = vmatprep.subr.bf16.mxu0 0
        %987 = vmatpush2.bf16.xpose.msra.mxu0 0
        %988 = vmatprep.subr.bf16.mxu0 0
        %989 = vmatpush2.bf16.xpose.msra.mxu0 0
        %990 = vmatprep.subr.bf16.mxu0 0
        %991 = vmatpush2.bf16.xpose.msra.mxu0 0
        %992 = vmatprep.subr.bf16.mxu0 0
        %993 = vmatpush2.bf16.xpose.msra.mxu0 0
        %994 = vmatprep.mubr.bf16.mxu0 0
        %995 = vmatmul.mubr.bf16.gmra.mxu0 %v898
        %v996 = vpop.f32.mrf.mxu0
        %v997 = vadd.f32 0.0, %v996
        %v998 = vpop.f32.mrf.mxu0
        %v999 = vpop.f32.mrf.mxu0
        %v1000 = vadd.f32 0.0, %v999
        %v1001 = vpop.f32.mrf.mxu0
        %1002 = vmatprep.mubr.bf16.mxu0 0
        %1003 = vmatmul.mubr.bf16.gmra.mxu0 %v899
        %v1004 = vpop.f32.mrf.mxu0
        %v1005 = vadd.f32 0.0, %v1004
        %v1006 = vpop.f32.mrf.mxu0
        %v1007 = vpop.f32.mrf.mxu0
        %v1008 = vadd.f32 0.0, %v1007
        %v1009 = vpop.f32.mrf.mxu0
        %1010 = vmatprep.mubr.bf16.mxu0 0
        %1011 = vmatmul.mubr.bf16.gmra.mxu0 %v900
        %v1012 = vpop.f32.mrf.mxu0
        %v1013 = vadd.f32 0.0, %v1012
        %v1014 = vpop.f32.mrf.mxu0
        %v1015 = vpop.f32.mrf.mxu0
        %v1016 = vadd.f32 0.0, %v1015
        %v1017 = vpop.f32.mrf.mxu0
        %1018 = vmatprep.mubr.bf16.mxu0 0
        %1019 = vmatmul.mubr.bf16.gmra.mxu0 %v901
        %v1020 = vpop.f32.mrf.mxu0
        %v1021 = vadd.f32 0.0, %v1020
        %v1022 = vpop.f32.mrf.mxu0
        %v1023 = vpop.f32.mrf.mxu0
        %v1024 = vadd.f32 0.0, %v1023
        %v1025 = vpop.f32.mrf.mxu0
        %1026 = vmatprep.mubr.bf16.mxu0 0
        %1027 = vmatmul.mubr.bf16.gmra.mxu0 %v902
        %v1028 = vpop.f32.mrf.mxu0
        %v1029 = vadd.f32 0.0, %v1028
        %v1030 = vpop.f32.mrf.mxu0
        %v1031 = vpop.f32.mrf.mxu0
        %v1032 = vadd.f32 0.0, %v1031
        %v1033 = vpop.f32.mrf.mxu0
        %1034 = vmatprep.mubr.bf16.mxu0 0
        %1035 = vmatmul.mubr.bf16.gmra.mxu0 %v903
        %v1036 = vpop.f32.mrf.mxu0
        %v1037 = vadd.f32 0.0, %v1036
        %v1038 = vpop.f32.mrf.mxu0
        %v1039 = vpop.f32.mrf.mxu0
        %v1040 = vadd.f32 0.0, %v1039
        %v1041 = vpop.f32.mrf.mxu0
        %1042 = vmatprep.mubr.bf16.mxu0 0
        %1043 = vmatmul.mubr.bf16.gmra.mxu0 %v904
        %v1044 = vpop.f32.mrf.mxu0
        %v1045 = vadd.f32 0.0, %v1044
        %v1046 = vpop.f32.mrf.mxu0
        %v1047 = vpop.f32.mrf.mxu0
        %v1048 = vadd.f32 0.0, %v1047
        %v1049 = vpop.f32.mrf.mxu0
        %1050 = vmatprep.mubr.bf16.mxu0 0
        %1051 = vmatmul.mubr.bf16.gmra.mxu0 %v905
        %v1052 = vpop.f32.mrf.mxu0
        %v1053 = vadd.f32 0.0, %v1052
        %v1054 = vpop.f32.mrf.mxu0
        %v1055 = vpop.f32.mrf.mxu0
        %v1056 = vadd.f32 0.0, %v1055
        %v1057 = vpop.f32.mrf.mxu0
        %1058 = vdwg.mxu0
        %v1075 = vunpack.c.l.b16 %v690
        %v1076 = vunpack.c.l.b16 %v691
        %v1077 = vunpack.c.l.b16 %v692
        %v1078 = vunpack.c.l.b16 %v693
        %v1079 = vunpack.c.l.b16 %v694
        %v1080 = vunpack.c.l.b16 %v695
        %v1081 = vunpack.c.l.b16 %v696
        %v1082 = vunpack.c.l.b16 %v697
        %v1083 = vunpack.c.l.b16 %v698
        %v1084 = vunpack.c.l.b16 %v699
        %v1085 = vunpack.c.l.b16 %v700
        %v1086 = vunpack.c.l.b16 %v701
        %v1087 = vunpack.c.l.b16 %v702
        %v1088 = vunpack.c.l.b16 %v703
        %v1089 = vunpack.c.l.b16 %v704
        %v1090 = vunpack.c.l.b16 %v705
        %v1091 = vpack.c.b16 %v1076, %v1075
        %v1092 = vpack.c.b16 %v1078, %v1077
        %v1093 = vpack.c.b16 %v1080, %v1079
        %v1094 = vpack.c.b16 %v1082, %v1081
        %v1095 = vpack.c.b16 %v1084, %v1083
        %v1096 = vpack.c.b16 %v1086, %v1085
        %v1097 = vpack.c.b16 %v1088, %v1087
        %v1098 = vpack.c.b16 %v1090, %v1089
        %v1123 = vunpack.c.l.b16 %v818
        %v1124 = vunpack.c.l.b16 %v819
        %v1125 = vunpack.c.l.b16 %v820
        %v1126 = vunpack.c.l.b16 %v821
        %v1127 = vunpack.c.l.b16 %v822
        %v1128 = vunpack.c.l.b16 %v823
        %v1129 = vunpack.c.l.b16 %v824
        %v1130 = vunpack.c.l.b16 %v825
        %v1131 = vunpack.c.l.b16 %v826
        %v1132 = vunpack.c.l.b16 %v827
        %v1133 = vunpack.c.l.b16 %v828
        %v1134 = vunpack.c.l.b16 %v829
        %v1135 = vunpack.c.l.b16 %v830
        %v1136 = vunpack.c.l.b16 %v831
        %v1137 = vunpack.c.l.b16 %v832
        %v1138 = vunpack.c.l.b16 %v833
        %v1139 = vpack.c.b16 %v1124, %v1123
        %v1140 = vpack.c.b16 %v1126, %v1125
        %v1141 = vpack.c.b16 %v1128, %v1127
        %v1142 = vpack.c.b16 %v1130, %v1129
        %v1143 = vpack.c.b16 %v1132, %v1131
        %v1144 = vpack.c.b16 %v1134, %v1133
        %v1145 = vpack.c.b16 %v1136, %v1135
        %v1146 = vpack.c.b16 %v1138, %v1137
        %1155 = vmatprep.subr.bf16.mxu0 0
        %1156 = vmatpush1.bf16.xpose.msra.mxu0 %v1146
        %1157 = vmatprep.subr.bf16.mxu0 0
        %1158 = vmatpush1.bf16.xpose.msra.mxu0 %v1145
        %1159 = vmatprep.subr.bf16.mxu0 0
        %1160 = vmatpush1.bf16.xpose.msra.mxu0 %v1144
        %1161 = vmatprep.subr.bf16.mxu0 0
        %1162 = vmatpush1.bf16.xpose.msra.mxu0 %v1143
        %1163 = vmatprep.subr.bf16.mxu0 0
        %1164 = vmatpush1.bf16.xpose.msra.mxu0 %v1142
        %1165 = vmatprep.subr.bf16.mxu0 0
        %1166 = vmatpush1.bf16.xpose.msra.mxu0 %v1141
        %1167 = vmatprep.subr.bf16.mxu0 0
        %1168 = vmatpush1.bf16.xpose.msra.mxu0 %v1140
        %1169 = vmatprep.subr.bf16.mxu0 0
        %1170 = vmatpush1.bf16.xpose.msra.mxu0 %v1139
        %1171 = vmatprep.subr.bf16.mxu0 0
        %1172 = vmatpush2.bf16.xpose.msra.mxu0 0
        %1173 = vmatprep.subr.bf16.mxu0 0
        %1174 = vmatpush2.bf16.xpose.msra.mxu0 0
        %1175 = vmatprep.subr.bf16.mxu0 0
        %1176 = vmatpush2.bf16.xpose.msra.mxu0 0
        %1177 = vmatprep.subr.bf16.mxu0 0
        %1178 = vmatpush2.bf16.xpose.msra.mxu0 0
        %1179 = vmatprep.subr.bf16.mxu0 0
        %1180 = vmatpush2.bf16.xpose.msra.mxu0 0
        %1181 = vmatprep.subr.bf16.mxu0 0
        %1182 = vmatpush2.bf16.xpose.msra.mxu0 0
        %1183 = vmatprep.subr.bf16.mxu0 0
        %1184 = vmatpush2.bf16.xpose.msra.mxu0 0
        %1185 = vmatprep.subr.bf16.mxu0 0
        %1186 = vmatpush2.bf16.xpose.msra.mxu0 0
        %1187 = vmatprep.mubr.bf16.mxu0 0
        %1188 = vmatmul.mubr.bf16.gmra.mxu0 %v1091
        %v1189 = vpop.f32.mrf.mxu0
        %v1190 = vadd.f32 0.0, %v1189
        %v1191 = vpop.f32.mrf.mxu0
        %v1192 = vpop.f32.mrf.mxu0
        %v1193 = vadd.f32 0.0, %v1192
        %v1194 = vpop.f32.mrf.mxu0
        %1195 = vmatprep.mubr.bf16.mxu0 0
        %1196 = vmatmul.mubr.bf16.gmra.mxu0 %v1092
        %v1197 = vpop.f32.mrf.mxu0
        %v1198 = vadd.f32 0.0, %v1197
        %v1199 = vpop.f32.mrf.mxu0
        %v1200 = vpop.f32.mrf.mxu0
        %v1201 = vadd.f32 0.0, %v1200
        %v1202 = vpop.f32.mrf.mxu0
        %1203 = vmatprep.mubr.bf16.mxu0 0
        %1204 = vmatmul.mubr.bf16.gmra.mxu0 %v1093
        %v1205 = vpop.f32.mrf.mxu0
        %v1206 = vadd.f32 0.0, %v1205
        %v1207 = vpop.f32.mrf.mxu0
        %v1208 = vpop.f32.mrf.mxu0
        %v1209 = vadd.f32 0.0, %v1208
        %v1210 = vpop.f32.mrf.mxu0
        %1211 = vmatprep.mubr.bf16.mxu0 0
        %1212 = vmatmul.mubr.bf16.gmra.mxu0 %v1094
        %v1213 = vpop.f32.mrf.mxu0
        %v1214 = vadd.f32 0.0, %v1213
        %v1215 = vpop.f32.mrf.mxu0
        %v1216 = vpop.f32.mrf.mxu0
        %v1217 = vadd.f32 0.0, %v1216
        %v1218 = vpop.f32.mrf.mxu0
        %1219 = vmatprep.mubr.bf16.mxu0 0
        %1220 = vmatmul.mubr.bf16.gmra.mxu0 %v1095
        %v1221 = vpop.f32.mrf.mxu0
        %v1222 = vadd.f32 0.0, %v1221
        %v1223 = vpop.f32.mrf.mxu0
        %v1224 = vpop.f32.mrf.mxu0
        %v1225 = vadd.f32 0.0, %v1224
        %v1226 = vpop.f32.mrf.mxu0
        %1227 = vmatprep.mubr.bf16.mxu0 0
        %1228 = vmatmul.mubr.bf16.gmra.mxu0 %v1096
        %v1229 = vpop.f32.mrf.mxu0
        %v1230 = vadd.f32 0.0, %v1229
        %v1231 = vpop.f32.mrf.mxu0
        %v1232 = vpop.f32.mrf.mxu0
        %v1233 = vadd.f32 0.0, %v1232
        %v1234 = vpop.f32.mrf.mxu0
        %1235 = vmatprep.mubr.bf16.mxu0 0
        %1236 = vmatmul.mubr.bf16.gmra.mxu0 %v1097
        %v1237 = vpop.f32.mrf.mxu0
        %v1238 = vadd.f32 0.0, %v1237
        %v1239 = vpop.f32.mrf.mxu0
        %v1240 = vpop.f32.mrf.mxu0
        %v1241 = vadd.f32 0.0, %v1240
        %v1242 = vpop.f32.mrf.mxu0
        %1243 = vmatprep.mubr.bf16.mxu0 0
        %1244 = vmatmul.mubr.bf16.gmra.mxu0 %v1098
        %v1245 = vpop.f32.mrf.mxu0
        %v1246 = vadd.f32 0.0, %v1245
        %v1247 = vpop.f32.mrf.mxu0
        %v1248 = vpop.f32.mrf.mxu0
        %v1249 = vadd.f32 0.0, %v1248
        %v1250 = vpop.f32.mrf.mxu0
        %1251 = vdwg.mxu0
        %v1268 = vunpack.c.l.b16 %v706
        %v1269 = vunpack.c.l.b16 %v707
        %v1270 = vunpack.c.l.b16 %v708
        %v1271 = vunpack.c.l.b16 %v709
        %v1272 = vunpack.c.l.b16 %v710
        %v1273 = vunpack.c.l.b16 %v711
        %v1274 = vunpack.c.l.b16 %v712
        %v1275 = vunpack.c.l.b16 %v713
        %v1276 = vunpack.c.l.b16 %v714
        %v1277 = vunpack.c.l.b16 %v715
        %v1278 = vunpack.c.l.b16 %v716
        %v1279 = vunpack.c.l.b16 %v717
        %v1280 = vunpack.c.l.b16 %v718
        %v1281 = vunpack.c.l.b16 %v719
        %v1282 = vunpack.c.l.b16 %v720
        %v1283 = vunpack.c.l.b16 %v721
        %v1284 = vpack.c.b16 %v1269, %v1268
        %v1285 = vpack.c.b16 %v1271, %v1270
        %v1286 = vpack.c.b16 %v1273, %v1272
        %v1287 = vpack.c.b16 %v1275, %v1274
        %v1288 = vpack.c.b16 %v1277, %v1276
        %v1289 = vpack.c.b16 %v1279, %v1278
        %v1290 = vpack.c.b16 %v1281, %v1280
        %v1291 = vpack.c.b16 %v1283, %v1282
        %v1316 = vunpack.c.l.b16 %v834
        %v1317 = vunpack.c.l.b16 %v835
        %v1318 = vunpack.c.l.b16 %v836
        %v1319 = vunpack.c.l.b16 %v837
        %v1320 = vunpack.c.l.b16 %v838
        %v1321 = vunpack.c.l.b16 %v839
        %v1322 = vunpack.c.l.b16 %v840
        %v1323 = vunpack.c.l.b16 %v841
        %v1324 = vunpack.c.l.b16 %v842
        %v1325 = vunpack.c.l.b16 %v843
        %v1326 = vunpack.c.l.b16 %v844
        %v1327 = vunpack.c.l.b16 %v845
        %v1328 = vunpack.c.l.b16 %v846
        %v1329 = vunpack.c.l.b16 %v847
        %v1330 = vunpack.c.l.b16 %v848
        %v1331 = vunpack.c.l.b16 %v849
        %v1332 = vpack.c.b16 %v1317, %v1316
        %v1333 = vpack.c.b16 %v1319, %v1318
        %v1334 = vpack.c.b16 %v1321, %v1320
        %v1335 = vpack.c.b16 %v1323, %v1322
        %v1336 = vpack.c.b16 %v1325, %v1324
        %v1337 = vpack.c.b16 %v1327, %v1326
        %v1338 = vpack.c.b16 %v1329, %v1328
        %v1339 = vpack.c.b16 %v1331, %v1330
        %1348 = vmatprep.subr.bf16.mxu0 0
        %1349 = vmatpush1.bf16.xpose.msra.mxu0 %v1339
        %1350 = vmatprep.subr.bf16.mxu0 0
        %1351 = vmatpush1.bf16.xpose.msra.mxu0 %v1338
        %1352 = vmatprep.subr.bf16.mxu0 0
        %1353 = vmatpush1.bf16.xpose.msra.mxu0 %v1337
        %1354 = vmatprep.subr.bf16.mxu0 0
        %1355 = vmatpush1.bf16.xpose.msra.mxu0 %v1336
        %1356 = vmatprep.subr.bf16.mxu0 0
        %1357 = vmatpush1.bf16.xpose.msra.mxu0 %v1335
        %1358 = vmatprep.subr.bf16.mxu0 0
        %1359 = vmatpush1.bf16.xpose.msra.mxu0 %v1334
        %1360 = vmatprep.subr.bf16.mxu0 0
        %1361 = vmatpush1.bf16.xpose.msra.mxu0 %v1333
        %1362 = vmatprep.subr.bf16.mxu0 0
        %1363 = vmatpush1.bf16.xpose.msra.mxu0 %v1332
        %1364 = vmatprep.subr.bf16.mxu0 0
        %1365 = vmatpush2.bf16.xpose.msra.mxu0 0
        %1366 = vmatprep.subr.bf16.mxu0 0
        %1367 = vmatpush2.bf16.xpose.msra.mxu0 0
        %1368 = vmatprep.subr.bf16.mxu0 0
        %1369 = vmatpush2.bf16.xpose.msra.mxu0 0
        %1370 = vmatprep.subr.bf16.mxu0 0
        %1371 = vmatpush2.bf16.xpose.msra.mxu0 0
        %1372 = vmatprep.subr.bf16.mxu0 0
        %1373 = vmatpush2.bf16.xpose.msra.mxu0 0
        %1374 = vmatprep.subr.bf16.mxu0 0
        %1375 = vmatpush2.bf16.xpose.msra.mxu0 0
        %1376 = vmatprep.subr.bf16.mxu0 0
        %1377 = vmatpush2.bf16.xpose.msra.mxu0 0
        %1378 = vmatprep.subr.bf16.mxu0 0
        %1379 = vmatpush2.bf16.xpose.msra.mxu0 0
        %1380 = vmatprep.mubr.bf16.mxu0 0
        %1381 = vmatmul.mubr.bf16.gmra.mxu0 %v1284
        %v1382 = vpop.f32.mrf.mxu0
        %v1383 = vadd.f32 0.0, %v1382
        %v1384 = vpop.f32.mrf.mxu0
        %v1385 = vpop.f32.mrf.mxu0
        %v1386 = vadd.f32 0.0, %v1385
        %v1387 = vpop.f32.mrf.mxu0
        %1388 = vmatprep.mubr.bf16.mxu0 0
        %1389 = vmatmul.mubr.bf16.gmra.mxu0 %v1285
        %v1390 = vpop.f32.mrf.mxu0
        %v1391 = vadd.f32 0.0, %v1390
        %v1392 = vpop.f32.mrf.mxu0
        %v1393 = vpop.f32.mrf.mxu0
        %v1394 = vadd.f32 0.0, %v1393
        %v1395 = vpop.f32.mrf.mxu0
        %1396 = vmatprep.mubr.bf16.mxu0 0
        %1397 = vmatmul.mubr.bf16.gmra.mxu0 %v1286
        %v1398 = vpop.f32.mrf.mxu0
        %v1399 = vadd.f32 0.0, %v1398
        %v1400 = vpop.f32.mrf.mxu0
        %v1401 = vpop.f32.mrf.mxu0
        %v1402 = vadd.f32 0.0, %v1401
        %v1403 = vpop.f32.mrf.mxu0
        %1404 = vmatprep.mubr.bf16.mxu0 0
        %1405 = vmatmul.mubr.bf16.gmra.mxu0 %v1287
        %v1406 = vpop.f32.mrf.mxu0
        %v1407 = vadd.f32 0.0, %v1406
        %v1408 = vpop.f32.mrf.mxu0
        %v1409 = vpop.f32.mrf.mxu0
        %v1410 = vadd.f32 0.0, %v1409
        %v1411 = vpop.f32.mrf.mxu0
        %1412 = vmatprep.mubr.bf16.mxu0 0
        %1413 = vmatmul.mubr.bf16.gmra.mxu0 %v1288
        %v1414 = vpop.f32.mrf.mxu0
        %v1415 = vadd.f32 0.0, %v1414
        %v1416 = vpop.f32.mrf.mxu0
        %v1417 = vpop.f32.mrf.mxu0
        %v1418 = vadd.f32 0.0, %v1417
        %v1419 = vpop.f32.mrf.mxu0
        %1420 = vmatprep.mubr.bf16.mxu0 0
        %1421 = vmatmul.mubr.bf16.gmra.mxu0 %v1289
        %v1422 = vpop.f32.mrf.mxu0
        %v1423 = vadd.f32 0.0, %v1422
        %v1424 = vpop.f32.mrf.mxu0
        %v1425 = vpop.f32.mrf.mxu0
        %v1426 = vadd.f32 0.0, %v1425
        %v1427 = vpop.f32.mrf.mxu0
        %1428 = vmatprep.mubr.bf16.mxu0 0
        %1429 = vmatmul.mubr.bf16.gmra.mxu0 %v1290
        %v1430 = vpop.f32.mrf.mxu0
        %v1431 = vadd.f32 0.0, %v1430
        %v1432 = vpop.f32.mrf.mxu0
        %v1433 = vpop.f32.mrf.mxu0
        %v1434 = vadd.f32 0.0, %v1433
        %v1435 = vpop.f32.mrf.mxu0
        %1436 = vmatprep.mubr.bf16.mxu0 0
        %1437 = vmatmul.mubr.bf16.gmra.mxu0 %v1291
        %v1438 = vpop.f32.mrf.mxu0
        %v1439 = vadd.f32 0.0, %v1438
        %v1440 = vpop.f32.mrf.mxu0
        %v1441 = vpop.f32.mrf.mxu0
        %v1442 = vadd.f32 0.0, %v1441
        %v1443 = vpop.f32.mrf.mxu0
        %1444 = vdwg.mxu0
        %v1461 = vunpack.c.l.b16 %v722
        %v1462 = vunpack.c.l.b16 %v723
        %v1463 = vunpack.c.l.b16 %v724
        %v1464 = vunpack.c.l.b16 %v725
        %v1465 = vunpack.c.l.b16 %v726
        %v1466 = vunpack.c.l.b16 %v727
        %v1467 = vunpack.c.l.b16 %v728
        %v1468 = vunpack.c.l.b16 %v729
        %v1469 = vunpack.c.l.b16 %v730
        %v1470 = vunpack.c.l.b16 %v731
        %v1471 = vunpack.c.l.b16 %v732
        %v1472 = vunpack.c.l.b16 %v733
        %v1473 = vunpack.c.l.b16 %v734
        %v1474 = vunpack.c.l.b16 %v735
        %v1475 = vunpack.c.l.b16 %v736
        %v1476 = vunpack.c.l.b16 %v737
        %v1477 = vpack.c.b16 %v1462, %v1461
        %v1478 = vpack.c.b16 %v1464, %v1463
        %v1479 = vpack.c.b16 %v1466, %v1465
        %v1480 = vpack.c.b16 %v1468, %v1467
        %v1481 = vpack.c.b16 %v1470, %v1469
        %v1482 = vpack.c.b16 %v1472, %v1471
        %v1483 = vpack.c.b16 %v1474, %v1473
        %v1484 = vpack.c.b16 %v1476, %v1475
        %v1509 = vunpack.c.l.b16 %v850
        %v1510 = vunpack.c.l.b16 %v851
        %v1511 = vunpack.c.l.b16 %v852
        %v1512 = vunpack.c.l.b16 %v853
        %v1513 = vunpack.c.l.b16 %v854
        %v1514 = vunpack.c.l.b16 %v855
        %v1515 = vunpack.c.l.b16 %v856
        %v1516 = vunpack.c.l.b16 %v857
        %v1517 = vunpack.c.l.b16 %v858
        %v1518 = vunpack.c.l.b16 %v859
        %v1519 = vunpack.c.l.b16 %v860
        %v1520 = vunpack.c.l.b16 %v861
        %v1521 = vunpack.c.l.b16 %v862
        %v1522 = vunpack.c.l.b16 %v863
        %v1523 = vunpack.c.l.b16 %v864
        %v1524 = vunpack.c.l.b16 %v865
        %v1525 = vpack.c.b16 %v1510, %v1509
        %v1526 = vpack.c.b16 %v1512, %v1511
        %v1527 = vpack.c.b16 %v1514, %v1513
        %v1528 = vpack.c.b16 %v1516, %v1515
        %v1529 = vpack.c.b16 %v1518, %v1517
        %v1530 = vpack.c.b16 %v1520, %v1519
        %v1531 = vpack.c.b16 %v1522, %v1521
        %v1532 = vpack.c.b16 %v1524, %v1523
        %1541 = vmatprep.subr.bf16.mxu0 0
        %1542 = vmatpush1.bf16.xpose.msra.mxu0 %v1532
        %1543 = vmatprep.subr.bf16.mxu0 0
        %1544 = vmatpush1.bf16.xpose.msra.mxu0 %v1531
        %1545 = vmatprep.subr.bf16.mxu0 0
        %1546 = vmatpush1.bf16.xpose.msra.mxu0 %v1530
        %1547 = vmatprep.subr.bf16.mxu0 0
        %1548 = vmatpush1.bf16.xpose.msra.mxu0 %v1529
        %1549 = vmatprep.subr.bf16.mxu0 0
        %1550 = vmatpush1.bf16.xpose.msra.mxu0 %v1528
        %1551 = vmatprep.subr.bf16.mxu0 0
        %1552 = vmatpush1.bf16.xpose.msra.mxu0 %v1527
        %1553 = vmatprep.subr.bf16.mxu0 0
        %1554 = vmatpush1.bf16.xpose.msra.mxu0 %v1526
        %1555 = vmatprep.subr.bf16.mxu0 0
        %1556 = vmatpush1.bf16.xpose.msra.mxu0 %v1525
        %1557 = vmatprep.subr.bf16.mxu0 0
        %1558 = vmatpush2.bf16.xpose.msra.mxu0 0
        %1559 = vmatprep.subr.bf16.mxu0 0
        %1560 = vmatpush2.bf16.xpose.msra.mxu0 0
        %1561 = vmatprep.subr.bf16.mxu0 0
        %1562 = vmatpush2.bf16.xpose.msra.mxu0 0
        %1563 = vmatprep.subr.bf16.mxu0 0
        %1564 = vmatpush2.bf16.xpose.msra.mxu0 0
        %1565 = vmatprep.subr.bf16.mxu0 0
        %1566 = vmatpush2.bf16.xpose.msra.mxu0 0
        %1567 = vmatprep.subr.bf16.mxu0 0
        %1568 = vmatpush2.bf16.xpose.msra.mxu0 0
        %1569 = vmatprep.subr.bf16.mxu0 0
        %1570 = vmatpush2.bf16.xpose.msra.mxu0 0
        %1571 = vmatprep.subr.bf16.mxu0 0
        %1572 = vmatpush2.bf16.xpose.msra.mxu0 0
        %1573 = vmatprep.mubr.bf16.mxu0 0
        %1574 = vmatmul.mubr.bf16.gmra.mxu0 %v1477
        %v1575 = vpop.f32.mrf.mxu0
        %v1576 = vadd.f32 0.0, %v1575
        %v1577 = vpop.f32.mrf.mxu0
        %v1578 = vpop.f32.mrf.mxu0
        %v1579 = vadd.f32 0.0, %v1578
        %v1580 = vpop.f32.mrf.mxu0
        %1581 = vmatprep.mubr.bf16.mxu0 0
        %1582 = vmatmul.mubr.bf16.gmra.mxu0 %v1478
        %v1583 = vpop.f32.mrf.mxu0
        %v1584 = vadd.f32 0.0, %v1583
        %v1585 = vpop.f32.mrf.mxu0
        %v1586 = vpop.f32.mrf.mxu0
        %v1587 = vadd.f32 0.0, %v1586
        %v1588 = vpop.f32.mrf.mxu0
        %1589 = vmatprep.mubr.bf16.mxu0 0
        %1590 = vmatmul.mubr.bf16.gmra.mxu0 %v1479
        %v1591 = vpop.f32.mrf.mxu0
        %v1592 = vadd.f32 0.0, %v1591
        %v1593 = vpop.f32.mrf.mxu0
        %v1594 = vpop.f32.mrf.mxu0
        %v1595 = vadd.f32 0.0, %v1594
        %v1596 = vpop.f32.mrf.mxu0
        %1597 = vmatprep.mubr.bf16.mxu0 0
        %1598 = vmatmul.mubr.bf16.gmra.mxu0 %v1480
        %v1599 = vpop.f32.mrf.mxu0
        %v1600 = vadd.f32 0.0, %v1599
        %v1601 = vpop.f32.mrf.mxu0
        %v1602 = vpop.f32.mrf.mxu0
        %v1603 = vadd.f32 0.0, %v1602
        %v1604 = vpop.f32.mrf.mxu0
        %1605 = vmatprep.mubr.bf16.mxu0 0
        %1606 = vmatmul.mubr.bf16.gmra.mxu0 %v1481
        %v1607 = vpop.f32.mrf.mxu0
        %v1608 = vadd.f32 0.0, %v1607
        %v1609 = vpop.f32.mrf.mxu0
        %v1610 = vpop.f32.mrf.mxu0
        %v1611 = vadd.f32 0.0, %v1610
        %v1612 = vpop.f32.mrf.mxu0
        %1613 = vmatprep.mubr.bf16.mxu0 0
        %1614 = vmatmul.mubr.bf16.gmra.mxu0 %v1482
        %v1615 = vpop.f32.mrf.mxu0
        %v1616 = vadd.f32 0.0, %v1615
        %v1617 = vpop.f32.mrf.mxu0
        %v1618 = vpop.f32.mrf.mxu0
        %v1619 = vadd.f32 0.0, %v1618
        %v1620 = vpop.f32.mrf.mxu0
        %1621 = vmatprep.mubr.bf16.mxu0 0
        %1622 = vmatmul.mubr.bf16.gmra.mxu0 %v1483
        %v1623 = vpop.f32.mrf.mxu0
        %v1624 = vadd.f32 0.0, %v1623
        %v1625 = vpop.f32.mrf.mxu0
        %v1626 = vpop.f32.mrf.mxu0
        %v1627 = vadd.f32 0.0, %v1626
        %v1628 = vpop.f32.mrf.mxu0
        %1629 = vmatprep.mubr.bf16.mxu0 0
        %1630 = vmatmul.mubr.bf16.gmra.mxu0 %v1484
        %v1631 = vpop.f32.mrf.mxu0
        %v1632 = vadd.f32 0.0, %v1631
        %v1633 = vpop.f32.mrf.mxu0
        %v1634 = vpop.f32.mrf.mxu0
        %v1635 = vadd.f32 0.0, %v1634
        %v1636 = vpop.f32.mrf.mxu0
        %1637 = vdwg.mxu0
        %1638 = vmax.xlane.f32.xlu0 %v997
        %v1639 = vpop.xlane.xlu0 %1638
        %1640 = vmax.xlane.f32.xlu0 %v1000
        %v1641 = vpop.xlane.xlu0 %1640
        %1642 = vmax.xlane.f32.xlu0 %v1005
        %v1643 = vpop.xlane.xlu0 %1642
        %1644 = vmax.xlane.f32.xlu0 %v1008
        %v1645 = vpop.xlane.xlu0 %1644
        %1646 = vmax.xlane.f32.xlu0 %v1013
        %v1647 = vpop.xlane.xlu0 %1646
        %1648 = vmax.xlane.f32.xlu0 %v1016
        %v1649 = vpop.xlane.xlu0 %1648
        %1650 = vmax.xlane.f32.xlu0 %v1021
        %v1651 = vpop.xlane.xlu0 %1650
        %1652 = vmax.xlane.f32.xlu0 %v1024
        %v1653 = vpop.xlane.xlu0 %1652
        %1654 = vmax.xlane.f32.xlu0 %v1029
        %v1655 = vpop.xlane.xlu0 %1654
        %1656 = vmax.xlane.f32.xlu0 %v1032
        %v1657 = vpop.xlane.xlu0 %1656
        %1658 = vmax.xlane.f32.xlu0 %v1037
        %v1659 = vpop.xlane.xlu0 %1658
        %1660 = vmax.xlane.f32.xlu0 %v1040
        %v1661 = vpop.xlane.xlu0 %1660
        %1662 = vmax.xlane.f32.xlu0 %v1045
        %v1663 = vpop.xlane.xlu0 %1662
        %1664 = vmax.xlane.f32.xlu0 %v1048
        %v1665 = vpop.xlane.xlu0 %1664
        %1666 = vmax.xlane.f32.xlu0 %v1053
        %v1667 = vpop.xlane.xlu0 %1666
        %1668 = vmax.xlane.f32.xlu0 %v1056
        %v1669 = vpop.xlane.xlu0 %1668
        %1670 = vmax.xlane.f32.xlu0 %v1190
        %v1671 = vpop.xlane.xlu0 %1670
        %1672 = vmax.xlane.f32.xlu0 %v1193
        %v1673 = vpop.xlane.xlu0 %1672
        %1674 = vmax.xlane.f32.xlu0 %v1198
        %v1675 = vpop.xlane.xlu0 %1674
        %1676 = vmax.xlane.f32.xlu0 %v1201
        %v1677 = vpop.xlane.xlu0 %1676
        %1678 = vmax.xlane.f32.xlu0 %v1206
        %v1679 = vpop.xlane.xlu0 %1678
        %1680 = vmax.xlane.f32.xlu0 %v1209
        %v1681 = vpop.xlane.xlu0 %1680
        %1682 = vmax.xlane.f32.xlu0 %v1214
        %v1683 = vpop.xlane.xlu0 %1682
        %1684 = vmax.xlane.f32.xlu0 %v1217
        %v1685 = vpop.xlane.xlu0 %1684
        %1686 = vmax.xlane.f32.xlu0 %v1222
        %v1687 = vpop.xlane.xlu0 %1686
        %1688 = vmax.xlane.f32.xlu0 %v1225
        %v1689 = vpop.xlane.xlu0 %1688
        %1690 = vmax.xlane.f32.xlu0 %v1230
        %v1691 = vpop.xlane.xlu0 %1690
        %1692 = vmax.xlane.f32.xlu0 %v1233
        %v1693 = vpop.xlane.xlu0 %1692
        %1694 = vmax.xlane.f32.xlu0 %v1238
        %v1695 = vpop.xlane.xlu0 %1694
        %1696 = vmax.xlane.f32.xlu0 %v1241
        %v1697 = vpop.xlane.xlu0 %1696
        %1698 = vmax.xlane.f32.xlu0 %v1246
        %v1699 = vpop.xlane.xlu0 %1698
        %1700 = vmax.xlane.f32.xlu0 %v1249
        %v1701 = vpop.xlane.xlu0 %1700
        %1702 = vmax.xlane.f32.xlu0 %v1383
        %v1703 = vpop.xlane.xlu0 %1702
        %1704 = vmax.xlane.f32.xlu0 %v1386
        %v1705 = vpop.xlane.xlu0 %1704
        %1706 = vmax.xlane.f32.xlu0 %v1391
        %v1707 = vpop.xlane.xlu0 %1706
        %1708 = vmax.xlane.f32.xlu0 %v1394
        %v1709 = vpop.xlane.xlu0 %1708
        %1710 = vmax.xlane.f32.xlu0 %v1399
        %v1711 = vpop.xlane.xlu0 %1710
        %1712 = vmax.xlane.f32.xlu0 %v1402
        %v1713 = vpop.xlane.xlu0 %1712
        %1714 = vmax.xlane.f32.xlu0 %v1407
        %v1715 = vpop.xlane.xlu0 %1714
        %1716 = vmax.xlane.f32.xlu0 %v1410
        %v1717 = vpop.xlane.xlu0 %1716
        %1718 = vmax.xlane.f32.xlu0 %v1415
        %v1719 = vpop.xlane.xlu0 %1718
        %1720 = vmax.xlane.f32.xlu0 %v1418
        %v1721 = vpop.xlane.xlu0 %1720
        %1722 = vmax.xlane.f32.xlu0 %v1423
        %v1723 = vpop.xlane.xlu0 %1722
        %1724 = vmax.xlane.f32.xlu0 %v1426
        %v1725 = vpop.xlane.xlu0 %1724
        %1726 = vmax.xlane.f32.xlu0 %v1431
        %v1727 = vpop.xlane.xlu0 %1726
        %1728 = vmax.xlane.f32.xlu0 %v1434
        %v1729 = vpop.xlane.xlu0 %1728
        %1730 = vmax.xlane.f32.xlu0 %v1439
        %v1731 = vpop.xlane.xlu0 %1730
        %1732 = vmax.xlane.f32.xlu0 %v1442
        %v1733 = vpop.xlane.xlu0 %1732
        %1734 = vmax.xlane.f32.xlu0 %v1576
        %v1735 = vpop.xlane.xlu0 %1734
        %1736 = vmax.xlane.f32.xlu0 %v1579
        %v1737 = vpop.xlane.xlu0 %1736
        %1738 = vmax.xlane.f32.xlu0 %v1584
        %v1739 = vpop.xlane.xlu0 %1738
        %1740 = vmax.xlane.f32.xlu0 %v1587
        %v1741 = vpop.xlane.xlu0 %1740
        %1742 = vmax.xlane.f32.xlu0 %v1592
        %v1743 = vpop.xlane.xlu0 %1742
        %1744 = vmax.xlane.f32.xlu0 %v1595
        %v1745 = vpop.xlane.xlu0 %1744
        %1746 = vmax.xlane.f32.xlu0 %v1600
        %v1747 = vpop.xlane.xlu0 %1746
        %1748 = vmax.xlane.f32.xlu0 %v1603
        %v1749 = vpop.xlane.xlu0 %1748
        %1750 = vmax.xlane.f32.xlu0 %v1608
        %v1751 = vpop.xlane.xlu0 %1750
        %1752 = vmax.xlane.f32.xlu0 %v1611
        %v1753 = vpop.xlane.xlu0 %1752
        %1754 = vmax.xlane.f32.xlu0 %v1616
        %v1755 = vpop.xlane.xlu0 %1754
        %1756 = vmax.xlane.f32.xlu0 %v1619
        %v1757 = vpop.xlane.xlu0 %1756
        %1758 = vmax.xlane.f32.xlu0 %v1624
        %v1759 = vpop.xlane.xlu0 %1758
        %1760 = vmax.xlane.f32.xlu0 %v1627
        %v1761 = vpop.xlane.xlu0 %1760
        %1762 = vmax.xlane.f32.xlu0 %v1632
        %v1763 = vpop.xlane.xlu0 %1762
        %1764 = vmax.xlane.f32.xlu0 %v1635
        %v1765 = vpop.xlane.xlu0 %1764
        %v1766 = vsub.f32 %v997, %v1639
        %v1767 = vsub.f32 %v1000, %v1641
        %v1768 = vsub.f32 %v1005, %v1643
        %v1769 = vsub.f32 %v1008, %v1645
        %v1770 = vsub.f32 %v1013, %v1647
        %v1771 = vsub.f32 %v1016, %v1649
        %v1772 = vsub.f32 %v1021, %v1651
        %v1773 = vsub.f32 %v1024, %v1653
        %v1774 = vsub.f32 %v1029, %v1655
        %v1775 = vsub.f32 %v1032, %v1657
        %v1776 = vsub.f32 %v1037, %v1659
        %v1777 = vsub.f32 %v1040, %v1661
        %v1778 = vsub.f32 %v1045, %v1663
        %v1779 = vsub.f32 %v1048, %v1665
        %v1780 = vsub.f32 %v1053, %v1667
        %v1781 = vsub.f32 %v1056, %v1669
        %v1782 = vsub.f32 %v1190, %v1671
        %v1783 = vsub.f32 %v1193, %v1673
        %v1784 = vsub.f32 %v1198, %v1675
        %v1785 = vsub.f32 %v1201, %v1677
        %v1786 = vsub.f32 %v1206, %v1679
        %v1787 = vsub.f32 %v1209, %v1681
        %v1788 = vsub.f32 %v1214, %v1683
        %v1789 = vsub.f32 %v1217, %v1685
        %v1790 = vsub.f32 %v1222, %v1687
        %v1791 = vsub.f32 %v1225, %v1689
        %v1792 = vsub.f32 %v1230, %v1691
        %v1793 = vsub.f32 %v1233, %v1693
        %v1794 = vsub.f32 %v1238, %v1695
        %v1795 = vsub.f32 %v1241, %v1697
        %v1796 = vsub.f32 %v1246, %v1699
        %v1797 = vsub.f32 %v1249, %v1701
        %v1798 = vsub.f32 %v1383, %v1703
        %v1799 = vsub.f32 %v1386, %v1705
        %v1800 = vsub.f32 %v1391, %v1707
        %v1801 = vsub.f32 %v1394, %v1709
        %v1802 = vsub.f32 %v1399, %v1711
        %v1803 = vsub.f32 %v1402, %v1713
        %v1804 = vsub.f32 %v1407, %v1715
        %v1805 = vsub.f32 %v1410, %v1717
        %v1806 = vsub.f32 %v1415, %v1719
        %v1807 = vsub.f32 %v1418, %v1721
        %v1808 = vsub.f32 %v1423, %v1723
        %v1809 = vsub.f32 %v1426, %v1725
        %v1810 = vsub.f32 %v1431, %v1727
        %v1811 = vsub.f32 %v1434, %v1729
        %v1812 = vsub.f32 %v1439, %v1731
        %v1813 = vsub.f32 %v1442, %v1733
        %v1814 = vsub.f32 %v1576, %v1735
        %v1815 = vsub.f32 %v1579, %v1737
        %v1816 = vsub.f32 %v1584, %v1739
        %v1817 = vsub.f32 %v1587, %v1741
        %v1818 = vsub.f32 %v1592, %v1743
        %v1819 = vsub.f32 %v1595, %v1745
        %v1820 = vsub.f32 %v1600, %v1747
        %v1821 = vsub.f32 %v1603, %v1749
        %v1822 = vsub.f32 %v1608, %v1751
        %v1823 = vsub.f32 %v1611, %v1753
        %v1824 = vsub.f32 %v1616, %v1755
        %v1825 = vsub.f32 %v1619, %v1757
        %v1826 = vsub.f32 %v1624, %v1759
        %v1827 = vsub.f32 %v1627, %v1761
        %v1828 = vsub.f32 %v1632, %v1763
        %v1829 = vsub.f32 %v1635, %v1765
        %v1830 = vmul.f32 %v1766, 0.088388346
        %v1831 = vmul.f32 %v1767, 0.088388346
        %v1832 = vmul.f32 %v1768, 0.088388346
        %v1833 = vmul.f32 %v1769, 0.088388346
        %v1834 = vmul.f32 %v1770, 0.088388346
        %v1835 = vmul.f32 %v1771, 0.088388346
        %v1836 = vmul.f32 %v1772, 0.088388346
        %v1837 = vmul.f32 %v1773, 0.088388346
        %v1838 = vmul.f32 %v1774, 0.088388346
        %v1839 = vmul.f32 %v1775, 0.088388346
        %v1840 = vmul.f32 %v1776, 0.088388346
        %v1841 = vmul.f32 %v1777, 0.088388346
        %v1842 = vmul.f32 %v1778, 0.088388346
        %v1843 = vmul.f32 %v1779, 0.088388346
        %v1844 = vmul.f32 %v1780, 0.088388346
        %v1845 = vmul.f32 %v1781, 0.088388346
        %v1846 = vmul.f32 %v1782, 0.088388346
        %v1847 = vmul.f32 %v1783, 0.088388346
        %v1848 = vmul.f32 %v1784, 0.088388346
        %v1849 = vmul.f32 %v1785, 0.088388346
        %v1850 = vmul.f32 %v1786, 0.088388346
        %v1851 = vmul.f32 %v1787, 0.088388346
        %v1852 = vmul.f32 %v1788, 0.088388346
        %v1853 = vmul.f32 %v1789, 0.088388346
        %v1854 = vmul.f32 %v1790, 0.088388346
        %v1855 = vmul.f32 %v1791, 0.088388346
        %v1856 = vmul.f32 %v1792, 0.088388346
        %v1857 = vmul.f32 %v1793, 0.088388346
        %v1858 = vmul.f32 %v1794, 0.088388346
        %v1859 = vmul.f32 %v1795, 0.088388346
        %v1860 = vmul.f32 %v1796, 0.088388346
        %v1861 = vmul.f32 %v1797, 0.088388346
        %v1862 = vmul.f32 %v1798, 0.088388346
        %v1863 = vmul.f32 %v1799, 0.088388346
        %v1864 = vmul.f32 %v1800, 0.088388346
        %v1865 = vmul.f32 %v1801, 0.088388346
        %v1866 = vmul.f32 %v1802, 0.088388346
        %v1867 = vmul.f32 %v1803, 0.088388346
        %v1868 = vmul.f32 %v1804, 0.088388346
        %v1869 = vmul.f32 %v1805, 0.088388346
        %v1870 = vmul.f32 %v1806, 0.088388346
        %v1871 = vmul.f32 %v1807, 0.088388346
        %v1872 = vmul.f32 %v1808, 0.088388346
        %v1873 = vmul.f32 %v1809, 0.088388346
        %v1874 = vmul.f32 %v1810, 0.088388346
        %v1875 = vmul.f32 %v1811, 0.088388346
        %v1876 = vmul.f32 %v1812, 0.088388346
        %v1877 = vmul.f32 %v1813, 0.088388346
        %v1878 = vmul.f32 %v1814, 0.088388346
        %v1879 = vmul.f32 %v1815, 0.088388346
        %v1880 = vmul.f32 %v1816, 0.088388346
        %v1881 = vmul.f32 %v1817, 0.088388346
        %v1882 = vmul.f32 %v1818, 0.088388346
        %v1883 = vmul.f32 %v1819, 0.088388346
        %v1884 = vmul.f32 %v1820, 0.088388346
        %v1885 = vmul.f32 %v1821, 0.088388346
        %v1886 = vmul.f32 %v1822, 0.088388346
        %v1887 = vmul.f32 %v1823, 0.088388346
        %v1888 = vmul.f32 %v1824, 0.088388346
        %v1889 = vmul.f32 %v1825, 0.088388346
        %v1890 = vmul.f32 %v1826, 0.088388346
        %v1891 = vmul.f32 %v1827, 0.088388346
        %v1892 = vmul.f32 %v1828, 0.088388346
        %v1893 = vmul.f32 %v1829, 0.088388346
        %v1894 = vmul.f32 %v1830, 1.442695
        %v1895 = vpow.pop %v1894
        %v1896 = vmul.f32 %v1831, 1.442695
        %v1897 = vpow.pop %v1896
        %v1898 = vmul.f32 %v1832, 1.442695
        %v1899 = vpow.pop %v1898
        %v1900 = vmul.f32 %v1833, 1.442695
        %v1901 = vpow.pop %v1900
        %v1902 = vmul.f32 %v1834, 1.442695
        %v1903 = vpow.pop %v1902
        %v1904 = vmul.f32 %v1835, 1.442695
        %v1905 = vpow.pop %v1904
        %v1906 = vmul.f32 %v1836, 1.442695
        %v1907 = vpow.pop %v1906
        %v1908 = vmul.f32 %v1837, 1.442695
        %v1909 = vpow.pop %v1908
        %v1910 = vmul.f32 %v1838, 1.442695
        %v1911 = vpow.pop %v1910
        %v1912 = vmul.f32 %v1839, 1.442695
        %v1913 = vpow.pop %v1912
        %v1914 = vmul.f32 %v1840, 1.442695
        %v1915 = vpow.pop %v1914
        %v1916 = vmul.f32 %v1841, 1.442695
        %v1917 = vpow.pop %v1916
        %v1918 = vmul.f32 %v1842, 1.442695
        %v1919 = vpow.pop %v1918
        %v1920 = vmul.f32 %v1843, 1.442695
        %v1921 = vpow.pop %v1920
        %v1922 = vmul.f32 %v1844, 1.442695
        %v1923 = vpow.pop %v1922
        %v1924 = vmul.f32 %v1845, 1.442695
        %v1925 = vpow.pop %v1924
        %v1926 = vmul.f32 %v1846, 1.442695
        %v1927 = vpow.pop %v1926
        %v1928 = vmul.f32 %v1847, 1.442695
        %v1929 = vpow.pop %v1928
        %v1930 = vmul.f32 %v1848, 1.442695
        %v1931 = vpow.pop %v1930
        %v1932 = vmul.f32 %v1849, 1.442695
        %v1933 = vpow.pop %v1932
        %v1934 = vmul.f32 %v1850, 1.442695
        %v1935 = vpow.pop %v1934
        %v1936 = vmul.f32 %v1851, 1.442695
        %v1937 = vpow.pop %v1936
        %v1938 = vmul.f32 %v1852, 1.442695
        %v1939 = vpow.pop %v1938
        %v1940 = vmul.f32 %v1853, 1.442695
        %v1941 = vpow.pop %v1940
        %v1942 = vmul.f32 %v1854, 1.442695
        %v1943 = vpow.pop %v1942
        %v1944 = vmul.f32 %v1855, 1.442695
        %v1945 = vpow.pop %v1944
        %v1946 = vmul.f32 %v1856, 1.442695
        %v1947 = vpow.pop %v1946
        %v1948 = vmul.f32 %v1857, 1.442695
        %v1949 = vpow.pop %v1948
        %v1950 = vmul.f32 %v1858, 1.442695
        %v1951 = vpow.pop %v1950
        %v1952 = vmul.f32 %v1859, 1.442695
        %v1953 = vpow.pop %v1952
        %v1954 = vmul.f32 %v1860, 1.442695
        %v1955 = vpow.pop %v1954
        %v1956 = vmul.f32 %v1861, 1.442695
        %v1957 = vpow.pop %v1956
        %v1958 = vmul.f32 %v1862, 1.442695
        %v1959 = vpow.pop %v1958
        %v1960 = vmul.f32 %v1863, 1.442695
        %v1961 = vpow.pop %v1960
        %v1962 = vmul.f32 %v1864, 1.442695
        %v1963 = vpow.pop %v1962
        %v1964 = vmul.f32 %v1865, 1.442695
        %v1965 = vpow.pop %v1964
        %v1966 = vmul.f32 %v1866, 1.442695
        %v1967 = vpow.pop %v1966
        %v1968 = vmul.f32 %v1867, 1.442695
        %v1969 = vpow.pop %v1968
        %v1970 = vmul.f32 %v1868, 1.442695
        %v1971 = vpow.pop %v1970
        %v1972 = vmul.f32 %v1869, 1.442695
        %v1973 = vpow.pop %v1972
        %v1974 = vmul.f32 %v1870, 1.442695
        %v1975 = vpow.pop %v1974
        %v1976 = vmul.f32 %v1871, 1.442695
        %v1977 = vpow.pop %v1976
        %v1978 = vmul.f32 %v1872, 1.442695
        %v1979 = vpow.pop %v1978
        %v1980 = vmul.f32 %v1873, 1.442695
        %v1981 = vpow.pop %v1980
        %v1982 = vmul.f32 %v1874, 1.442695
        %v1983 = vpow.pop %v1982
        %v1984 = vmul.f32 %v1875, 1.442695
        %v1985 = vpow.pop %v1984
        %v1986 = vmul.f32 %v1876, 1.442695
        %v1987 = vpow.pop %v1986
        %v1988 = vmul.f32 %v1877, 1.442695
        %v1989 = vpow.pop %v1988
        %v1990 = vmul.f32 %v1878, 1.442695
        %v1991 = vpow.pop %v1990
        %v1992 = vmul.f32 %v1879, 1.442695
        %v1993 = vpow.pop %v1992
        %v1994 = vmul.f32 %v1880, 1.442695
        %v1995 = vpow.pop %v1994
        %v1996 = vmul.f32 %v1881, 1.442695
        %v1997 = vpow.pop %v1996
        %v1998 = vmul.f32 %v1882, 1.442695
        %v1999 = vpow.pop %v1998
        %v2000 = vmul.f32 %v1883, 1.442695
        %v2001 = vpow.pop %v2000
        %v2002 = vmul.f32 %v1884, 1.442695
        %v2003 = vpow.pop %v2002
        %v2004 = vmul.f32 %v1885, 1.442695
        %v2005 = vpow.pop %v2004
        %v2006 = vmul.f32 %v1886, 1.442695
        %v2007 = vpow.pop %v2006
        %v2008 = vmul.f32 %v1887, 1.442695
        %v2009 = vpow.pop %v2008
        %v2010 = vmul.f32 %v1888, 1.442695
        %v2011 = vpow.pop %v2010
        %v2012 = vmul.f32 %v1889, 1.442695
        %v2013 = vpow.pop %v2012
        %v2014 = vmul.f32 %v1890, 1.442695
        %v2015 = vpow.pop %v2014
        %v2016 = vmul.f32 %v1891, 1.442695
        %v2017 = vpow.pop %v2016
        %v2018 = vmul.f32 %v1892, 1.442695
        %v2019 = vpow.pop %v2018
        %v2020 = vmul.f32 %v1893, 1.442695
        %v2021 = vpow.pop %v2020
        %2022 = vadd.xlane.f32.xlu0 %v1895
        %v2023 = vpop.xlane.xlu0 %2022
        %2024 = vadd.xlane.f32.xlu0 %v1897
        %v2025 = vpop.xlane.xlu0 %2024
        %2026 = vadd.xlane.f32.xlu0 %v1899
        %v2027 = vpop.xlane.xlu0 %2026
        %2028 = vadd.xlane.f32.xlu0 %v1901
        %v2029 = vpop.xlane.xlu0 %2028
        %2030 = vadd.xlane.f32.xlu0 %v1903
        %v2031 = vpop.xlane.xlu0 %2030
        %2032 = vadd.xlane.f32.xlu0 %v1905
        %v2033 = vpop.xlane.xlu0 %2032
        %2034 = vadd.xlane.f32.xlu0 %v1907
        %v2035 = vpop.xlane.xlu0 %2034
        %2036 = vadd.xlane.f32.xlu0 %v1909
        %v2037 = vpop.xlane.xlu0 %2036
        %2038 = vadd.xlane.f32.xlu0 %v1911
        %v2039 = vpop.xlane.xlu0 %2038
        %2040 = vadd.xlane.f32.xlu0 %v1913
        %v2041 = vpop.xlane.xlu0 %2040
        %2042 = vadd.xlane.f32.xlu0 %v1915
        %v2043 = vpop.xlane.xlu0 %2042
        %2044 = vadd.xlane.f32.xlu0 %v1917
        %v2045 = vpop.xlane.xlu0 %2044
        %2046 = vadd.xlane.f32.xlu0 %v1919
        %v2047 = vpop.xlane.xlu0 %2046
        %2048 = vadd.xlane.f32.xlu0 %v1921
        %v2049 = vpop.xlane.xlu0 %2048
        %2050 = vadd.xlane.f32.xlu0 %v1923
        %v2051 = vpop.xlane.xlu0 %2050
        %2052 = vadd.xlane.f32.xlu0 %v1925
        %v2053 = vpop.xlane.xlu0 %2052
        %2054 = vadd.xlane.f32.xlu0 %v1927
        %v2055 = vpop.xlane.xlu0 %2054
        %2056 = vadd.xlane.f32.xlu0 %v1929
        %v2057 = vpop.xlane.xlu0 %2056
        %2058 = vadd.xlane.f32.xlu0 %v1931
        %v2059 = vpop.xlane.xlu0 %2058
        %2060 = vadd.xlane.f32.xlu0 %v1933
        %v2061 = vpop.xlane.xlu0 %2060
        %2062 = vadd.xlane.f32.xlu0 %v1935
        %v2063 = vpop.xlane.xlu0 %2062
        %2064 = vadd.xlane.f32.xlu0 %v1937
        %v2065 = vpop.xlane.xlu0 %2064
        %2066 = vadd.xlane.f32.xlu0 %v1939
        %v2067 = vpop.xlane.xlu0 %2066
        %2068 = vadd.xlane.f32.xlu0 %v1941
        %v2069 = vpop.xlane.xlu0 %2068
        %2070 = vadd.xlane.f32.xlu0 %v1943
        %v2071 = vpop.xlane.xlu0 %2070
        %2072 = vadd.xlane.f32.xlu0 %v1945
        %v2073 = vpop.xlane.xlu0 %2072
        %2074 = vadd.xlane.f32.xlu0 %v1947
        %v2075 = vpop.xlane.xlu0 %2074
        %2076 = vadd.xlane.f32.xlu0 %v1949
        %v2077 = vpop.xlane.xlu0 %2076
        %2078 = vadd.xlane.f32.xlu0 %v1951
        %v2079 = vpop.xlane.xlu0 %2078
        %2080 = vadd.xlane.f32.xlu0 %v1953
        %v2081 = vpop.xlane.xlu0 %2080
        %2082 = vadd.xlane.f32.xlu0 %v1955
        %v2083 = vpop.xlane.xlu0 %2082
        %2084 = vadd.xlane.f32.xlu0 %v1957
        %v2085 = vpop.xlane.xlu0 %2084
        %2086 = vadd.xlane.f32.xlu0 %v1959
        %v2087 = vpop.xlane.xlu0 %2086
        %2088 = vadd.xlane.f32.xlu0 %v1961
        %v2089 = vpop.xlane.xlu0 %2088
        %2090 = vadd.xlane.f32.xlu0 %v1963
        %v2091 = vpop.xlane.xlu0 %2090
        %2092 = vadd.xlane.f32.xlu0 %v1965
        %v2093 = vpop.xlane.xlu0 %2092
        %2094 = vadd.xlane.f32.xlu0 %v1967
        %v2095 = vpop.xlane.xlu0 %2094
        %2096 = vadd.xlane.f32.xlu0 %v1969
        %v2097 = vpop.xlane.xlu0 %2096
        %2098 = vadd.xlane.f32.xlu0 %v1971
        %v2099 = vpop.xlane.xlu0 %2098
        %2100 = vadd.xlane.f32.xlu0 %v1973
        %v2101 = vpop.xlane.xlu0 %2100
        %2102 = vadd.xlane.f32.xlu0 %v1975
        %v2103 = vpop.xlane.xlu0 %2102
        %2104 = vadd.xlane.f32.xlu0 %v1977
        %v2105 = vpop.xlane.xlu0 %2104
        %2106 = vadd.xlane.f32.xlu0 %v1979
        %v2107 = vpop.xlane.xlu0 %2106
        %2108 = vadd.xlane.f32.xlu0 %v1981
        %v2109 = vpop.xlane.xlu0 %2108
        %2110 = vadd.xlane.f32.xlu0 %v1983
        %v2111 = vpop.xlane.xlu0 %2110
        %2112 = vadd.xlane.f32.xlu0 %v1985
        %v2113 = vpop.xlane.xlu0 %2112
        %2114 = vadd.xlane.f32.xlu0 %v1987
        %v2115 = vpop.xlane.xlu0 %2114
        %2116 = vadd.xlane.f32.xlu0 %v1989
        %v2117 = vpop.xlane.xlu0 %2116
        %2118 = vadd.xlane.f32.xlu0 %v1991
        %v2119 = vpop.xlane.xlu0 %2118
        %2120 = vadd.xlane.f32.xlu0 %v1993
        %v2121 = vpop.xlane.xlu0 %2120
        %2122 = vadd.xlane.f32.xlu0 %v1995
        %v2123 = vpop.xlane.xlu0 %2122
        %2124 = vadd.xlane.f32.xlu0 %v1997
        %v2125 = vpop.xlane.xlu0 %2124
        %2126 = vadd.xlane.f32.xlu0 %v1999
        %v2127 = vpop.xlane.xlu0 %2126
        %2128 = vadd.xlane.f32.xlu0 %v2001
        %v2129 = vpop.xlane.xlu0 %2128
        %2130 = vadd.xlane.f32.xlu0 %v2003
        %v2131 = vpop.xlane.xlu0 %2130
        %2132 = vadd.xlane.f32.xlu0 %v2005
        %v2133 = vpop.xlane.xlu0 %2132
        %2134 = vadd.xlane.f32.xlu0 %v2007
        %v2135 = vpop.xlane.xlu0 %2134
        %2136 = vadd.xlane.f32.xlu0 %v2009
        %v2137 = vpop.xlane.xlu0 %2136
        %2138 = vadd.xlane.f32.xlu0 %v2011
        %v2139 = vpop.xlane.xlu0 %2138
        %2140 = vadd.xlane.f32.xlu0 %v2013
        %v2141 = vpop.xlane.xlu0 %2140
        %2142 = vadd.xlane.f32.xlu0 %v2015
        %v2143 = vpop.xlane.xlu0 %2142
        %2144 = vadd.xlane.f32.xlu0 %v2017
        %v2145 = vpop.xlane.xlu0 %2144
        %2146 = vadd.xlane.f32.xlu0 %v2019
        %v2147 = vpop.xlane.xlu0 %2146
        %2148 = vadd.xlane.f32.xlu0 %v2021
        %v2149 = vpop.xlane.xlu0 %2148
        %v2150 = vpack.c.bf16 %v1897, %v1895
        %v2151 = vpack.c.bf16 %v1901, %v1899
        %v2152 = vpack.c.bf16 %v1905, %v1903
        %v2153 = vpack.c.bf16 %v1909, %v1907
        %v2154 = vpack.c.bf16 %v1913, %v1911
        %v2155 = vpack.c.bf16 %v1917, %v1915
        %v2156 = vpack.c.bf16 %v1921, %v1919
        %v2157 = vpack.c.bf16 %v1925, %v1923
        %v2158 = vpack.c.bf16 %v1929, %v1927
        %v2159 = vpack.c.bf16 %v1933, %v1931
        %v2160 = vpack.c.bf16 %v1937, %v1935
        %v2161 = vpack.c.bf16 %v1941, %v1939
        %v2162 = vpack.c.bf16 %v1945, %v1943
        %v2163 = vpack.c.bf16 %v1949, %v1947
        %v2164 = vpack.c.bf16 %v1953, %v1951
        %v2165 = vpack.c.bf16 %v1957, %v1955
        %v2166 = vpack.c.bf16 %v1961, %v1959
        %v2167 = vpack.c.bf16 %v1965, %v1963
        %v2168 = vpack.c.bf16 %v1969, %v1967
        %v2169 = vpack.c.bf16 %v1973, %v1971
        %v2170 = vpack.c.bf16 %v1977, %v1975
        %v2171 = vpack.c.bf16 %v1981, %v1979
        %v2172 = vpack.c.bf16 %v1985, %v1983
        %v2173 = vpack.c.bf16 %v1989, %v1987
        %v2174 = vpack.c.bf16 %v1993, %v1991
        %v2175 = vpack.c.bf16 %v1997, %v1995
        %v2176 = vpack.c.bf16 %v2001, %v1999
        %v2177 = vpack.c.bf16 %v2005, %v2003
        %v2178 = vpack.c.bf16 %v2009, %v2007
        %v2179 = vpack.c.bf16 %v2013, %v2011
        %v2180 = vpack.c.bf16 %v2017, %v2015
        %v2181 = vpack.c.bf16 %v2021, %v2019
        %v2182 = vld [vmem:[%s522] sm:$0xf]
        %v2183 = vld [vmem:[%s522 + $0x4] sm:$0xf]
        %v2184 = vld [vmem:[%s522 + $0x8] sm:$0xf]
        %v2185 = vld [vmem:[%s522 + $0xc] sm:$0xf]
        %v2186 = vld [vmem:[%s522 + $0x10] sm:$0xf]
        %v2187 = vld [vmem:[%s522 + $0x14] sm:$0xf]
        %v2188 = vld [vmem:[%s522 + $0x18] sm:$0xf]
        %v2189 = vld [vmem:[%s522 + $0x1c] sm:$0xf]
        %v2190 = vld [vmem:[%s522 + $0x20] sm:$0xf]
        %v2191 = vld [vmem:[%s522 + $0x24] sm:$0xf]
        %v2192 = vld [vmem:[%s522 + $0x28] sm:$0xf]
        %v2193 = vld [vmem:[%s522 + $0x2c] sm:$0xf]
        %v2194 = vld [vmem:[%s522 + $0x30] sm:$0xf]
        %v2195 = vld [vmem:[%s522 + $0x34] sm:$0xf]
        %v2196 = vld [vmem:[%s522 + $0x38] sm:$0xf]
        %v2197 = vld [vmem:[%s522 + $0x3c] sm:$0xf]
        %v2198 = vld [vmem:[%s522 + $0x40] sm:$0xf]
        %v2199 = vld [vmem:[%s522 + $0x44] sm:$0xf]
        %v2200 = vld [vmem:[%s522 + $0x48] sm:$0xf]
        %v2201 = vld [vmem:[%s522 + $0x4c] sm:$0xf]
        %v2202 = vld [vmem:[%s522 + $0x50] sm:$0xf]
        %v2203 = vld [vmem:[%s522 + $0x54] sm:$0xf]
        %v2204 = vld [vmem:[%s522 + $0x58] sm:$0xf]
        %v2205 = vld [vmem:[%s522 + $0x5c] sm:$0xf]
        %v2206 = vld [vmem:[%s522 + $0x60] sm:$0xf]
        %v2207 = vld [vmem:[%s522 + $0x64] sm:$0xf]
        %v2208 = vld [vmem:[%s522 + $0x68] sm:$0xf]
        %v2209 = vld [vmem:[%s522 + $0x6c] sm:$0xf]
        %v2210 = vld [vmem:[%s522 + $0x70] sm:$0xf]
        %v2211 = vld [vmem:[%s522 + $0x74] sm:$0xf]
        %v2212 = vld [vmem:[%s522 + $0x78] sm:$0xf]
        %v2213 = vld [vmem:[%s522 + $0x7c] sm:$0xf]
        %v2214 = vld [vmem:[%s522 + $0x80] sm:$0xf]
        %v2215 = vld [vmem:[%s522 + $0x84] sm:$0xf]
        %v2216 = vld [vmem:[%s522 + $0x88] sm:$0xf]
        %v2217 = vld [vmem:[%s522 + $0x8c] sm:$0xf]
        %v2218 = vld [vmem:[%s522 + $0x90] sm:$0xf]
        %v2219 = vld [vmem:[%s522 + $0x94] sm:$0xf]
        %v2220 = vld [vmem:[%s522 + $0x98] sm:$0xf]
        %v2221 = vld [vmem:[%s522 + $0x9c] sm:$0xf]
        %v2222 = vld [vmem:[%s522 + $0xa0] sm:$0xf]
        %v2223 = vld [vmem:[%s522 + $0xa4] sm:$0xf]
        %v2224 = vld [vmem:[%s522 + $0xa8] sm:$0xf]
        %v2225 = vld [vmem:[%s522 + $0xac] sm:$0xf]
        %v2226 = vld [vmem:[%s522 + $0xb0] sm:$0xf]
        %v2227 = vld [vmem:[%s522 + $0xb4] sm:$0xf]
        %v2228 = vld [vmem:[%s522 + $0xb8] sm:$0xf]
        %v2229 = vld [vmem:[%s522 + $0xbc] sm:$0xf]
        %v2230 = vld [vmem:[%s522 + $0xc0] sm:$0xf]
        %v2231 = vld [vmem:[%s522 + $0xc4] sm:$0xf]
        %v2232 = vld [vmem:[%s522 + $0xc8] sm:$0xf]
        %v2233 = vld [vmem:[%s522 + $0xcc] sm:$0xf]
        %v2234 = vld [vmem:[%s522 + $0xd0] sm:$0xf]
        %v2235 = vld [vmem:[%s522 + $0xd4] sm:$0xf]
        %v2236 = vld [vmem:[%s522 + $0xd8] sm:$0xf]
        %v2237 = vld [vmem:[%s522 + $0xdc] sm:$0xf]
        %v2238 = vld [vmem:[%s522 + $0xe0] sm:$0xf]
        %v2239 = vld [vmem:[%s522 + $0xe4] sm:$0xf]
        %v2240 = vld [vmem:[%s522 + $0xe8] sm:$0xf]
        %v2241 = vld [vmem:[%s522 + $0xec] sm:$0xf]
        %v2242 = vld [vmem:[%s522 + $0xf0] sm:$0xf]
        %v2243 = vld [vmem:[%s522 + $0xf4] sm:$0xf]
        %v2244 = vld [vmem:[%s522 + $0xf8] sm:$0xf]
        %v2245 = vld [vmem:[%s522 + $0xfc] sm:$0xf]
        %v2262 = vunpack.c.l.b16 %v2182
        %v2263 = vunpack.c.l.b16 %v2183
        %v2264 = vunpack.c.l.b16 %v2184
        %v2265 = vunpack.c.l.b16 %v2185
        %v2266 = vunpack.c.l.b16 %v2186
        %v2267 = vunpack.c.l.b16 %v2187
        %v2268 = vunpack.c.l.b16 %v2188
        %v2269 = vunpack.c.l.b16 %v2189
        %v2270 = vunpack.c.l.b16 %v2190
        %v2271 = vunpack.c.l.b16 %v2191
        %v2272 = vunpack.c.l.b16 %v2192
        %v2273 = vunpack.c.l.b16 %v2193
        %v2274 = vunpack.c.l.b16 %v2194
        %v2275 = vunpack.c.l.b16 %v2195
        %v2276 = vunpack.c.l.b16 %v2196
        %v2277 = vunpack.c.l.b16 %v2197
        %v2278 = vpack.c.b16 %v2263, %v2262
        %v2279 = vpack.c.b16 %v2265, %v2264
        %v2280 = vpack.c.b16 %v2267, %v2266
        %v2281 = vpack.c.b16 %v2269, %v2268
        %v2282 = vpack.c.b16 %v2271, %v2270
        %v2283 = vpack.c.b16 %v2273, %v2272
        %v2284 = vpack.c.b16 %v2275, %v2274
        %v2285 = vpack.c.b16 %v2277, %v2276
        %2294 = vmatprep.subr.bf16.mxu0 0
        %2295 = vmatpush1.bf16.msra.mxu0 %v2285
        %2296 = vmatprep.subr.bf16.mxu0 0
        %2297 = vmatpush1.bf16.msra.mxu0 %v2284
        %2298 = vmatprep.subr.bf16.mxu0 0
        %2299 = vmatpush1.bf16.msra.mxu0 %v2283
        %2300 = vmatprep.subr.bf16.mxu0 0
        %2301 = vmatpush1.bf16.msra.mxu0 %v2282
        %2302 = vmatprep.subr.bf16.mxu0 0
        %2303 = vmatpush1.bf16.msra.mxu0 %v2281
        %2304 = vmatprep.subr.bf16.mxu0 0
        %2305 = vmatpush1.bf16.msra.mxu0 %v2280
        %2306 = vmatprep.subr.bf16.mxu0 0
        %2307 = vmatpush1.bf16.msra.mxu0 %v2279
        %2308 = vmatprep.subr.bf16.mxu0 0
        %2309 = vmatpush1.bf16.msra.mxu0 %v2278
        %2310 = vmatprep.subr.bf16.mxu0 0
        %2311 = vmatpush2.bf16.msra.mxu0 0
        %2312 = vmatprep.subr.bf16.mxu0 0
        %2313 = vmatpush2.bf16.msra.mxu0 0
        %2314 = vmatprep.subr.bf16.mxu0 0
        %2315 = vmatpush2.bf16.msra.mxu0 0
        %2316 = vmatprep.subr.bf16.mxu0 0
        %2317 = vmatpush2.bf16.msra.mxu0 0
        %2318 = vmatprep.subr.bf16.mxu0 0
        %2319 = vmatpush2.bf16.msra.mxu0 0
        %2320 = vmatprep.subr.bf16.mxu0 0
        %2321 = vmatpush2.bf16.msra.mxu0 0
        %2322 = vmatprep.subr.bf16.mxu0 0
        %2323 = vmatpush2.bf16.msra.mxu0 0
        %2324 = vmatprep.subr.bf16.mxu0 0
        %2325 = vmatpush2.bf16.msra.mxu0 0
        %2326 = vmatprep.mubr.bf16.mxu0 0
        %2327 = vmatmul.mubr.bf16.gmra.mxu0 %v2150
        %v2328 = vpop.f32.mrf.mxu0
        %v2329 = vadd.f32 0.0, %v2328
        %v2330 = vpop.f32.mrf.mxu0
        %v2331 = vpop.f32.mrf.mxu0
        %v2332 = vadd.f32 0.0, %v2331
        %v2333 = vpop.f32.mrf.mxu0
        %2334 = vmatprep.mubr.bf16.mxu0 0
        %2335 = vmatmul.mubr.bf16.gmra.mxu0 %v2151
        %v2336 = vpop.f32.mrf.mxu0
        %v2337 = vadd.f32 0.0, %v2336
        %v2338 = vpop.f32.mrf.mxu0
        %v2339 = vpop.f32.mrf.mxu0
        %v2340 = vadd.f32 0.0, %v2339
        %v2341 = vpop.f32.mrf.mxu0
        %2342 = vmatprep.mubr.bf16.mxu0 0
        %2343 = vmatmul.mubr.bf16.gmra.mxu0 %v2152
        %v2344 = vpop.f32.mrf.mxu0
        %v2345 = vadd.f32 0.0, %v2344
        %v2346 = vpop.f32.mrf.mxu0
        %v2347 = vpop.f32.mrf.mxu0
        %v2348 = vadd.f32 0.0, %v2347
        %v2349 = vpop.f32.mrf.mxu0
        %2350 = vmatprep.mubr.bf16.mxu0 0
        %2351 = vmatmul.mubr.bf16.gmra.mxu0 %v2153
        %v2352 = vpop.f32.mrf.mxu0
        %v2353 = vadd.f32 0.0, %v2352
        %v2354 = vpop.f32.mrf.mxu0
        %v2355 = vpop.f32.mrf.mxu0
        %v2356 = vadd.f32 0.0, %v2355
        %v2357 = vpop.f32.mrf.mxu0
        %2358 = vmatprep.mubr.bf16.mxu0 0
        %2359 = vmatmul.mubr.bf16.gmra.mxu0 %v2154
        %v2360 = vpop.f32.mrf.mxu0
        %v2361 = vadd.f32 0.0, %v2360
        %v2362 = vpop.f32.mrf.mxu0
        %v2363 = vpop.f32.mrf.mxu0
        %v2364 = vadd.f32 0.0, %v2363
        %v2365 = vpop.f32.mrf.mxu0
        %2366 = vmatprep.mubr.bf16.mxu0 0
        %2367 = vmatmul.mubr.bf16.gmra.mxu0 %v2155
        %v2368 = vpop.f32.mrf.mxu0
        %v2369 = vadd.f32 0.0, %v2368
        %v2370 = vpop.f32.mrf.mxu0
        %v2371 = vpop.f32.mrf.mxu0
        %v2372 = vadd.f32 0.0, %v2371
        %v2373 = vpop.f32.mrf.mxu0
        %2374 = vmatprep.mubr.bf16.mxu0 0
        %2375 = vmatmul.mubr.bf16.gmra.mxu0 %v2156
        %v2376 = vpop.f32.mrf.mxu0
        %v2377 = vadd.f32 0.0, %v2376
        %v2378 = vpop.f32.mrf.mxu0
        %v2379 = vpop.f32.mrf.mxu0
        %v2380 = vadd.f32 0.0, %v2379
        %v2381 = vpop.f32.mrf.mxu0
        %2382 = vmatprep.mubr.bf16.mxu0 0
        %2383 = vmatmul.mubr.bf16.gmra.mxu0 %v2157
        %v2384 = vpop.f32.mrf.mxu0
        %v2385 = vadd.f32 0.0, %v2384
        %v2386 = vpop.f32.mrf.mxu0
        %v2387 = vpop.f32.mrf.mxu0
        %v2388 = vadd.f32 0.0, %v2387
        %v2389 = vpop.f32.mrf.mxu0
        %2390 = vdwg.mxu0
        %v2407 = vunpack.c.l.b16 %v2198
        %v2408 = vunpack.c.l.b16 %v2199
        %v2409 = vunpack.c.l.b16 %v2200
        %v2410 = vunpack.c.l.b16 %v2201
        %v2411 = vunpack.c.l.b16 %v2202
        %v2412 = vunpack.c.l.b16 %v2203
        %v2413 = vunpack.c.l.b16 %v2204
        %v2414 = vunpack.c.l.b16 %v2205
        %v2415 = vunpack.c.l.b16 %v2206
        %v2416 = vunpack.c.l.b16 %v2207
        %v2417 = vunpack.c.l.b16 %v2208
        %v2418 = vunpack.c.l.b16 %v2209
        %v2419 = vunpack.c.l.b16 %v2210
        %v2420 = vunpack.c.l.b16 %v2211
        %v2421 = vunpack.c.l.b16 %v2212
        %v2422 = vunpack.c.l.b16 %v2213
        %v2423 = vpack.c.b16 %v2408, %v2407
        %v2424 = vpack.c.b16 %v2410, %v2409
        %v2425 = vpack.c.b16 %v2412, %v2411
        %v2426 = vpack.c.b16 %v2414, %v2413
        %v2427 = vpack.c.b16 %v2416, %v2415
        %v2428 = vpack.c.b16 %v2418, %v2417
        %v2429 = vpack.c.b16 %v2420, %v2419
        %v2430 = vpack.c.b16 %v2422, %v2421
        %2439 = vmatprep.subr.bf16.mxu0 0
        %2440 = vmatpush1.bf16.msra.mxu0 %v2430
        %2441 = vmatprep.subr.bf16.mxu0 0
        %2442 = vmatpush1.bf16.msra.mxu0 %v2429
        %2443 = vmatprep.subr.bf16.mxu0 0
        %2444 = vmatpush1.bf16.msra.mxu0 %v2428
        %2445 = vmatprep.subr.bf16.mxu0 0
        %2446 = vmatpush1.bf16.msra.mxu0 %v2427
        %2447 = vmatprep.subr.bf16.mxu0 0
        %2448 = vmatpush1.bf16.msra.mxu0 %v2426
        %2449 = vmatprep.subr.bf16.mxu0 0
        %2450 = vmatpush1.bf16.msra.mxu0 %v2425
        %2451 = vmatprep.subr.bf16.mxu0 0
        %2452 = vmatpush1.bf16.msra.mxu0 %v2424
        %2453 = vmatprep.subr.bf16.mxu0 0
        %2454 = vmatpush1.bf16.msra.mxu0 %v2423
        %2455 = vmatprep.subr.bf16.mxu0 0
        %2456 = vmatpush2.bf16.msra.mxu0 0
        %2457 = vmatprep.subr.bf16.mxu0 0
        %2458 = vmatpush2.bf16.msra.mxu0 0
        %2459 = vmatprep.subr.bf16.mxu0 0
        %2460 = vmatpush2.bf16.msra.mxu0 0
        %2461 = vmatprep.subr.bf16.mxu0 0
        %2462 = vmatpush2.bf16.msra.mxu0 0
        %2463 = vmatprep.subr.bf16.mxu0 0
        %2464 = vmatpush2.bf16.msra.mxu0 0
        %2465 = vmatprep.subr.bf16.mxu0 0
        %2466 = vmatpush2.bf16.msra.mxu0 0
        %2467 = vmatprep.subr.bf16.mxu0 0
        %2468 = vmatpush2.bf16.msra.mxu0 0
        %2469 = vmatprep.subr.bf16.mxu0 0
        %2470 = vmatpush2.bf16.msra.mxu0 0
        %2471 = vmatprep.mubr.bf16.mxu0 0
        %2472 = vmatmul.mubr.bf16.gmra.mxu0 %v2158
        %v2473 = vpop.f32.mrf.mxu0
        %v2474 = vadd.f32 0.0, %v2473
        %v2475 = vpop.f32.mrf.mxu0
        %v2476 = vpop.f32.mrf.mxu0
        %v2477 = vadd.f32 0.0, %v2476
        %v2478 = vpop.f32.mrf.mxu0
        %2479 = vmatprep.mubr.bf16.mxu0 0
        %2480 = vmatmul.mubr.bf16.gmra.mxu0 %v2159
        %v2481 = vpop.f32.mrf.mxu0
        %v2482 = vadd.f32 0.0, %v2481
        %v2483 = vpop.f32.mrf.mxu0
        %v2484 = vpop.f32.mrf.mxu0
        %v2485 = vadd.f32 0.0, %v2484
        %v2486 = vpop.f32.mrf.mxu0
        %2487 = vmatprep.mubr.bf16.mxu0 0
        %2488 = vmatmul.mubr.bf16.gmra.mxu0 %v2160
        %v2489 = vpop.f32.mrf.mxu0
        %v2490 = vadd.f32 0.0, %v2489
        %v2491 = vpop.f32.mrf.mxu0
        %v2492 = vpop.f32.mrf.mxu0
        %v2493 = vadd.f32 0.0, %v2492
        %v2494 = vpop.f32.mrf.mxu0
        %2495 = vmatprep.mubr.bf16.mxu0 0
        %2496 = vmatmul.mubr.bf16.gmra.mxu0 %v2161
        %v2497 = vpop.f32.mrf.mxu0
        %v2498 = vadd.f32 0.0, %v2497
        %v2499 = vpop.f32.mrf.mxu0
        %v2500 = vpop.f32.mrf.mxu0
        %v2501 = vadd.f32 0.0, %v2500
        %v2502 = vpop.f32.mrf.mxu0
        %2503 = vmatprep.mubr.bf16.mxu0 0
        %2504 = vmatmul.mubr.bf16.gmra.mxu0 %v2162
        %v2505 = vpop.f32.mrf.mxu0
        %v2506 = vadd.f32 0.0, %v2505
        %v2507 = vpop.f32.mrf.mxu0
        %v2508 = vpop.f32.mrf.mxu0
        %v2509 = vadd.f32 0.0, %v2508
        %v2510 = vpop.f32.mrf.mxu0
        %2511 = vmatprep.mubr.bf16.mxu0 0
        %2512 = vmatmul.mubr.bf16.gmra.mxu0 %v2163
        %v2513 = vpop.f32.mrf.mxu0
        %v2514 = vadd.f32 0.0, %v2513
        %v2515 = vpop.f32.mrf.mxu0
        %v2516 = vpop.f32.mrf.mxu0
        %v2517 = vadd.f32 0.0, %v2516
        %v2518 = vpop.f32.mrf.mxu0
        %2519 = vmatprep.mubr.bf16.mxu0 0
        %2520 = vmatmul.mubr.bf16.gmra.mxu0 %v2164
        %v2521 = vpop.f32.mrf.mxu0
        %v2522 = vadd.f32 0.0, %v2521
        %v2523 = vpop.f32.mrf.mxu0
        %v2524 = vpop.f32.mrf.mxu0
        %v2525 = vadd.f32 0.0, %v2524
        %v2526 = vpop.f32.mrf.mxu0
        %2527 = vmatprep.mubr.bf16.mxu0 0
        %2528 = vmatmul.mubr.bf16.gmra.mxu0 %v2165
        %v2529 = vpop.f32.mrf.mxu0
        %v2530 = vadd.f32 0.0, %v2529
        %v2531 = vpop.f32.mrf.mxu0
        %v2532 = vpop.f32.mrf.mxu0
        %v2533 = vadd.f32 0.0, %v2532
        %v2534 = vpop.f32.mrf.mxu0
        %2535 = vdwg.mxu0
        %v2552 = vunpack.c.l.b16 %v2214
        %v2553 = vunpack.c.l.b16 %v2215
        %v2554 = vunpack.c.l.b16 %v2216
        %v2555 = vunpack.c.l.b16 %v2217
        %v2556 = vunpack.c.l.b16 %v2218
        %v2557 = vunpack.c.l.b16 %v2219
        %v2558 = vunpack.c.l.b16 %v2220
        %v2559 = vunpack.c.l.b16 %v2221
        %v2560 = vunpack.c.l.b16 %v2222
        %v2561 = vunpack.c.l.b16 %v2223
        %v2562 = vunpack.c.l.b16 %v2224
        %v2563 = vunpack.c.l.b16 %v2225
        %v2564 = vunpack.c.l.b16 %v2226
        %v2565 = vunpack.c.l.b16 %v2227
        %v2566 = vunpack.c.l.b16 %v2228
        %v2567 = vunpack.c.l.b16 %v2229
        %v2568 = vpack.c.b16 %v2553, %v2552
        %v2569 = vpack.c.b16 %v2555, %v2554
        %v2570 = vpack.c.b16 %v2557, %v2556
        %v2571 = vpack.c.b16 %v2559, %v2558
        %v2572 = vpack.c.b16 %v2561, %v2560
        %v2573 = vpack.c.b16 %v2563, %v2562
        %v2574 = vpack.c.b16 %v2565, %v2564
        %v2575 = vpack.c.b16 %v2567, %v2566
        %2584 = vmatprep.subr.bf16.mxu0 0
        %2585 = vmatpush1.bf16.msra.mxu0 %v2575
        %2586 = vmatprep.subr.bf16.mxu0 0
        %2587 = vmatpush1.bf16.msra.mxu0 %v2574
        %2588 = vmatprep.subr.bf16.mxu0 0
        %2589 = vmatpush1.bf16.msra.mxu0 %v2573
        %2590 = vmatprep.subr.bf16.mxu0 0
        %2591 = vmatpush1.bf16.msra.mxu0 %v2572
        %2592 = vmatprep.subr.bf16.mxu0 0
        %2593 = vmatpush1.bf16.msra.mxu0 %v2571
        %2594 = vmatprep.subr.bf16.mxu0 0
        %2595 = vmatpush1.bf16.msra.mxu0 %v2570
        %2596 = vmatprep.subr.bf16.mxu0 0
        %2597 = vmatpush1.bf16.msra.mxu0 %v2569
        %2598 = vmatprep.subr.bf16.mxu0 0
        %2599 = vmatpush1.bf16.msra.mxu0 %v2568
        %2600 = vmatprep.subr.bf16.mxu0 0
        %2601 = vmatpush2.bf16.msra.mxu0 0
        %2602 = vmatprep.subr.bf16.mxu0 0
        %2603 = vmatpush2.bf16.msra.mxu0 0
        %2604 = vmatprep.subr.bf16.mxu0 0
        %2605 = vmatpush2.bf16.msra.mxu0 0
        %2606 = vmatprep.subr.bf16.mxu0 0
        %2607 = vmatpush2.bf16.msra.mxu0 0
        %2608 = vmatprep.subr.bf16.mxu0 0
        %2609 = vmatpush2.bf16.msra.mxu0 0
        %2610 = vmatprep.subr.bf16.mxu0 0
        %2611 = vmatpush2.bf16.msra.mxu0 0
        %2612 = vmatprep.subr.bf16.mxu0 0
        %2613 = vmatpush2.bf16.msra.mxu0 0
        %2614 = vmatprep.subr.bf16.mxu0 0
        %2615 = vmatpush2.bf16.msra.mxu0 0
        %2616 = vmatprep.mubr.bf16.mxu0 0
        %2617 = vmatmul.mubr.bf16.gmra.mxu0 %v2166
        %v2618 = vpop.f32.mrf.mxu0
        %v2619 = vadd.f32 0.0, %v2618
        %v2620 = vpop.f32.mrf.mxu0
        %v2621 = vpop.f32.mrf.mxu0
        %v2622 = vadd.f32 0.0, %v2621
        %v2623 = vpop.f32.mrf.mxu0
        %2624 = vmatprep.mubr.bf16.mxu0 0
        %2625 = vmatmul.mubr.bf16.gmra.mxu0 %v2167
        %v2626 = vpop.f32.mrf.mxu0
        %v2627 = vadd.f32 0.0, %v2626
        %v2628 = vpop.f32.mrf.mxu0
        %v2629 = vpop.f32.mrf.mxu0
        %v2630 = vadd.f32 0.0, %v2629
        %v2631 = vpop.f32.mrf.mxu0
        %2632 = vmatprep.mubr.bf16.mxu0 0
        %2633 = vmatmul.mubr.bf16.gmra.mxu0 %v2168
        %v2634 = vpop.f32.mrf.mxu0
        %v2635 = vadd.f32 0.0, %v2634
        %v2636 = vpop.f32.mrf.mxu0
        %v2637 = vpop.f32.mrf.mxu0
        %v2638 = vadd.f32 0.0, %v2637
        %v2639 = vpop.f32.mrf.mxu0
        %2640 = vmatprep.mubr.bf16.mxu0 0
        %2641 = vmatmul.mubr.bf16.gmra.mxu0 %v2169
        %v2642 = vpop.f32.mrf.mxu0
        %v2643 = vadd.f32 0.0, %v2642
        %v2644 = vpop.f32.mrf.mxu0
        %v2645 = vpop.f32.mrf.mxu0
        %v2646 = vadd.f32 0.0, %v2645
        %v2647 = vpop.f32.mrf.mxu0
        %2648 = vmatprep.mubr.bf16.mxu0 0
        %2649 = vmatmul.mubr.bf16.gmra.mxu0 %v2170
        %v2650 = vpop.f32.mrf.mxu0
        %v2651 = vadd.f32 0.0, %v2650
        %v2652 = vpop.f32.mrf.mxu0
        %v2653 = vpop.f32.mrf.mxu0
        %v2654 = vadd.f32 0.0, %v2653
        %v2655 = vpop.f32.mrf.mxu0
        %2656 = vmatprep.mubr.bf16.mxu0 0
        %2657 = vmatmul.mubr.bf16.gmra.mxu0 %v2171
        %v2658 = vpop.f32.mrf.mxu0
        %v2659 = vadd.f32 0.0, %v2658
        %v2660 = vpop.f32.mrf.mxu0
        %v2661 = vpop.f32.mrf.mxu0
        %v2662 = vadd.f32 0.0, %v2661
        %v2663 = vpop.f32.mrf.mxu0
        %2664 = vmatprep.mubr.bf16.mxu0 0
        %2665 = vmatmul.mubr.bf16.gmra.mxu0 %v2172
        %v2666 = vpop.f32.mrf.mxu0
        %v2667 = vadd.f32 0.0, %v2666
        %v2668 = vpop.f32.mrf.mxu0
        %v2669 = vpop.f32.mrf.mxu0
        %v2670 = vadd.f32 0.0, %v2669
        %v2671 = vpop.f32.mrf.mxu0
        %2672 = vmatprep.mubr.bf16.mxu0 0
        %2673 = vmatmul.mubr.bf16.gmra.mxu0 %v2173
        %v2674 = vpop.f32.mrf.mxu0
        %v2675 = vadd.f32 0.0, %v2674
        %v2676 = vpop.f32.mrf.mxu0
        %v2677 = vpop.f32.mrf.mxu0
        %v2678 = vadd.f32 0.0, %v2677
        %v2679 = vpop.f32.mrf.mxu0
        %2680 = vdwg.mxu0
        %v2697 = vunpack.c.l.b16 %v2230
        %v2698 = vunpack.c.l.b16 %v2231
        %v2699 = vunpack.c.l.b16 %v2232
        %v2700 = vunpack.c.l.b16 %v2233
        %v2701 = vunpack.c.l.b16 %v2234
        %v2702 = vunpack.c.l.b16 %v2235
        %v2703 = vunpack.c.l.b16 %v2236
        %v2704 = vunpack.c.l.b16 %v2237
        %v2705 = vunpack.c.l.b16 %v2238
        %v2706 = vunpack.c.l.b16 %v2239
        %v2707 = vunpack.c.l.b16 %v2240
        %v2708 = vunpack.c.l.b16 %v2241
        %v2709 = vunpack.c.l.b16 %v2242
        %v2710 = vunpack.c.l.b16 %v2243
        %v2711 = vunpack.c.l.b16 %v2244
        %v2712 = vunpack.c.l.b16 %v2245
        %v2713 = vpack.c.b16 %v2698, %v2697
        %v2714 = vpack.c.b16 %v2700, %v2699
        %v2715 = vpack.c.b16 %v2702, %v2701
        %v2716 = vpack.c.b16 %v2704, %v2703
        %v2717 = vpack.c.b16 %v2706, %v2705
        %v2718 = vpack.c.b16 %v2708, %v2707
        %v2719 = vpack.c.b16 %v2710, %v2709
        %v2720 = vpack.c.b16 %v2712, %v2711
        %2729 = vmatprep.subr.bf16.mxu0 0
        %2730 = vmatpush1.bf16.msra.mxu0 %v2720
        %2731 = vmatprep.subr.bf16.mxu0 0
        %2732 = vmatpush1.bf16.msra.mxu0 %v2719
        %2733 = vmatprep.subr.bf16.mxu0 0
        %2734 = vmatpush1.bf16.msra.mxu0 %v2718
        %2735 = vmatprep.subr.bf16.mxu0 0
        %2736 = vmatpush1.bf16.msra.mxu0 %v2717
        %2737 = vmatprep.subr.bf16.mxu0 0
        %2738 = vmatpush1.bf16.msra.mxu0 %v2716
        %2739 = vmatprep.subr.bf16.mxu0 0
        %2740 = vmatpush1.bf16.msra.mxu0 %v2715
        %2741 = vmatprep.subr.bf16.mxu0 0
        %2742 = vmatpush1.bf16.msra.mxu0 %v2714
        %2743 = vmatprep.subr.bf16.mxu0 0
        %2744 = vmatpush1.bf16.msra.mxu0 %v2713
        %2745 = vmatprep.subr.bf16.mxu0 0
        %2746 = vmatpush2.bf16.msra.mxu0 0
        %2747 = vmatprep.subr.bf16.mxu0 0
        %2748 = vmatpush2.bf16.msra.mxu0 0
        %2749 = vmatprep.subr.bf16.mxu0 0
        %2750 = vmatpush2.bf16.msra.mxu0 0
        %2751 = vmatprep.subr.bf16.mxu0 0
        %2752 = vmatpush2.bf16.msra.mxu0 0
        %2753 = vmatprep.subr.bf16.mxu0 0
        %2754 = vmatpush2.bf16.msra.mxu0 0
        %2755 = vmatprep.subr.bf16.mxu0 0
        %2756 = vmatpush2.bf16.msra.mxu0 0
        %2757 = vmatprep.subr.bf16.mxu0 0
        %2758 = vmatpush2.bf16.msra.mxu0 0
        %2759 = vmatprep.subr.bf16.mxu0 0
        %2760 = vmatpush2.bf16.msra.mxu0 0
        %2761 = vmatprep.mubr.bf16.mxu0 0
        %2762 = vmatmul.mubr.bf16.gmra.mxu0 %v2174
        %v2763 = vpop.f32.mrf.mxu0
        %v2764 = vadd.f32 0.0, %v2763
        %v2765 = vpop.f32.mrf.mxu0
        %v2766 = vpop.f32.mrf.mxu0
        %v2767 = vadd.f32 0.0, %v2766
        %v2768 = vpop.f32.mrf.mxu0
        %2769 = vmatprep.mubr.bf16.mxu0 0
        %2770 = vmatmul.mubr.bf16.gmra.mxu0 %v2175
        %v2771 = vpop.f32.mrf.mxu0
        %v2772 = vadd.f32 0.0, %v2771
        %v2773 = vpop.f32.mrf.mxu0
        %v2774 = vpop.f32.mrf.mxu0
        %v2775 = vadd.f32 0.0, %v2774
        %v2776 = vpop.f32.mrf.mxu0
        %2777 = vmatprep.mubr.bf16.mxu0 0
        %2778 = vmatmul.mubr.bf16.gmra.mxu0 %v2176
        %v2779 = vpop.f32.mrf.mxu0
        %v2780 = vadd.f32 0.0, %v2779
        %v2781 = vpop.f32.mrf.mxu0
        %v2782 = vpop.f32.mrf.mxu0
        %v2783 = vadd.f32 0.0, %v2782
        %v2784 = vpop.f32.mrf.mxu0
        %2785 = vmatprep.mubr.bf16.mxu0 0
        %2786 = vmatmul.mubr.bf16.gmra.mxu0 %v2177
        %v2787 = vpop.f32.mrf.mxu0
        %v2788 = vadd.f32 0.0, %v2787
        %v2789 = vpop.f32.mrf.mxu0
        %v2790 = vpop.f32.mrf.mxu0
        %v2791 = vadd.f32 0.0, %v2790
        %v2792 = vpop.f32.mrf.mxu0
        %2793 = vmatprep.mubr.bf16.mxu0 0
        %2794 = vmatmul.mubr.bf16.gmra.mxu0 %v2178
        %v2795 = vpop.f32.mrf.mxu0
        %v2796 = vadd.f32 0.0, %v2795
        %v2797 = vpop.f32.mrf.mxu0
        %v2798 = vpop.f32.mrf.mxu0
        %v2799 = vadd.f32 0.0, %v2798
        %v2800 = vpop.f32.mrf.mxu0
        %2801 = vmatprep.mubr.bf16.mxu0 0
        %2802 = vmatmul.mubr.bf16.gmra.mxu0 %v2179
        %v2803 = vpop.f32.mrf.mxu0
        %v2804 = vadd.f32 0.0, %v2803
        %v2805 = vpop.f32.mrf.mxu0
        %v2806 = vpop.f32.mrf.mxu0
        %v2807 = vadd.f32 0.0, %v2806
        %v2808 = vpop.f32.mrf.mxu0
        %2809 = vmatprep.mubr.bf16.mxu0 0
        %2810 = vmatmul.mubr.bf16.gmra.mxu0 %v2180
        %v2811 = vpop.f32.mrf.mxu0
        %v2812 = vadd.f32 0.0, %v2811
        %v2813 = vpop.f32.mrf.mxu0
        %v2814 = vpop.f32.mrf.mxu0
        %v2815 = vadd.f32 0.0, %v2814
        %v2816 = vpop.f32.mrf.mxu0
        %2817 = vmatprep.mubr.bf16.mxu0 0
        %2818 = vmatmul.mubr.bf16.gmra.mxu0 %v2181
        %v2819 = vpop.f32.mrf.mxu0
        %v2820 = vadd.f32 0.0, %v2819
        %v2821 = vpop.f32.mrf.mxu0
        %v2822 = vpop.f32.mrf.mxu0
        %v2823 = vadd.f32 0.0, %v2822
        %v2824 = vpop.f32.mrf.mxu0
        %2825 = vdwg.mxu0
        %v2826 = vrcp.pop %v2023
        %v2827 = vrcp.pop %v2025
        %v2828 = vrcp.pop %v2027
        %v2829 = vrcp.pop %v2029
        %v2830 = vrcp.pop %v2031
        %v2831 = vrcp.pop %v2033
        %v2832 = vrcp.pop %v2035
        %v2833 = vrcp.pop %v2037
        %v2834 = vrcp.pop %v2039
        %v2835 = vrcp.pop %v2041
        %v2836 = vrcp.pop %v2043
        %v2837 = vrcp.pop %v2045
        %v2838 = vrcp.pop %v2047
        %v2839 = vrcp.pop %v2049
        %v2840 = vrcp.pop %v2051
        %v2841 = vrcp.pop %v2053
        %v2842 = vrcp.pop %v2055
        %v2843 = vrcp.pop %v2057
        %v2844 = vrcp.pop %v2059
        %v2845 = vrcp.pop %v2061
        %v2846 = vrcp.pop %v2063
        %v2847 = vrcp.pop %v2065
        %v2848 = vrcp.pop %v2067
        %v2849 = vrcp.pop %v2069
        %v2850 = vrcp.pop %v2071
        %v2851 = vrcp.pop %v2073
        %v2852 = vrcp.pop %v2075
        %v2853 = vrcp.pop %v2077
        %v2854 = vrcp.pop %v2079
        %v2855 = vrcp.pop %v2081
        %v2856 = vrcp.pop %v2083
        %v2857 = vrcp.pop %v2085
        %v2858 = vrcp.pop %v2087
        %v2859 = vrcp.pop %v2089
        %v2860 = vrcp.pop %v2091
        %v2861 = vrcp.pop %v2093
        %v2862 = vrcp.pop %v2095
        %v2863 = vrcp.pop %v2097
        %v2864 = vrcp.pop %v2099
        %v2865 = vrcp.pop %v2101
        %v2866 = vrcp.pop %v2103
        %v2867 = vrcp.pop %v2105
        %v2868 = vrcp.pop %v2107
        %v2869 = vrcp.pop %v2109
        %v2870 = vrcp.pop %v2111
        %v2871 = vrcp.pop %v2113
        %v2872 = vrcp.pop %v2115
        %v2873 = vrcp.pop %v2117
        %v2874 = vrcp.pop %v2119
        %v2875 = vrcp.pop %v2121
        %v2876 = vrcp.pop %v2123
        %v2877 = vrcp.pop %v2125
        %v2878 = vrcp.pop %v2127
        %v2879 = vrcp.pop %v2129
        %v2880 = vrcp.pop %v2131
        %v2881 = vrcp.pop %v2133
        %v2882 = vrcp.pop %v2135
        %v2883 = vrcp.pop %v2137
        %v2884 = vrcp.pop %v2139
        %v2885 = vrcp.pop %v2141
        %v2886 = vrcp.pop %v2143
        %v2887 = vrcp.pop %v2145
        %v2888 = vrcp.pop %v2147
        %v2889 = vrcp.pop %v2149
        %v2890 = vmul.f32 %v2329, %v2826
        %v2891 = vmul.f32 %v2332, %v2827
        %v2892 = vmul.f32 %v2337, %v2828
        %v2893 = vmul.f32 %v2340, %v2829
        %v2894 = vmul.f32 %v2345, %v2830
        %v2895 = vmul.f32 %v2348, %v2831
        %v2896 = vmul.f32 %v2353, %v2832
        %v2897 = vmul.f32 %v2356, %v2833
        %v2898 = vmul.f32 %v2361, %v2834
        %v2899 = vmul.f32 %v2364, %v2835
        %v2900 = vmul.f32 %v2369, %v2836
        %v2901 = vmul.f32 %v2372, %v2837
        %v2902 = vmul.f32 %v2377, %v2838
        %v2903 = vmul.f32 %v2380, %v2839
        %v2904 = vmul.f32 %v2385, %v2840
        %v2905 = vmul.f32 %v2388, %v2841
        %v2906 = vmul.f32 %v2474, %v2842
        %v2907 = vmul.f32 %v2477, %v2843
        %v2908 = vmul.f32 %v2482, %v2844
        %v2909 = vmul.f32 %v2485, %v2845
        %v2910 = vmul.f32 %v2490, %v2846
        %v2911 = vmul.f32 %v2493, %v2847
        %v2912 = vmul.f32 %v2498, %v2848
        %v2913 = vmul.f32 %v2501, %v2849
        %v2914 = vmul.f32 %v2506, %v2850
        %v2915 = vmul.f32 %v2509, %v2851
        %v2916 = vmul.f32 %v2514, %v2852
        %v2917 = vmul.f32 %v2517, %v2853
        %v2918 = vmul.f32 %v2522, %v2854
        %v2919 = vmul.f32 %v2525, %v2855
        %v2920 = vmul.f32 %v2530, %v2856
        %v2921 = vmul.f32 %v2533, %v2857
        %v2922 = vmul.f32 %v2619, %v2858
        %v2923 = vmul.f32 %v2622, %v2859
        %v2924 = vmul.f32 %v2627, %v2860
        %v2925 = vmul.f32 %v2630, %v2861
        %v2926 = vmul.f32 %v2635, %v2862
        %v2927 = vmul.f32 %v2638, %v2863
        %v2928 = vmul.f32 %v2643, %v2864
        %v2929 = vmul.f32 %v2646, %v2865
        %v2930 = vmul.f32 %v2651, %v2866
        %v2931 = vmul.f32 %v2654, %v2867
        %v2932 = vmul.f32 %v2659, %v2868
        %v2933 = vmul.f32 %v2662, %v2869
        %v2934 = vmul.f32 %v2667, %v2870
        %v2935 = vmul.f32 %v2670, %v2871
        %v2936 = vmul.f32 %v2675, %v2872
        %v2937 = vmul.f32 %v2678, %v2873
        %v2938 = vmul.f32 %v2764, %v2874
        %v2939 = vmul.f32 %v2767, %v2875
        %v2940 = vmul.f32 %v2772, %v2876
        %v2941 = vmul.f32 %v2775, %v2877
        %v2942 = vmul.f32 %v2780, %v2878
        %v2943 = vmul.f32 %v2783, %v2879
        %v2944 = vmul.f32 %v2788, %v2880
        %v2945 = vmul.f32 %v2791, %v2881
        %v2946 = vmul.f32 %v2796, %v2882
        %v2947 = vmul.f32 %v2799, %v2883
        %v2948 = vmul.f32 %v2804, %v2884
        %v2949 = vmul.f32 %v2807, %v2885
        %v2950 = vmul.f32 %v2812, %v2886
        %v2951 = vmul.f32 %v2815, %v2887
        %v2952 = vmul.f32 %v2820, %v2888
        %v2953 = vmul.f32 %v2823, %v2889
        %v2954 = vadd.f32 %v738, %v2890
        %v2955 = vadd.f32 %v739, %v2891
        %v2956 = vadd.f32 %v740, %v2892
        %v2957 = vadd.f32 %v741, %v2893
        %v2958 = vadd.f32 %v742, %v2894
        %v2959 = vadd.f32 %v743, %v2895
        %v2960 = vadd.f32 %v744, %v2896
        %v2961 = vadd.f32 %v745, %v2897
        %v2962 = vadd.f32 %v746, %v2898
        %v2963 = vadd.f32 %v747, %v2899
        %v2964 = vadd.f32 %v748, %v2900
        %v2965 = vadd.f32 %v749, %v2901
        %v2966 = vadd.f32 %v750, %v2902
        %v2967 = vadd.f32 %v751, %v2903
        %v2968 = vadd.f32 %v752, %v2904
        %v2969 = vadd.f32 %v753, %v2905
        %v2970 = vadd.f32 %v754, %v2906
        %v2971 = vadd.f32 %v755, %v2907
        %v2972 = vadd.f32 %v756, %v2908
        %v2973 = vadd.f32 %v757, %v2909
        %v2974 = vadd.f32 %v758, %v2910
        %v2975 = vadd.f32 %v759, %v2911
        %v2976 = vadd.f32 %v760, %v2912
        %v2977 = vadd.f32 %v761, %v2913
        %v2978 = vadd.f32 %v762, %v2914
        %v2979 = vadd.f32 %v763, %v2915
        %v2980 = vadd.f32 %v764, %v2916
        %v2981 = vadd.f32 %v765, %v2917
        %v2982 = vadd.f32 %v766, %v2918
        %v2983 = vadd.f32 %v767, %v2919
        %v2984 = vadd.f32 %v768, %v2920
        %v2985 = vadd.f32 %v769, %v2921
        %v2986 = vadd.f32 %v770, %v2922
        %v2987 = vadd.f32 %v771, %v2923
        %v2988 = vadd.f32 %v772, %v2924
        %v2989 = vadd.f32 %v773, %v2925
        %v2990 = vadd.f32 %v774, %v2926
        %v2991 = vadd.f32 %v775, %v2927
        %v2992 = vadd.f32 %v776, %v2928
        %v2993 = vadd.f32 %v777, %v2929
        %v2994 = vadd.f32 %v778, %v2930
        %v2995 = vadd.f32 %v779, %v2931
        %v2996 = vadd.f32 %v780, %v2932
        %v2997 = vadd.f32 %v781, %v2933
        %v2998 = vadd.f32 %v782, %v2934
        %v2999 = vadd.f32 %v783, %v2935
        %v3000 = vadd.f32 %v784, %v2936
        %v3001 = vadd.f32 %v785, %v2937
        %v3002 = vadd.f32 %v786, %v2938
        %v3003 = vadd.f32 %v787, %v2939
        %v3004 = vadd.f32 %v788, %v2940
        %v3005 = vadd.f32 %v789, %v2941
        %v3006 = vadd.f32 %v790, %v2942
        %v3007 = vadd.f32 %v791, %v2943
        %v3008 = vadd.f32 %v792, %v2944
        %v3009 = vadd.f32 %v793, %v2945
        %v3010 = vadd.f32 %v794, %v2946
        %v3011 = vadd.f32 %v795, %v2947
        %v3012 = vadd.f32 %v796, %v2948
        %v3013 = vadd.f32 %v797, %v2949
        %v3014 = vadd.f32 %v798, %v2950
        %v3015 = vadd.f32 %v799, %v2951
        %v3016 = vadd.f32 %v800, %v2952
        %v3017 = vadd.f32 %v801, %v2953
        %3018 = vst [vmem:[#allocation2] sm:$0xff] %v2954
        %3019 = vst [vmem:[#allocation2 + $0x8] sm:$0xff] %v2955
        %3020 = vst [vmem:[#allocation2 + $0x10] sm:$0xff] %v2956
        %3021 = vst [vmem:[#allocation2 + $0x18] sm:$0xff] %v2957
        %3022 = vst [vmem:[#allocation2 + $0x20] sm:$0xff] %v2958
        %3023 = vst [vmem:[#allocation2 + $0x28] sm:$0xff] %v2959
        %3024 = vst [vmem:[#allocation2 + $0x30] sm:$0xff] %v2960
        %3025 = vst [vmem:[#allocation2 + $0x38] sm:$0xff] %v2961
        %3026 = vst [vmem:[#allocation2 + $0x40] sm:$0xff] %v2962
        %3027 = vst [vmem:[#allocation2 + $0x48] sm:$0xff] %v2963
        %3028 = vst [vmem:[#allocation2 + $0x50] sm:$0xff] %v2964
        %3029 = vst [vmem:[#allocation2 + $0x58] sm:$0xff] %v2965
        %3030 = vst [vmem:[#allocation2 + $0x60] sm:$0xff] %v2966
        %3031 = vst [vmem:[#allocation2 + $0x68] sm:$0xff] %v2967
        %3032 = vst [vmem:[#allocation2 + $0x70] sm:$0xff] %v2968
        %3033 = vst [vmem:[#allocation2 + $0x78] sm:$0xff] %v2969
        %3034 = vst [vmem:[#allocation2 + $0x80] sm:$0xff] %v2970
        %3035 = vst [vmem:[#allocation2 + $0x88] sm:$0xff] %v2971
        %3036 = vst [vmem:[#allocation2 + $0x90] sm:$0xff] %v2972
        %3037 = vst [vmem:[#allocation2 + $0x98] sm:$0xff] %v2973
        %3038 = vst [vmem:[#allocation2 + $0xa0] sm:$0xff] %v2974
        %3039 = vst [vmem:[#allocation2 + $0xa8] sm:$0xff] %v2975
        %3040 = vst [vmem:[#allocation2 + $0xb0] sm:$0xff] %v2976
        %3041 = vst [vmem:[#allocation2 + $0xb8] sm:$0xff] %v2977
        %3042 = vst [vmem:[#allocation2 + $0xc0] sm:$0xff] %v2978
        %3043 = vst [vmem:[#allocation2 + $0xc8] sm:$0xff] %v2979
        %3044 = vst [vmem:[#allocation2 + $0xd0] sm:$0xff] %v2980
        %3045 = vst [vmem:[#allocation2 + $0xd8] sm:$0xff] %v2981
        %3046 = vst [vmem:[#allocation2 + $0xe0] sm:$0xff] %v2982
        %3047 = vst [vmem:[#allocation2 + $0xe8] sm:$0xff] %v2983
        %3048 = vst [vmem:[#allocation2 + $0xf0] sm:$0xff] %v2984
        %3049 = vst [vmem:[#allocation2 + $0xf8] sm:$0xff] %v2985
        %3050 = vst [vmem:[#allocation2 + $0x100] sm:$0xff] %v2986
        %3051 = vst [vmem:[#allocation2 + $0x108] sm:$0xff] %v2987
        %3052 = vst [vmem:[#allocation2 + $0x110] sm:$0xff] %v2988
        %3053 = vst [vmem:[#allocation2 + $0x118] sm:$0xff] %v2989
        %3054 = vst [vmem:[#allocation2 + $0x120] sm:$0xff] %v2990
        %3055 = vst [vmem:[#allocation2 + $0x128] sm:$0xff] %v2991
        %3056 = vst [vmem:[#allocation2 + $0x130] sm:$0xff] %v2992
        %3057 = vst [vmem:[#allocation2 + $0x138] sm:$0xff] %v2993
        %3058 = vst [vmem:[#allocation2 + $0x140] sm:$0xff] %v2994
        %3059 = vst [vmem:[#allocation2 + $0x148] sm:$0xff] %v2995
        %3060 = vst [vmem:[#allocation2 + $0x150] sm:$0xff] %v2996
        %3061 = vst [vmem:[#allocation2 + $0x158] sm:$0xff] %v2997
        %3062 = vst [vmem:[#allocation2 + $0x160] sm:$0xff] %v2998
        %3063 = vst [vmem:[#allocation2 + $0x168] sm:$0xff] %v2999
        %3064 = vst [vmem:[#allocation2 + $0x170] sm:$0xff] %v3000
        %3065 = vst [vmem:[#allocation2 + $0x178] sm:$0xff] %v3001
        %3066 = vst [vmem:[#allocation2 + $0x180] sm:$0xff] %v3002
        %3067 = vst [vmem:[#allocation2 + $0x188] sm:$0xff] %v3003
        %3068 = vst [vmem:[#allocation2 + $0x190] sm:$0xff] %v3004
        %3069 = vst [vmem:[#allocation2 + $0x198] sm:$0xff] %v3005
        %3070 = vst [vmem:[#allocation2 + $0x1a0] sm:$0xff] %v3006
        %3071 = vst [vmem:[#allocation2 + $0x1a8] sm:$0xff] %v3007
        %3072 = vst [vmem:[#allocation2 + $0x1b0] sm:$0xff] %v3008
        %3073 = vst [vmem:[#allocation2 + $0x1b8] sm:$0xff] %v3009
        %3074 = vst [vmem:[#allocation2 + $0x1c0] sm:$0xff] %v3010
        %3075 = vst [vmem:[#allocation2 + $0x1c8] sm:$0xff] %v3011
        %3076 = vst [vmem:[#allocation2 + $0x1d0] sm:$0xff] %v3012
        %3077 = vst [vmem:[#allocation2 + $0x1d8] sm:$0xff] %v3013
        %3078 = vst [vmem:[#allocation2 + $0x1e0] sm:$0xff] %v3014
        %3079 = vst [vmem:[#allocation2 + $0x1e8] sm:$0xff] %v3015
        %3080 = vst [vmem:[#allocation2 + $0x1f0] sm:$0xff] %v3016
        %3081 = vst [vmem:[#allocation2 + $0x1f8] sm:$0xff] %v3017
        // Predicated region
        $region65: #{tpu_custom_call.1} parent=39 // pred_check
          %p3082 = pneg %p606
        $region66: #{tpu_custom_call.1} parent=39 // pred_check_branch
          %3084 = sbr.rel (%p3082) target = $region68
        $region67: #{tpu_custom_call.1} parent=39 // pred_region
          %v3085 = vld [vmem:[#allocation2] sm:$0xff]
          %v3086 = vld [vmem:[#allocation2 + $0x8] sm:$0xff]
          %v3087 = vld [vmem:[#allocation2 + $0x10] sm:$0xff]
          %v3088 = vld [vmem:[#allocation2 + $0x18] sm:$0xff]
          %v3089 = vld [vmem:[#allocation2 + $0x20] sm:$0xff]
          %v3090 = vld [vmem:[#allocation2 + $0x28] sm:$0xff]
          %v3091 = vld [vmem:[#allocation2 + $0x30] sm:$0xff]
          %v3092 = vld [vmem:[#allocation2 + $0x38] sm:$0xff]
          %v3093 = vld [vmem:[#allocation2 + $0x40] sm:$0xff]
          %v3094 = vld [vmem:[#allocation2 + $0x48] sm:$0xff]
          %v3095 = vld [vmem:[#allocation2 + $0x50] sm:$0xff]
          %v3096 = vld [vmem:[#allocation2 + $0x58] sm:$0xff]
          %v3097 = vld [vmem:[#allocation2 + $0x60] sm:$0xff]
          %v3098 = vld [vmem:[#allocation2 + $0x68] sm:$0xff]
          %v3099 = vld [vmem:[#allocation2 + $0x70] sm:$0xff]
          %v3100 = vld [vmem:[#allocation2 + $0x78] sm:$0xff]
          %v3101 = vld [vmem:[#allocation2 + $0x80] sm:$0xff]
          %v3102 = vld [vmem:[#allocation2 + $0x88] sm:$0xff]
          %v3103 = vld [vmem:[#allocation2 + $0x90] sm:$0xff]
          %v3104 = vld [vmem:[#allocation2 + $0x98] sm:$0xff]
          %v3105 = vld [vmem:[#allocation2 + $0xa0] sm:$0xff]
          %v3106 = vld [vmem:[#allocation2 + $0xa8] sm:$0xff]
          %v3107 = vld [vmem:[#allocation2 + $0xb0] sm:$0xff]
          %v3108 = vld [vmem:[#allocation2 + $0xb8] sm:$0xff]
          %v3109 = vld [vmem:[#allocation2 + $0xc0] sm:$0xff]
          %v3110 = vld [vmem:[#allocation2 + $0xc8] sm:$0xff]
          %v3111 = vld [vmem:[#allocation2 + $0xd0] sm:$0xff]
          %v3112 = vld [vmem:[#allocation2 + $0xd8] sm:$0xff]
          %v3113 = vld [vmem:[#allocation2 + $0xe0] sm:$0xff]
          %v3114 = vld [vmem:[#allocation2 + $0xe8] sm:$0xff]
          %v3115 = vld [vmem:[#allocation2 + $0xf0] sm:$0xff]
          %v3116 = vld [vmem:[#allocation2 + $0xf8] sm:$0xff]
          %v3117 = vld [vmem:[#allocation2 + $0x100] sm:$0xff]
          %v3118 = vld [vmem:[#allocation2 + $0x108] sm:$0xff]
          %v3119 = vld [vmem:[#allocation2 + $0x110] sm:$0xff]
          %v3120 = vld [vmem:[#allocation2 + $0x118] sm:$0xff]
          %v3121 = vld [vmem:[#allocation2 + $0x120] sm:$0xff]
          %v3122 = vld [vmem:[#allocation2 + $0x128] sm:$0xff]
          %v3123 = vld [vmem:[#allocation2 + $0x130] sm:$0xff]
          %v3124 = vld [vmem:[#allocation2 + $0x138] sm:$0xff]
          %v3125 = vld [vmem:[#allocation2 + $0x140] sm:$0xff]
          %v3126 = vld [vmem:[#allocation2 + $0x148] sm:$0xff]
          %v3127 = vld [vmem:[#allocation2 + $0x150] sm:$0xff]
          %v3128 = vld [vmem:[#allocation2 + $0x158] sm:$0xff]
          %v3129 = vld [vmem:[#allocation2 + $0x160] sm:$0xff]
          %v3130 = vld [vmem:[#allocation2 + $0x168] sm:$0xff]
          %v3131 = vld [vmem:[#allocation2 + $0x170] sm:$0xff]
          %v3132 = vld [vmem:[#allocation2 + $0x178] sm:$0xff]
          %v3133 = vld [vmem:[#allocation2 + $0x180] sm:$0xff]
          %v3134 = vld [vmem:[#allocation2 + $0x188] sm:$0xff]
          %v3135 = vld [vmem:[#allocation2 + $0x190] sm:$0xff]
          %v3136 = vld [vmem:[#allocation2 + $0x198] sm:$0xff]
          %v3137 = vld [vmem:[#allocation2 + $0x1a0] sm:$0xff]
          %v3138 = vld [vmem:[#allocation2 + $0x1a8] sm:$0xff]
          %v3139 = vld [vmem:[#allocation2 + $0x1b0] sm:$0xff]
          %v3140 = vld [vmem:[#allocation2 + $0x1b8] sm:$0xff]
          %v3141 = vld [vmem:[#allocation2 + $0x1c0] sm:$0xff]
          %v3142 = vld [vmem:[#allocation2 + $0x1c8] sm:$0xff]
          %v3143 = vld [vmem:[#allocation2 + $0x1d0] sm:$0xff]
          %v3144 = vld [vmem:[#allocation2 + $0x1d8] sm:$0xff]
          %v3145 = vld [vmem:[#allocation2 + $0x1e0] sm:$0xff]
          %v3146 = vld [vmem:[#allocation2 + $0x1e8] sm:$0xff]
          %v3147 = vld [vmem:[#allocation2 + $0x1f0] sm:$0xff]
          %v3148 = vld [vmem:[#allocation2 + $0x1f8] sm:$0xff]
          %v3149 = vld [vmem:[%s531] sm:$0xf]
          %v3150 = vld [vmem:[%s531 + $0x4] sm:$0xf]
          %v3151 = vld [vmem:[%s531 + $0x8] sm:$0xf]
          %v3152 = vld [vmem:[%s531 + $0xc] sm:$0xf]
          %v3153 = vld [vmem:[%s531 + $0x10] sm:$0xf]
          %v3154 = vld [vmem:[%s531 + $0x14] sm:$0xf]
          %v3155 = vld [vmem:[%s531 + $0x18] sm:$0xf]
          %v3156 = vld [vmem:[%s531 + $0x1c] sm:$0xf]
          %v3157 = vld [vmem:[%s531 + $0x20] sm:$0xf]
          %v3158 = vld [vmem:[%s531 + $0x24] sm:$0xf]
          %v3159 = vld [vmem:[%s531 + $0x28] sm:$0xf]
          %v3160 = vld [vmem:[%s531 + $0x2c] sm:$0xf]
          %v3161 = vld [vmem:[%s531 + $0x30] sm:$0xf]
          %v3162 = vld [vmem:[%s531 + $0x34] sm:$0xf]
          %v3163 = vld [vmem:[%s531 + $0x38] sm:$0xf]
          %v3164 = vld [vmem:[%s531 + $0x3c] sm:$0xf]
          %v3165 = vld [vmem:[%s531 + $0x40] sm:$0xf]
          %v3166 = vld [vmem:[%s531 + $0x44] sm:$0xf]
          %v3167 = vld [vmem:[%s531 + $0x48] sm:$0xf]
          %v3168 = vld [vmem:[%s531 + $0x4c] sm:$0xf]
          %v3169 = vld [vmem:[%s531 + $0x50] sm:$0xf]
          %v3170 = vld [vmem:[%s531 + $0x54] sm:$0xf]
          %v3171 = vld [vmem:[%s531 + $0x58] sm:$0xf]
          %v3172 = vld [vmem:[%s531 + $0x5c] sm:$0xf]
          %v3173 = vld [vmem:[%s531 + $0x60] sm:$0xf]
          %v3174 = vld [vmem:[%s531 + $0x64] sm:$0xf]
          %v3175 = vld [vmem:[%s531 + $0x68] sm:$0xf]
          %v3176 = vld [vmem:[%s531 + $0x6c] sm:$0xf]
          %v3177 = vld [vmem:[%s531 + $0x70] sm:$0xf]
          %v3178 = vld [vmem:[%s531 + $0x74] sm:$0xf]
          %v3179 = vld [vmem:[%s531 + $0x78] sm:$0xf]
          %v3180 = vld [vmem:[%s531 + $0x7c] sm:$0xf]
          %v3181 = vld [vmem:[%s531 + $0x80] sm:$0xf]
          %v3182 = vld [vmem:[%s531 + $0x84] sm:$0xf]
          %v3183 = vld [vmem:[%s531 + $0x88] sm:$0xf]
          %v3184 = vld [vmem:[%s531 + $0x8c] sm:$0xf]
          %v3185 = vld [vmem:[%s531 + $0x90] sm:$0xf]
          %v3186 = vld [vmem:[%s531 + $0x94] sm:$0xf]
          %v3187 = vld [vmem:[%s531 + $0x98] sm:$0xf]
          %v3188 = vld [vmem:[%s531 + $0x9c] sm:$0xf]
          %v3189 = vld [vmem:[%s531 + $0xa0] sm:$0xf]
          %v3190 = vld [vmem:[%s531 + $0xa4] sm:$0xf]
          %v3191 = vld [vmem:[%s531 + $0xa8] sm:$0xf]
          %v3192 = vld [vmem:[%s531 + $0xac] sm:$0xf]
          %v3193 = vld [vmem:[%s531 + $0xb0] sm:$0xf]
          %v3194 = vld [vmem:[%s531 + $0xb4] sm:$0xf]
          %v3195 = vld [vmem:[%s531 + $0xb8] sm:$0xf]
          %v3196 = vld [vmem:[%s531 + $0xbc] sm:$0xf]
          %v3197 = vld [vmem:[%s531 + $0xc0] sm:$0xf]
          %v3198 = vld [vmem:[%s531 + $0xc4] sm:$0xf]
          %v3199 = vld [vmem:[%s531 + $0xc8] sm:$0xf]
          %v3200 = vld [vmem:[%s531 + $0xcc] sm:$0xf]
          %v3201 = vld [vmem:[%s531 + $0xd0] sm:$0xf]
          %v3202 = vld [vmem:[%s531 + $0xd4] sm:$0xf]
          %v3203 = vld [vmem:[%s531 + $0xd8] sm:$0xf]
          %v3204 = vld [vmem:[%s531 + $0xdc] sm:$0xf]
          %v3205 = vld [vmem:[%s531 + $0xe0] sm:$0xf]
          %v3206 = vld [vmem:[%s531 + $0xe4] sm:$0xf]
          %v3207 = vld [vmem:[%s531 + $0xe8] sm:$0xf]
          %v3208 = vld [vmem:[%s531 + $0xec] sm:$0xf]
          %v3209 = vld [vmem:[%s531 + $0xf0] sm:$0xf]
          %v3210 = vld [vmem:[%s531 + $0xf4] sm:$0xf]
          %v3211 = vld [vmem:[%s531 + $0xf8] sm:$0xf]
          %v3212 = vld [vmem:[%s531 + $0xfc] sm:$0xf]
          %v3229 = vunpack.c.l.b16 %v3149
          %v3230 = vunpack.c.l.b16 %v3150
          %v3231 = vunpack.c.l.b16 %v3151
          %v3232 = vunpack.c.l.b16 %v3152
          %v3233 = vunpack.c.l.b16 %v3153
          %v3234 = vunpack.c.l.b16 %v3154
          %v3235 = vunpack.c.l.b16 %v3155
          %v3236 = vunpack.c.l.b16 %v3156
          %v3237 = vunpack.c.l.b16 %v3157
          %v3238 = vunpack.c.l.b16 %v3158
          %v3239 = vunpack.c.l.b16 %v3159
          %v3240 = vunpack.c.l.b16 %v3160
          %v3241 = vunpack.c.l.b16 %v3161
          %v3242 = vunpack.c.l.b16 %v3162
          %v3243 = vunpack.c.l.b16 %v3163
          %v3244 = vunpack.c.l.b16 %v3164
          %v3245 = vpack.c.b16 %v3230, %v3229
          %v3246 = vpack.c.b16 %v3232, %v3231
          %v3247 = vpack.c.b16 %v3234, %v3233
          %v3248 = vpack.c.b16 %v3236, %v3235
          %v3249 = vpack.c.b16 %v3238, %v3237
          %v3250 = vpack.c.b16 %v3240, %v3239
          %v3251 = vpack.c.b16 %v3242, %v3241
          %v3252 = vpack.c.b16 %v3244, %v3243
          %3261 = vmatprep.subr.bf16.mxu0 0
          %3262 = vmatpush1.bf16.xpose.msra.mxu0 %v3252
          %3263 = vmatprep.subr.bf16.mxu0 0
          %3264 = vmatpush1.bf16.xpose.msra.mxu0 %v3251
          %3265 = vmatprep.subr.bf16.mxu0 0
          %3266 = vmatpush1.bf16.xpose.msra.mxu0 %v3250
          %3267 = vmatprep.subr.bf16.mxu0 0
          %3268 = vmatpush1.bf16.xpose.msra.mxu0 %v3249
          %3269 = vmatprep.subr.bf16.mxu0 0
          %3270 = vmatpush1.bf16.xpose.msra.mxu0 %v3248
          %3271 = vmatprep.subr.bf16.mxu0 0
          %3272 = vmatpush1.bf16.xpose.msra.mxu0 %v3247
          %3273 = vmatprep.subr.bf16.mxu0 0
          %3274 = vmatpush1.bf16.xpose.msra.mxu0 %v3246
          %3275 = vmatprep.subr.bf16.mxu0 0
          %3276 = vmatpush1.bf16.xpose.msra.mxu0 %v3245
          %3277 = vmatprep.subr.bf16.mxu0 0
          %3278 = vmatpush2.bf16.xpose.msra.mxu0 0
          %3279 = vmatprep.subr.bf16.mxu0 0
          %3280 = vmatpush2.bf16.xpose.msra.mxu0 0
          %3281 = vmatprep.subr.bf16.mxu0 0
          %3282 = vmatpush2.bf16.xpose.msra.mxu0 0
          %3283 = vmatprep.subr.bf16.mxu0 0
          %3284 = vmatpush2.bf16.xpose.msra.mxu0 0
          %3285 = vmatprep.subr.bf16.mxu0 0
          %3286 = vmatpush2.bf16.xpose.msra.mxu0 0
          %3287 = vmatprep.subr.bf16.mxu0 0
          %3288 = vmatpush2.bf16.xpose.msra.mxu0 0
          %3289 = vmatprep.subr.bf16.mxu0 0
          %3290 = vmatpush2.bf16.xpose.msra.mxu0 0
          %3291 = vmatprep.subr.bf16.mxu0 0
          %3292 = vmatpush2.bf16.xpose.msra.mxu0 0
          %3293 = vmatprep.mubr.bf16.mxu0 0
          %3294 = vmatmul.mubr.bf16.gmra.mxu0 %v898
          %v3295 = vpop.f32.mrf.mxu0
          %v3296 = vadd.f32 0.0, %v3295
          %v3297 = vpop.f32.mrf.mxu0
          %v3298 = vpop.f32.mrf.mxu0
          %v3299 = vadd.f32 0.0, %v3298
          %v3300 = vpop.f32.mrf.mxu0
          %3301 = vmatprep.mubr.bf16.mxu0 0
          %3302 = vmatmul.mubr.bf16.gmra.mxu0 %v899
          %v3303 = vpop.f32.mrf.mxu0
          %v3304 = vadd.f32 0.0, %v3303
          %v3305 = vpop.f32.mrf.mxu0
          %v3306 = vpop.f32.mrf.mxu0
          %v3307 = vadd.f32 0.0, %v3306
          %v3308 = vpop.f32.mrf.mxu0
          %3309 = vmatprep.mubr.bf16.mxu0 0
          %3310 = vmatmul.mubr.bf16.gmra.mxu0 %v900
          %v3311 = vpop.f32.mrf.mxu0
          %v3312 = vadd.f32 0.0, %v3311
          %v3313 = vpop.f32.mrf.mxu0
          %v3314 = vpop.f32.mrf.mxu0
          %v3315 = vadd.f32 0.0, %v3314
          %v3316 = vpop.f32.mrf.mxu0
          %3317 = vmatprep.mubr.bf16.mxu0 0
          %3318 = vmatmul.mubr.bf16.gmra.mxu0 %v901
          %v3319 = vpop.f32.mrf.mxu0
          %v3320 = vadd.f32 0.0, %v3319
          %v3321 = vpop.f32.mrf.mxu0
          %v3322 = vpop.f32.mrf.mxu0
          %v3323 = vadd.f32 0.0, %v3322
          %v3324 = vpop.f32.mrf.mxu0
          %3325 = vmatprep.mubr.bf16.mxu0 0
          %3326 = vmatmul.mubr.bf16.gmra.mxu0 %v902
          %v3327 = vpop.f32.mrf.mxu0
          %v3328 = vadd.f32 0.0, %v3327
          %v3329 = vpop.f32.mrf.mxu0
          %v3330 = vpop.f32.mrf.mxu0
          %v3331 = vadd.f32 0.0, %v3330
          %v3332 = vpop.f32.mrf.mxu0
          %3333 = vmatprep.mubr.bf16.mxu0 0
          %3334 = vmatmul.mubr.bf16.gmra.mxu0 %v903
          %v3335 = vpop.f32.mrf.mxu0
          %v3336 = vadd.f32 0.0, %v3335
          %v3337 = vpop.f32.mrf.mxu0
          %v3338 = vpop.f32.mrf.mxu0
          %v3339 = vadd.f32 0.0, %v3338
          %v3340 = vpop.f32.mrf.mxu0
          %3341 = vmatprep.mubr.bf16.mxu0 0
          %3342 = vmatmul.mubr.bf16.gmra.mxu0 %v904
          %v3343 = vpop.f32.mrf.mxu0
          %v3344 = vadd.f32 0.0, %v3343
          %v3345 = vpop.f32.mrf.mxu0
          %v3346 = vpop.f32.mrf.mxu0
          %v3347 = vadd.f32 0.0, %v3346
          %v3348 = vpop.f32.mrf.mxu0
          %3349 = vmatprep.mubr.bf16.mxu0 0
          %3350 = vmatmul.mubr.bf16.gmra.mxu0 %v905
          %v3351 = vpop.f32.mrf.mxu0
          %v3352 = vadd.f32 0.0, %v3351
          %v3353 = vpop.f32.mrf.mxu0
          %v3354 = vpop.f32.mrf.mxu0
          %v3355 = vadd.f32 0.0, %v3354
          %v3356 = vpop.f32.mrf.mxu0
          %3357 = vdwg.mxu0
          %v3374 = vunpack.c.l.b16 %v3165
          %v3375 = vunpack.c.l.b16 %v3166
          %v3376 = vunpack.c.l.b16 %v3167
          %v3377 = vunpack.c.l.b16 %v3168
          %v3378 = vunpack.c.l.b16 %v3169
          %v3379 = vunpack.c.l.b16 %v3170
          %v3380 = vunpack.c.l.b16 %v3171
          %v3381 = vunpack.c.l.b16 %v3172
          %v3382 = vunpack.c.l.b16 %v3173
          %v3383 = vunpack.c.l.b16 %v3174
          %v3384 = vunpack.c.l.b16 %v3175
          %v3385 = vunpack.c.l.b16 %v3176
          %v3386 = vunpack.c.l.b16 %v3177
          %v3387 = vunpack.c.l.b16 %v3178
          %v3388 = vunpack.c.l.b16 %v3179
          %v3389 = vunpack.c.l.b16 %v3180
          %v3390 = vpack.c.b16 %v3375, %v3374
          %v3391 = vpack.c.b16 %v3377, %v3376
          %v3392 = vpack.c.b16 %v3379, %v3378
          %v3393 = vpack.c.b16 %v3381, %v3380
          %v3394 = vpack.c.b16 %v3383, %v3382
          %v3395 = vpack.c.b16 %v3385, %v3384
          %v3396 = vpack.c.b16 %v3387, %v3386
          %v3397 = vpack.c.b16 %v3389, %v3388
          %3406 = vmatprep.subr.bf16.mxu0 0
          %3407 = vmatpush1.bf16.xpose.msra.mxu0 %v3397
          %3408 = vmatprep.subr.bf16.mxu0 0
          %3409 = vmatpush1.bf16.xpose.msra.mxu0 %v3396
          %3410 = vmatprep.subr.bf16.mxu0 0
          %3411 = vmatpush1.bf16.xpose.msra.mxu0 %v3395
          %3412 = vmatprep.subr.bf16.mxu0 0
          %3413 = vmatpush1.bf16.xpose.msra.mxu0 %v3394
          %3414 = vmatprep.subr.bf16.mxu0 0
          %3415 = vmatpush1.bf16.xpose.msra.mxu0 %v3393
          %3416 = vmatprep.subr.bf16.mxu0 0
          %3417 = vmatpush1.bf16.xpose.msra.mxu0 %v3392
          %3418 = vmatprep.subr.bf16.mxu0 0
          %3419 = vmatpush1.bf16.xpose.msra.mxu0 %v3391
          %3420 = vmatprep.subr.bf16.mxu0 0
          %3421 = vmatpush1.bf16.xpose.msra.mxu0 %v3390
          %3422 = vmatprep.subr.bf16.mxu0 0
          %3423 = vmatpush2.bf16.xpose.msra.mxu0 0
          %3424 = vmatprep.subr.bf16.mxu0 0
          %3425 = vmatpush2.bf16.xpose.msra.mxu0 0
          %3426 = vmatprep.subr.bf16.mxu0 0
          %3427 = vmatpush2.bf16.xpose.msra.mxu0 0
          %3428 = vmatprep.subr.bf16.mxu0 0
          %3429 = vmatpush2.bf16.xpose.msra.mxu0 0
          %3430 = vmatprep.subr.bf16.mxu0 0
          %3431 = vmatpush2.bf16.xpose.msra.mxu0 0
          %3432 = vmatprep.subr.bf16.mxu0 0
          %3433 = vmatpush2.bf16.xpose.msra.mxu0 0
          %3434 = vmatprep.subr.bf16.mxu0 0
          %3435 = vmatpush2.bf16.xpose.msra.mxu0 0
          %3436 = vmatprep.subr.bf16.mxu0 0
          %3437 = vmatpush2.bf16.xpose.msra.mxu0 0
          %3438 = vmatprep.mubr.bf16.mxu0 0
          %3439 = vmatmul.mubr.bf16.gmra.mxu0 %v1091
          %v3440 = vpop.f32.mrf.mxu0
          %v3441 = vadd.f32 0.0, %v3440
          %v3442 = vpop.f32.mrf.mxu0
          %v3443 = vpop.f32.mrf.mxu0
          %v3444 = vadd.f32 0.0, %v3443
          %v3445 = vpop.f32.mrf.mxu0
          %3446 = vmatprep.mubr.bf16.mxu0 0
          %3447 = vmatmul.mubr.bf16.gmra.mxu0 %v1092
          %v3448 = vpop.f32.mrf.mxu0
          %v3449 = vadd.f32 0.0, %v3448
          %v3450 = vpop.f32.mrf.mxu0
          %v3451 = vpop.f32.mrf.mxu0
          %v3452 = vadd.f32 0.0, %v3451
          %v3453 = vpop.f32.mrf.mxu0
          %3454 = vmatprep.mubr.bf16.mxu0 0
          %3455 = vmatmul.mubr.bf16.gmra.mxu0 %v1093
          %v3456 = vpop.f32.mrf.mxu0
          %v3457 = vadd.f32 0.0, %v3456
          %v3458 = vpop.f32.mrf.mxu0
          %v3459 = vpop.f32.mrf.mxu0
          %v3460 = vadd.f32 0.0, %v3459
          %v3461 = vpop.f32.mrf.mxu0
          %3462 = vmatprep.mubr.bf16.mxu0 0
          %3463 = vmatmul.mubr.bf16.gmra.mxu0 %v1094
          %v3464 = vpop.f32.mrf.mxu0
          %v3465 = vadd.f32 0.0, %v3464
          %v3466 = vpop.f32.mrf.mxu0
          %v3467 = vpop.f32.mrf.mxu0
          %v3468 = vadd.f32 0.0, %v3467
          %v3469 = vpop.f32.mrf.mxu0
          %3470 = vmatprep.mubr.bf16.mxu0 0
          %3471 = vmatmul.mubr.bf16.gmra.mxu0 %v1095
          %v3472 = vpop.f32.mrf.mxu0
          %v3473 = vadd.f32 0.0, %v3472
          %v3474 = vpop.f32.mrf.mxu0
          %v3475 = vpop.f32.mrf.mxu0
          %v3476 = vadd.f32 0.0, %v3475
          %v3477 = vpop.f32.mrf.mxu0
          %3478 = vmatprep.mubr.bf16.mxu0 0
          %3479 = vmatmul.mubr.bf16.gmra.mxu0 %v1096
          %v3480 = vpop.f32.mrf.mxu0
          %v3481 = vadd.f32 0.0, %v3480
          %v3482 = vpop.f32.mrf.mxu0
          %v3483 = vpop.f32.mrf.mxu0
          %v3484 = vadd.f32 0.0, %v3483
          %v3485 = vpop.f32.mrf.mxu0
          %3486 = vmatprep.mubr.bf16.mxu0 0
          %3487 = vmatmul.mubr.bf16.gmra.mxu0 %v1097
          %v3488 = vpop.f32.mrf.mxu0
          %v3489 = vadd.f32 0.0, %v3488
          %v3490 = vpop.f32.mrf.mxu0
          %v3491 = vpop.f32.mrf.mxu0
          %v3492 = vadd.f32 0.0, %v3491
          %v3493 = vpop.f32.mrf.mxu0
          %3494 = vmatprep.mubr.bf16.mxu0 0
          %3495 = vmatmul.mubr.bf16.gmra.mxu0 %v1098
          %v3496 = vpop.f32.mrf.mxu0
          %v3497 = vadd.f32 0.0, %v3496
          %v3498 = vpop.f32.mrf.mxu0
          %v3499 = vpop.f32.mrf.mxu0
          %v3500 = vadd.f32 0.0, %v3499
          %v3501 = vpop.f32.mrf.mxu0
          %3502 = vdwg.mxu0
          %v3519 = vunpack.c.l.b16 %v3181
          %v3520 = vunpack.c.l.b16 %v3182
          %v3521 = vunpack.c.l.b16 %v3183
          %v3522 = vunpack.c.l.b16 %v3184
          %v3523 = vunpack.c.l.b16 %v3185
          %v3524 = vunpack.c.l.b16 %v3186
          %v3525 = vunpack.c.l.b16 %v3187
          %v3526 = vunpack.c.l.b16 %v3188
          %v3527 = vunpack.c.l.b16 %v3189
          %v3528 = vunpack.c.l.b16 %v3190
          %v3529 = vunpack.c.l.b16 %v3191
          %v3530 = vunpack.c.l.b16 %v3192
          %v3531 = vunpack.c.l.b16 %v3193
          %v3532 = vunpack.c.l.b16 %v3194
          %v3533 = vunpack.c.l.b16 %v3195
          %v3534 = vunpack.c.l.b16 %v3196
          %v3535 = vpack.c.b16 %v3520, %v3519
          %v3536 = vpack.c.b16 %v3522, %v3521
          %v3537 = vpack.c.b16 %v3524, %v3523
          %v3538 = vpack.c.b16 %v3526, %v3525
          %v3539 = vpack.c.b16 %v3528, %v3527
          %v3540 = vpack.c.b16 %v3530, %v3529
          %v3541 = vpack.c.b16 %v3532, %v3531
          %v3542 = vpack.c.b16 %v3534, %v3533
          %3551 = vmatprep.subr.bf16.mxu0 0
          %3552 = vmatpush1.bf16.xpose.msra.mxu0 %v3542
          %3553 = vmatprep.subr.bf16.mxu0 0
          %3554 = vmatpush1.bf16.xpose.msra.mxu0 %v3541
          %3555 = vmatprep.subr.bf16.mxu0 0
          %3556 = vmatpush1.bf16.xpose.msra.mxu0 %v3540
          %3557 = vmatprep.subr.bf16.mxu0 0
          %3558 = vmatpush1.bf16.xpose.msra.mxu0 %v3539
          %3559 = vmatprep.subr.bf16.mxu0 0
          %3560 = vmatpush1.bf16.xpose.msra.mxu0 %v3538
          %3561 = vmatprep.subr.bf16.mxu0 0
          %3562 = vmatpush1.bf16.xpose.msra.mxu0 %v3537
          %3563 = vmatprep.subr.bf16.mxu0 0
          %3564 = vmatpush1.bf16.xpose.msra.mxu0 %v3536
          %3565 = vmatprep.subr.bf16.mxu0 0
          %3566 = vmatpush1.bf16.xpose.msra.mxu0 %v3535
          %3567 = vmatprep.subr.bf16.mxu0 0
          %3568 = vmatpush2.bf16.xpose.msra.mxu0 0
          %3569 = vmatprep.subr.bf16.mxu0 0
          %3570 = vmatpush2.bf16.xpose.msra.mxu0 0
          %3571 = vmatprep.subr.bf16.mxu0 0
          %3572 = vmatpush2.bf16.xpose.msra.mxu0 0
          %3573 = vmatprep.subr.bf16.mxu0 0
          %3574 = vmatpush2.bf16.xpose.msra.mxu0 0
          %3575 = vmatprep.subr.bf16.mxu0 0
          %3576 = vmatpush2.bf16.xpose.msra.mxu0 0
          %3577 = vmatprep.subr.bf16.mxu0 0
          %3578 = vmatpush2.bf16.xpose.msra.mxu0 0
          %3579 = vmatprep.subr.bf16.mxu0 0
          %3580 = vmatpush2.bf16.xpose.msra.mxu0 0
          %3581 = vmatprep.subr.bf16.mxu0 0
          %3582 = vmatpush2.bf16.xpose.msra.mxu0 0
          %3583 = vmatprep.mubr.bf16.mxu0 0
          %3584 = vmatmul.mubr.bf16.gmra.mxu0 %v1284
          %v3585 = vpop.f32.mrf.mxu0
          %v3586 = vadd.f32 0.0, %v3585
          %v3587 = vpop.f32.mrf.mxu0
          %v3588 = vpop.f32.mrf.mxu0
          %v3589 = vadd.f32 0.0, %v3588
          %v3590 = vpop.f32.mrf.mxu0
          %3591 = vmatprep.mubr.bf16.mxu0 0
          %3592 = vmatmul.mubr.bf16.gmra.mxu0 %v1285
          %v3593 = vpop.f32.mrf.mxu0
          %v3594 = vadd.f32 0.0, %v3593
          %v3595 = vpop.f32.mrf.mxu0
          %v3596 = vpop.f32.mrf.mxu0
          %v3597 = vadd.f32 0.0, %v3596
          %v3598 = vpop.f32.mrf.mxu0
          %3599 = vmatprep.mubr.bf16.mxu0 0
          %3600 = vmatmul.mubr.bf16.gmra.mxu0 %v1286
          %v3601 = vpop.f32.mrf.mxu0
          %v3602 = vadd.f32 0.0, %v3601
          %v3603 = vpop.f32.mrf.mxu0
          %v3604 = vpop.f32.mrf.mxu0
          %v3605 = vadd.f32 0.0, %v3604
          %v3606 = vpop.f32.mrf.mxu0
          %3607 = vmatprep.mubr.bf16.mxu0 0
          %3608 = vmatmul.mubr.bf16.gmra.mxu0 %v1287
          %v3609 = vpop.f32.mrf.mxu0
          %v3610 = vadd.f32 0.0, %v3609
          %v3611 = vpop.f32.mrf.mxu0
          %v3612 = vpop.f32.mrf.mxu0
          %v3613 = vadd.f32 0.0, %v3612
          %v3614 = vpop.f32.mrf.mxu0
          %3615 = vmatprep.mubr.bf16.mxu0 0
          %3616 = vmatmul.mubr.bf16.gmra.mxu0 %v1288
          %v3617 = vpop.f32.mrf.mxu0
          %v3618 = vadd.f32 0.0, %v3617
          %v3619 = vpop.f32.mrf.mxu0
          %v3620 = vpop.f32.mrf.mxu0
          %v3621 = vadd.f32 0.0, %v3620
          %v3622 = vpop.f32.mrf.mxu0
          %3623 = vmatprep.mubr.bf16.mxu0 0
          %3624 = vmatmul.mubr.bf16.gmra.mxu0 %v1289
          %v3625 = vpop.f32.mrf.mxu0
          %v3626 = vadd.f32 0.0, %v3625
          %v3627 = vpop.f32.mrf.mxu0
          %v3628 = vpop.f32.mrf.mxu0
          %v3629 = vadd.f32 0.0, %v3628
          %v3630 = vpop.f32.mrf.mxu0
          %3631 = vmatprep.mubr.bf16.mxu0 0
          %3632 = vmatmul.mubr.bf16.gmra.mxu0 %v1290
          %v3633 = vpop.f32.mrf.mxu0
          %v3634 = vadd.f32 0.0, %v3633
          %v3635 = vpop.f32.mrf.mxu0
          %v3636 = vpop.f32.mrf.mxu0
          %v3637 = vadd.f32 0.0, %v3636
          %v3638 = vpop.f32.mrf.mxu0
          %3639 = vmatprep.mubr.bf16.mxu0 0
          %3640 = vmatmul.mubr.bf16.gmra.mxu0 %v1291
          %v3641 = vpop.f32.mrf.mxu0
          %v3642 = vadd.f32 0.0, %v3641
          %v3643 = vpop.f32.mrf.mxu0
          %v3644 = vpop.f32.mrf.mxu0
          %v3645 = vadd.f32 0.0, %v3644
          %v3646 = vpop.f32.mrf.mxu0
          %3647 = vdwg.mxu0
          %v3664 = vunpack.c.l.b16 %v3197
          %v3665 = vunpack.c.l.b16 %v3198
          %v3666 = vunpack.c.l.b16 %v3199
          %v3667 = vunpack.c.l.b16 %v3200
          %v3668 = vunpack.c.l.b16 %v3201
          %v3669 = vunpack.c.l.b16 %v3202
          %v3670 = vunpack.c.l.b16 %v3203
          %v3671 = vunpack.c.l.b16 %v3204
          %v3672 = vunpack.c.l.b16 %v3205
          %v3673 = vunpack.c.l.b16 %v3206
          %v3674 = vunpack.c.l.b16 %v3207
          %v3675 = vunpack.c.l.b16 %v3208
          %v3676 = vunpack.c.l.b16 %v3209
          %v3677 = vunpack.c.l.b16 %v3210
          %v3678 = vunpack.c.l.b16 %v3211
          %v3679 = vunpack.c.l.b16 %v3212
          %v3680 = vpack.c.b16 %v3665, %v3664
          %v3681 = vpack.c.b16 %v3667, %v3666
          %v3682 = vpack.c.b16 %v3669, %v3668
          %v3683 = vpack.c.b16 %v3671, %v3670
          %v3684 = vpack.c.b16 %v3673, %v3672
          %v3685 = vpack.c.b16 %v3675, %v3674
          %v3686 = vpack.c.b16 %v3677, %v3676
          %v3687 = vpack.c.b16 %v3679, %v3678
          %3696 = vmatprep.subr.bf16.mxu0 0
          %3697 = vmatpush1.bf16.xpose.msra.mxu0 %v3687
          %3698 = vmatprep.subr.bf16.mxu0 0
          %3699 = vmatpush1.bf16.xpose.msra.mxu0 %v3686
          %3700 = vmatprep.subr.bf16.mxu0 0
          %3701 = vmatpush1.bf16.xpose.msra.mxu0 %v3685
          %3702 = vmatprep.subr.bf16.mxu0 0
          %3703 = vmatpush1.bf16.xpose.msra.mxu0 %v3684
          %3704 = vmatprep.subr.bf16.mxu0 0
          %3705 = vmatpush1.bf16.xpose.msra.mxu0 %v3683
          %3706 = vmatprep.subr.bf16.mxu0 0
          %3707 = vmatpush1.bf16.xpose.msra.mxu0 %v3682
          %3708 = vmatprep.subr.bf16.mxu0 0
          %3709 = vmatpush1.bf16.xpose.msra.mxu0 %v3681
          %3710 = vmatprep.subr.bf16.mxu0 0
          %3711 = vmatpush1.bf16.xpose.msra.mxu0 %v3680
          %3712 = vmatprep.subr.bf16.mxu0 0
          %3713 = vmatpush2.bf16.xpose.msra.mxu0 0
          %3714 = vmatprep.subr.bf16.mxu0 0
          %3715 = vmatpush2.bf16.xpose.msra.mxu0 0
          %3716 = vmatprep.subr.bf16.mxu0 0
          %3717 = vmatpush2.bf16.xpose.msra.mxu0 0
          %3718 = vmatprep.subr.bf16.mxu0 0
          %3719 = vmatpush2.bf16.xpose.msra.mxu0 0
          %3720 = vmatprep.subr.bf16.mxu0 0
          %3721 = vmatpush2.bf16.xpose.msra.mxu0 0
          %3722 = vmatprep.subr.bf16.mxu0 0
          %3723 = vmatpush2.bf16.xpose.msra.mxu0 0
          %3724 = vmatprep.subr.bf16.mxu0 0
          %3725 = vmatpush2.bf16.xpose.msra.mxu0 0
          %3726 = vmatprep.subr.bf16.mxu0 0
          %3727 = vmatpush2.bf16.xpose.msra.mxu0 0
          %3728 = vmatprep.mubr.bf16.mxu0 0
          %3729 = vmatmul.mubr.bf16.gmra.mxu0 %v1477
          %v3730 = vpop.f32.mrf.mxu0
          %v3731 = vadd.f32 0.0, %v3730
          %v3732 = vpop.f32.mrf.mxu0
          %v3733 = vpop.f32.mrf.mxu0
          %v3734 = vadd.f32 0.0, %v3733
          %v3735 = vpop.f32.mrf.mxu0
          %3736 = vmatprep.mubr.bf16.mxu0 0
          %3737 = vmatmul.mubr.bf16.gmra.mxu0 %v1478
          %v3738 = vpop.f32.mrf.mxu0
          %v3739 = vadd.f32 0.0, %v3738
          %v3740 = vpop.f32.mrf.mxu0
          %v3741 = vpop.f32.mrf.mxu0
          %v3742 = vadd.f32 0.0, %v3741
          %v3743 = vpop.f32.mrf.mxu0
          %3744 = vmatprep.mubr.bf16.mxu0 0
          %3745 = vmatmul.mubr.bf16.gmra.mxu0 %v1479
          %v3746 = vpop.f32.mrf.mxu0
          %v3747 = vadd.f32 0.0, %v3746
          %v3748 = vpop.f32.mrf.mxu0
          %v3749 = vpop.f32.mrf.mxu0
          %v3750 = vadd.f32 0.0, %v3749
          %v3751 = vpop.f32.mrf.mxu0
          %3752 = vmatprep.mubr.bf16.mxu0 0
          %3753 = vmatmul.mubr.bf16.gmra.mxu0 %v1480
          %v3754 = vpop.f32.mrf.mxu0
          %v3755 = vadd.f32 0.0, %v3754
          %v3756 = vpop.f32.mrf.mxu0
          %v3757 = vpop.f32.mrf.mxu0
          %v3758 = vadd.f32 0.0, %v3757
          %v3759 = vpop.f32.mrf.mxu0
          %3760 = vmatprep.mubr.bf16.mxu0 0
          %3761 = vmatmul.mubr.bf16.gmra.mxu0 %v1481
          %v3762 = vpop.f32.mrf.mxu0
          %v3763 = vadd.f32 0.0, %v3762
          %v3764 = vpop.f32.mrf.mxu0
          %v3765 = vpop.f32.mrf.mxu0
          %v3766 = vadd.f32 0.0, %v3765
          %v3767 = vpop.f32.mrf.mxu0
          %3768 = vmatprep.mubr.bf16.mxu0 0
          %3769 = vmatmul.mubr.bf16.gmra.mxu0 %v1482
          %v3770 = vpop.f32.mrf.mxu0
          %v3771 = vadd.f32 0.0, %v3770
          %v3772 = vpop.f32.mrf.mxu0
          %v3773 = vpop.f32.mrf.mxu0
          %v3774 = vadd.f32 0.0, %v3773
          %v3775 = vpop.f32.mrf.mxu0
          %3776 = vmatprep.mubr.bf16.mxu0 0
          %3777 = vmatmul.mubr.bf16.gmra.mxu0 %v1483
          %v3778 = vpop.f32.mrf.mxu0
          %v3779 = vadd.f32 0.0, %v3778
          %v3780 = vpop.f32.mrf.mxu0
          %v3781 = vpop.f32.mrf.mxu0
          %v3782 = vadd.f32 0.0, %v3781
          %v3783 = vpop.f32.mrf.mxu0
          %3784 = vmatprep.mubr.bf16.mxu0 0
          %3785 = vmatmul.mubr.bf16.gmra.mxu0 %v1484
          %v3786 = vpop.f32.mrf.mxu0
          %v3787 = vadd.f32 0.0, %v3786
          %v3788 = vpop.f32.mrf.mxu0
          %v3789 = vpop.f32.mrf.mxu0
          %v3790 = vadd.f32 0.0, %v3789
          %v3791 = vpop.f32.mrf.mxu0
          %3792 = vdwg.mxu0
          %3793 = vmax.xlane.f32.xlu0 %v3296
          %v3794 = vpop.xlane.xlu0 %3793
          %3795 = vmax.xlane.f32.xlu0 %v3299
          %v3796 = vpop.xlane.xlu0 %3795
          %3797 = vmax.xlane.f32.xlu0 %v3304
          %v3798 = vpop.xlane.xlu0 %3797
          %3799 = vmax.xlane.f32.xlu0 %v3307
          %v3800 = vpop.xlane.xlu0 %3799
          %3801 = vmax.xlane.f32.xlu0 %v3312
          %v3802 = vpop.xlane.xlu0 %3801
          %3803 = vmax.xlane.f32.xlu0 %v3315
          %v3804 = vpop.xlane.xlu0 %3803
          %3805 = vmax.xlane.f32.xlu0 %v3320
          %v3806 = vpop.xlane.xlu0 %3805
          %3807 = vmax.xlane.f32.xlu0 %v3323
          %v3808 = vpop.xlane.xlu0 %3807
          %3809 = vmax.xlane.f32.xlu0 %v3328
          %v3810 = vpop.xlane.xlu0 %3809
          %3811 = vmax.xlane.f32.xlu0 %v3331
          %v3812 = vpop.xlane.xlu0 %3811
          %3813 = vmax.xlane.f32.xlu0 %v3336
          %v3814 = vpop.xlane.xlu0 %3813
          %3815 = vmax.xlane.f32.xlu0 %v3339
          %v3816 = vpop.xlane.xlu0 %3815
          %3817 = vmax.xlane.f32.xlu0 %v3344
          %v3818 = vpop.xlane.xlu0 %3817
          %3819 = vmax.xlane.f32.xlu0 %v3347
          %v3820 = vpop.xlane.xlu0 %3819
          %3821 = vmax.xlane.f32.xlu0 %v3352
          %v3822 = vpop.xlane.xlu0 %3821
          %3823 = vmax.xlane.f32.xlu0 %v3355
          %v3824 = vpop.xlane.xlu0 %3823
          %3825 = vmax.xlane.f32.xlu0 %v3441
          %v3826 = vpop.xlane.xlu0 %3825
          %3827 = vmax.xlane.f32.xlu0 %v3444
          %v3828 = vpop.xlane.xlu0 %3827
          %3829 = vmax.xlane.f32.xlu0 %v3449
          %v3830 = vpop.xlane.xlu0 %3829
          %3831 = vmax.xlane.f32.xlu0 %v3452
          %v3832 = vpop.xlane.xlu0 %3831
          %3833 = vmax.xlane.f32.xlu0 %v3457
          %v3834 = vpop.xlane.xlu0 %3833
          %3835 = vmax.xlane.f32.xlu0 %v3460
          %v3836 = vpop.xlane.xlu0 %3835
          %3837 = vmax.xlane.f32.xlu0 %v3465
          %v3838 = vpop.xlane.xlu0 %3837
          %3839 = vmax.xlane.f32.xlu0 %v3468
          %v3840 = vpop.xlane.xlu0 %3839
          %3841 = vmax.xlane.f32.xlu0 %v3473
          %v3842 = vpop.xlane.xlu0 %3841
          %3843 = vmax.xlane.f32.xlu0 %v3476
          %v3844 = vpop.xlane.xlu0 %3843
          %3845 = vmax.xlane.f32.xlu0 %v3481
          %v3846 = vpop.xlane.xlu0 %3845
          %3847 = vmax.xlane.f32.xlu0 %v3484
          %v3848 = vpop.xlane.xlu0 %3847
          %3849 = vmax.xlane.f32.xlu0 %v3489
          %v3850 = vpop.xlane.xlu0 %3849
          %3851 = vmax.xlane.f32.xlu0 %v3492
          %v3852 = vpop.xlane.xlu0 %3851
          %3853 = vmax.xlane.f32.xlu0 %v3497
          %v3854 = vpop.xlane.xlu0 %3853
          %3855 = vmax.xlane.f32.xlu0 %v3500
          %v3856 = vpop.xlane.xlu0 %3855
          %3857 = vmax.xlane.f32.xlu0 %v3586
          %v3858 = vpop.xlane.xlu0 %3857
          %3859 = vmax.xlane.f32.xlu0 %v3589
          %v3860 = vpop.xlane.xlu0 %3859
          %3861 = vmax.xlane.f32.xlu0 %v3594
          %v3862 = vpop.xlane.xlu0 %3861
          %3863 = vmax.xlane.f32.xlu0 %v3597
          %v3864 = vpop.xlane.xlu0 %3863
          %3865 = vmax.xlane.f32.xlu0 %v3602
          %v3866 = vpop.xlane.xlu0 %3865
          %3867 = vmax.xlane.f32.xlu0 %v3605
          %v3868 = vpop.xlane.xlu0 %3867
          %3869 = vmax.xlane.f32.xlu0 %v3610
          %v3870 = vpop.xlane.xlu0 %3869
          %3871 = vmax.xlane.f32.xlu0 %v3613
          %v3872 = vpop.xlane.xlu0 %3871
          %3873 = vmax.xlane.f32.xlu0 %v3618
          %v3874 = vpop.xlane.xlu0 %3873
          %3875 = vmax.xlane.f32.xlu0 %v3621
          %v3876 = vpop.xlane.xlu0 %3875
          %3877 = vmax.xlane.f32.xlu0 %v3626
          %v3878 = vpop.xlane.xlu0 %3877
          %3879 = vmax.xlane.f32.xlu0 %v3629
          %v3880 = vpop.xlane.xlu0 %3879
          %3881 = vmax.xlane.f32.xlu0 %v3634
          %v3882 = vpop.xlane.xlu0 %3881
          %3883 = vmax.xlane.f32.xlu0 %v3637
          %v3884 = vpop.xlane.xlu0 %3883
          %3885 = vmax.xlane.f32.xlu0 %v3642
          %v3886 = vpop.xlane.xlu0 %3885
          %3887 = vmax.xlane.f32.xlu0 %v3645
          %v3888 = vpop.xlane.xlu0 %3887
          %3889 = vmax.xlane.f32.xlu0 %v3731
          %v3890 = vpop.xlane.xlu0 %3889
          %3891 = vmax.xlane.f32.xlu0 %v3734
          %v3892 = vpop.xlane.xlu0 %3891
          %3893 = vmax.xlane.f32.xlu0 %v3739
          %v3894 = vpop.xlane.xlu0 %3893
          %3895 = vmax.xlane.f32.xlu0 %v3742
          %v3896 = vpop.xlane.xlu0 %3895
          %3897 = vmax.xlane.f32.xlu0 %v3747
          %v3898 = vpop.xlane.xlu0 %3897
          %3899 = vmax.xlane.f32.xlu0 %v3750
          %v3900 = vpop.xlane.xlu0 %3899
          %3901 = vmax.xlane.f32.xlu0 %v3755
          %v3902 = vpop.xlane.xlu0 %3901
          %3903 = vmax.xlane.f32.xlu0 %v3758
          %v3904 = vpop.xlane.xlu0 %3903
          %3905 = vmax.xlane.f32.xlu0 %v3763
          %v3906 = vpop.xlane.xlu0 %3905
          %3907 = vmax.xlane.f32.xlu0 %v3766
          %v3908 = vpop.xlane.xlu0 %3907
          %3909 = vmax.xlane.f32.xlu0 %v3771
          %v3910 = vpop.xlane.xlu0 %3909
          %3911 = vmax.xlane.f32.xlu0 %v3774
          %v3912 = vpop.xlane.xlu0 %3911
          %3913 = vmax.xlane.f32.xlu0 %v3779
          %v3914 = vpop.xlane.xlu0 %3913
          %3915 = vmax.xlane.f32.xlu0 %v3782
          %v3916 = vpop.xlane.xlu0 %3915
          %3917 = vmax.xlane.f32.xlu0 %v3787
          %v3918 = vpop.xlane.xlu0 %3917
          %3919 = vmax.xlane.f32.xlu0 %v3790
          %v3920 = vpop.xlane.xlu0 %3919
          %v3921 = vsub.f32 %v3296, %v3794
          %v3922 = vsub.f32 %v3299, %v3796
          %v3923 = vsub.f32 %v3304, %v3798
          %v3924 = vsub.f32 %v3307, %v3800
          %v3925 = vsub.f32 %v3312, %v3802
          %v3926 = vsub.f32 %v3315, %v3804
          %v3927 = vsub.f32 %v3320, %v3806
          %v3928 = vsub.f32 %v3323, %v3808
          %v3929 = vsub.f32 %v3328, %v3810
          %v3930 = vsub.f32 %v3331, %v3812
          %v3931 = vsub.f32 %v3336, %v3814
          %v3932 = vsub.f32 %v3339, %v3816
          %v3933 = vsub.f32 %v3344, %v3818
          %v3934 = vsub.f32 %v3347, %v3820
          %v3935 = vsub.f32 %v3352, %v3822
          %v3936 = vsub.f32 %v3355, %v3824
          %v3937 = vsub.f32 %v3441, %v3826
          %v3938 = vsub.f32 %v3444, %v3828
          %v3939 = vsub.f32 %v3449, %v3830
          %v3940 = vsub.f32 %v3452, %v3832
          %v3941 = vsub.f32 %v3457, %v3834
          %v3942 = vsub.f32 %v3460, %v3836
          %v3943 = vsub.f32 %v3465, %v3838
          %v3944 = vsub.f32 %v3468, %v3840
          %v3945 = vsub.f32 %v3473, %v3842
          %v3946 = vsub.f32 %v3476, %v3844
          %v3947 = vsub.f32 %v3481, %v3846
          %v3948 = vsub.f32 %v3484, %v3848
          %v3949 = vsub.f32 %v3489, %v3850
          %v3950 = vsub.f32 %v3492, %v3852
          %v3951 = vsub.f32 %v3497, %v3854
          %v3952 = vsub.f32 %v3500, %v3856
          %v3953 = vsub.f32 %v3586, %v3858
          %v3954 = vsub.f32 %v3589, %v3860
          %v3955 = vsub.f32 %v3594, %v3862
          %v3956 = vsub.f32 %v3597, %v3864
          %v3957 = vsub.f32 %v3602, %v3866
          %v3958 = vsub.f32 %v3605, %v3868
          %v3959 = vsub.f32 %v3610, %v3870
          %v3960 = vsub.f32 %v3613, %v3872
          %v3961 = vsub.f32 %v3618, %v3874
          %v3962 = vsub.f32 %v3621, %v3876
          %v3963 = vsub.f32 %v3626, %v3878
          %v3964 = vsub.f32 %v3629, %v3880
          %v3965 = vsub.f32 %v3634, %v3882
          %v3966 = vsub.f32 %v3637, %v3884
          %v3967 = vsub.f32 %v3642, %v3886
          %v3968 = vsub.f32 %v3645, %v3888
          %v3969 = vsub.f32 %v3731, %v3890
          %v3970 = vsub.f32 %v3734, %v3892
          %v3971 = vsub.f32 %v3739, %v3894
          %v3972 = vsub.f32 %v3742, %v3896
          %v3973 = vsub.f32 %v3747, %v3898
          %v3974 = vsub.f32 %v3750, %v3900
          %v3975 = vsub.f32 %v3755, %v3902
          %v3976 = vsub.f32 %v3758, %v3904
          %v3977 = vsub.f32 %v3763, %v3906
          %v3978 = vsub.f32 %v3766, %v3908
          %v3979 = vsub.f32 %v3771, %v3910
          %v3980 = vsub.f32 %v3774, %v3912
          %v3981 = vsub.f32 %v3779, %v3914
          %v3982 = vsub.f32 %v3782, %v3916
          %v3983 = vsub.f32 %v3787, %v3918
          %v3984 = vsub.f32 %v3790, %v3920
          %v3985 = vmul.f32 %v3921, 0.088388346
          %v3986 = vmul.f32 %v3922, 0.088388346
          %v3987 = vmul.f32 %v3923, 0.088388346
          %v3988 = vmul.f32 %v3924, 0.088388346
          %v3989 = vmul.f32 %v3925, 0.088388346
          %v3990 = vmul.f32 %v3926, 0.088388346
          %v3991 = vmul.f32 %v3927, 0.088388346
          %v3992 = vmul.f32 %v3928, 0.088388346
          %v3993 = vmul.f32 %v3929, 0.088388346
          %v3994 = vmul.f32 %v3930, 0.088388346
          %v3995 = vmul.f32 %v3931, 0.088388346
          %v3996 = vmul.f32 %v3932, 0.088388346
          %v3997 = vmul.f32 %v3933, 0.088388346
          %v3998 = vmul.f32 %v3934, 0.088388346
          %v3999 = vmul.f32 %v3935, 0.088388346
          %v4000 = vmul.f32 %v3936, 0.088388346
          %v4001 = vmul.f32 %v3937, 0.088388346
          %v4002 = vmul.f32 %v3938, 0.088388346
          %v4003 = vmul.f32 %v3939, 0.088388346
          %v4004 = vmul.f32 %v3940, 0.088388346
          %v4005 = vmul.f32 %v3941, 0.088388346
          %v4006 = vmul.f32 %v3942, 0.088388346
          %v4007 = vmul.f32 %v3943, 0.088388346
          %v4008 = vmul.f32 %v3944, 0.088388346
          %v4009 = vmul.f32 %v3945, 0.088388346
          %v4010 = vmul.f32 %v3946, 0.088388346
          %v4011 = vmul.f32 %v3947, 0.088388346
          %v4012 = vmul.f32 %v3948, 0.088388346
          %v4013 = vmul.f32 %v3949, 0.088388346
          %v4014 = vmul.f32 %v3950, 0.088388346
          %v4015 = vmul.f32 %v3951, 0.088388346
          %v4016 = vmul.f32 %v3952, 0.088388346
          %v4017 = vmul.f32 %v3953, 0.088388346
          %v4018 = vmul.f32 %v3954, 0.088388346
          %v4019 = vmul.f32 %v3955, 0.088388346
          %v4020 = vmul.f32 %v3956, 0.088388346
          %v4021 = vmul.f32 %v3957, 0.088388346
          %v4022 = vmul.f32 %v3958, 0.088388346
          %v4023 = vmul.f32 %v3959, 0.088388346
          %v4024 = vmul.f32 %v3960, 0.088388346
          %v4025 = vmul.f32 %v3961, 0.088388346
          %v4026 = vmul.f32 %v3962, 0.088388346
          %v4027 = vmul.f32 %v3963, 0.088388346
          %v4028 = vmul.f32 %v3964, 0.088388346
          %v4029 = vmul.f32 %v3965, 0.088388346
          %v4030 = vmul.f32 %v3966, 0.088388346
          %v4031 = vmul.f32 %v3967, 0.088388346
          %v4032 = vmul.f32 %v3968, 0.088388346
          %v4033 = vmul.f32 %v3969, 0.088388346
          %v4034 = vmul.f32 %v3970, 0.088388346
          %v4035 = vmul.f32 %v3971, 0.088388346
          %v4036 = vmul.f32 %v3972, 0.088388346
          %v4037 = vmul.f32 %v3973, 0.088388346
          %v4038 = vmul.f32 %v3974, 0.088388346
          %v4039 = vmul.f32 %v3975, 0.088388346
          %v4040 = vmul.f32 %v3976, 0.088388346
          %v4041 = vmul.f32 %v3977, 0.088388346
          %v4042 = vmul.f32 %v3978, 0.088388346
          %v4043 = vmul.f32 %v3979, 0.088388346
          %v4044 = vmul.f32 %v3980, 0.088388346
          %v4045 = vmul.f32 %v3981, 0.088388346
          %v4046 = vmul.f32 %v3982, 0.088388346
          %v4047 = vmul.f32 %v3983, 0.088388346
          %v4048 = vmul.f32 %v3984, 0.088388346
          %v4049 = vmul.f32 %v3985, 1.442695
          %v4050 = vpow.pop %v4049
          %v4051 = vmul.f32 %v3986, 1.442695
          %v4052 = vpow.pop %v4051
          %v4053 = vmul.f32 %v3987, 1.442695
          %v4054 = vpow.pop %v4053
          %v4055 = vmul.f32 %v3988, 1.442695
          %v4056 = vpow.pop %v4055
          %v4057 = vmul.f32 %v3989, 1.442695
          %v4058 = vpow.pop %v4057
          %v4059 = vmul.f32 %v3990, 1.442695
          %v4060 = vpow.pop %v4059
          %v4061 = vmul.f32 %v3991, 1.442695
          %v4062 = vpow.pop %v4061
          %v4063 = vmul.f32 %v3992, 1.442695
          %v4064 = vpow.pop %v4063
          %v4065 = vmul.f32 %v3993, 1.442695
          %v4066 = vpow.pop %v4065
          %v4067 = vmul.f32 %v3994, 1.442695
          %v4068 = vpow.pop %v4067
          %v4069 = vmul.f32 %v3995, 1.442695
          %v4070 = vpow.pop %v4069
          %v4071 = vmul.f32 %v3996, 1.442695
          %v4072 = vpow.pop %v4071
          %v4073 = vmul.f32 %v3997, 1.442695
          %v4074 = vpow.pop %v4073
          %v4075 = vmul.f32 %v3998, 1.442695
          %v4076 = vpow.pop %v4075
          %v4077 = vmul.f32 %v3999, 1.442695
          %v4078 = vpow.pop %v4077
          %v4079 = vmul.f32 %v4000, 1.442695
          %v4080 = vpow.pop %v4079
          %v4081 = vmul.f32 %v4001, 1.442695
          %v4082 = vpow.pop %v4081
          %v4083 = vmul.f32 %v4002, 1.442695
          %v4084 = vpow.pop %v4083
          %v4085 = vmul.f32 %v4003, 1.442695
          %v4086 = vpow.pop %v4085
          %v4087 = vmul.f32 %v4004, 1.442695
          %v4088 = vpow.pop %v4087
          %v4089 = vmul.f32 %v4005, 1.442695
          %v4090 = vpow.pop %v4089
          %v4091 = vmul.f32 %v4006, 1.442695
          %v4092 = vpow.pop %v4091
          %v4093 = vmul.f32 %v4007, 1.442695
          %v4094 = vpow.pop %v4093
          %v4095 = vmul.f32 %v4008, 1.442695
          %v4096 = vpow.pop %v4095
          %v4097 = vmul.f32 %v4009, 1.442695
          %v4098 = vpow.pop %v4097
          %v4099 = vmul.f32 %v4010, 1.442695
          %v4100 = vpow.pop %v4099
          %v4101 = vmul.f32 %v4011, 1.442695
          %v4102 = vpow.pop %v4101
          %v4103 = vmul.f32 %v4012, 1.442695
          %v4104 = vpow.pop %v4103
          %v4105 = vmul.f32 %v4013, 1.442695
          %v4106 = vpow.pop %v4105
          %v4107 = vmul.f32 %v4014, 1.442695
          %v4108 = vpow.pop %v4107
          %v4109 = vmul.f32 %v4015, 1.442695
          %v4110 = vpow.pop %v4109
          %v4111 = vmul.f32 %v4016, 1.442695
          %v4112 = vpow.pop %v4111
          %v4113 = vmul.f32 %v4017, 1.442695
          %v4114 = vpow.pop %v4113
          %v4115 = vmul.f32 %v4018, 1.442695
          %v4116 = vpow.pop %v4115
          %v4117 = vmul.f32 %v4019, 1.442695
          %v4118 = vpow.pop %v4117
          %v4119 = vmul.f32 %v4020, 1.442695
          %v4120 = vpow.pop %v4119
          %v4121 = vmul.f32 %v4021, 1.442695
          %v4122 = vpow.pop %v4121
          %v4123 = vmul.f32 %v4022, 1.442695
          %v4124 = vpow.pop %v4123
          %v4125 = vmul.f32 %v4023, 1.442695
          %v4126 = vpow.pop %v4125
          %v4127 = vmul.f32 %v4024, 1.442695
          %v4128 = vpow.pop %v4127
          %v4129 = vmul.f32 %v4025, 1.442695
          %v4130 = vpow.pop %v4129
          %v4131 = vmul.f32 %v4026, 1.442695
          %v4132 = vpow.pop %v4131
          %v4133 = vmul.f32 %v4027, 1.442695
          %v4134 = vpow.pop %v4133
          %v4135 = vmul.f32 %v4028, 1.442695
          %v4136 = vpow.pop %v4135
          %v4137 = vmul.f32 %v4029, 1.442695
          %v4138 = vpow.pop %v4137
          %v4139 = vmul.f32 %v4030, 1.442695
          %v4140 = vpow.pop %v4139
          %v4141 = vmul.f32 %v4031, 1.442695
          %v4142 = vpow.pop %v4141
          %v4143 = vmul.f32 %v4032, 1.442695
          %v4144 = vpow.pop %v4143
          %v4145 = vmul.f32 %v4033, 1.442695
          %v4146 = vpow.pop %v4145
          %v4147 = vmul.f32 %v4034, 1.442695
          %v4148 = vpow.pop %v4147
          %v4149 = vmul.f32 %v4035, 1.442695
          %v4150 = vpow.pop %v4149
          %v4151 = vmul.f32 %v4036, 1.442695
          %v4152 = vpow.pop %v4151
          %v4153 = vmul.f32 %v4037, 1.442695
          %v4154 = vpow.pop %v4153
          %v4155 = vmul.f32 %v4038, 1.442695
          %v4156 = vpow.pop %v4155
          %v4157 = vmul.f32 %v4039, 1.442695
          %v4158 = vpow.pop %v4157
          %v4159 = vmul.f32 %v4040, 1.442695
          %v4160 = vpow.pop %v4159
          %v4161 = vmul.f32 %v4041, 1.442695
          %v4162 = vpow.pop %v4161
          %v4163 = vmul.f32 %v4042, 1.442695
          %v4164 = vpow.pop %v4163
          %v4165 = vmul.f32 %v4043, 1.442695
          %v4166 = vpow.pop %v4165
          %v4167 = vmul.f32 %v4044, 1.442695
          %v4168 = vpow.pop %v4167
          %v4169 = vmul.f32 %v4045, 1.442695
          %v4170 = vpow.pop %v4169
          %v4171 = vmul.f32 %v4046, 1.442695
          %v4172 = vpow.pop %v4171
          %v4173 = vmul.f32 %v4047, 1.442695
          %v4174 = vpow.pop %v4173
          %v4175 = vmul.f32 %v4048, 1.442695
          %v4176 = vpow.pop %v4175
          %4177 = vadd.xlane.f32.xlu0 %v4050
          %v4178 = vpop.xlane.xlu0 %4177
          %4179 = vadd.xlane.f32.xlu0 %v4052
          %v4180 = vpop.xlane.xlu0 %4179
          %4181 = vadd.xlane.f32.xlu0 %v4054
          %v4182 = vpop.xlane.xlu0 %4181
          %4183 = vadd.xlane.f32.xlu0 %v4056
          %v4184 = vpop.xlane.xlu0 %4183
          %4185 = vadd.xlane.f32.xlu0 %v4058
          %v4186 = vpop.xlane.xlu0 %4185
          %4187 = vadd.xlane.f32.xlu0 %v4060
          %v4188 = vpop.xlane.xlu0 %4187
          %4189 = vadd.xlane.f32.xlu0 %v4062
          %v4190 = vpop.xlane.xlu0 %4189
          %4191 = vadd.xlane.f32.xlu0 %v4064
          %v4192 = vpop.xlane.xlu0 %4191
          %4193 = vadd.xlane.f32.xlu0 %v4066
          %v4194 = vpop.xlane.xlu0 %4193
          %4195 = vadd.xlane.f32.xlu0 %v4068
          %v4196 = vpop.xlane.xlu0 %4195
          %4197 = vadd.xlane.f32.xlu0 %v4070
          %v4198 = vpop.xlane.xlu0 %4197
          %4199 = vadd.xlane.f32.xlu0 %v4072
          %v4200 = vpop.xlane.xlu0 %4199
          %4201 = vadd.xlane.f32.xlu0 %v4074
          %v4202 = vpop.xlane.xlu0 %4201
          %4203 = vadd.xlane.f32.xlu0 %v4076
          %v4204 = vpop.xlane.xlu0 %4203
          %4205 = vadd.xlane.f32.xlu0 %v4078
          %v4206 = vpop.xlane.xlu0 %4205
          %4207 = vadd.xlane.f32.xlu0 %v4080
          %v4208 = vpop.xlane.xlu0 %4207
          %4209 = vadd.xlane.f32.xlu0 %v4082
          %v4210 = vpop.xlane.xlu0 %4209
          %4211 = vadd.xlane.f32.xlu0 %v4084
          %v4212 = vpop.xlane.xlu0 %4211
          %4213 = vadd.xlane.f32.xlu0 %v4086
          %v4214 = vpop.xlane.xlu0 %4213
          %4215 = vadd.xlane.f32.xlu0 %v4088
          %v4216 = vpop.xlane.xlu0 %4215
          %4217 = vadd.xlane.f32.xlu0 %v4090
          %v4218 = vpop.xlane.xlu0 %4217
          %4219 = vadd.xlane.f32.xlu0 %v4092
          %v4220 = vpop.xlane.xlu0 %4219
          %4221 = vadd.xlane.f32.xlu0 %v4094
          %v4222 = vpop.xlane.xlu0 %4221
          %4223 = vadd.xlane.f32.xlu0 %v4096
          %v4224 = vpop.xlane.xlu0 %4223
          %4225 = vadd.xlane.f32.xlu0 %v4098
          %v4226 = vpop.xlane.xlu0 %4225
          %4227 = vadd.xlane.f32.xlu0 %v4100
          %v4228 = vpop.xlane.xlu0 %4227
          %4229 = vadd.xlane.f32.xlu0 %v4102
          %v4230 = vpop.xlane.xlu0 %4229
          %4231 = vadd.xlane.f32.xlu0 %v4104
          %v4232 = vpop.xlane.xlu0 %4231
          %4233 = vadd.xlane.f32.xlu0 %v4106
          %v4234 = vpop.xlane.xlu0 %4233
          %4235 = vadd.xlane.f32.xlu0 %v4108
          %v4236 = vpop.xlane.xlu0 %4235
          %4237 = vadd.xlane.f32.xlu0 %v4110
          %v4238 = vpop.xlane.xlu0 %4237
          %4239 = vadd.xlane.f32.xlu0 %v4112
          %v4240 = vpop.xlane.xlu0 %4239
          %4241 = vadd.xlane.f32.xlu0 %v4114
          %v4242 = vpop.xlane.xlu0 %4241
          %4243 = vadd.xlane.f32.xlu0 %v4116
          %v4244 = vpop.xlane.xlu0 %4243
          %4245 = vadd.xlane.f32.xlu0 %v4118
          %v4246 = vpop.xlane.xlu0 %4245
          %4247 = vadd.xlane.f32.xlu0 %v4120
          %v4248 = vpop.xlane.xlu0 %4247
          %4249 = vadd.xlane.f32.xlu0 %v4122
          %v4250 = vpop.xlane.xlu0 %4249
          %4251 = vadd.xlane.f32.xlu0 %v4124
          %v4252 = vpop.xlane.xlu0 %4251
          %4253 = vadd.xlane.f32.xlu0 %v4126
          %v4254 = vpop.xlane.xlu0 %4253
          %4255 = vadd.xlane.f32.xlu0 %v4128
          %v4256 = vpop.xlane.xlu0 %4255
          %4257 = vadd.xlane.f32.xlu0 %v4130
          %v4258 = vpop.xlane.xlu0 %4257
          %4259 = vadd.xlane.f32.xlu0 %v4132
          %v4260 = vpop.xlane.xlu0 %4259
          %4261 = vadd.xlane.f32.xlu0 %v4134
          %v4262 = vpop.xlane.xlu0 %4261
          %4263 = vadd.xlane.f32.xlu0 %v4136
          %v4264 = vpop.xlane.xlu0 %4263
          %4265 = vadd.xlane.f32.xlu0 %v4138
          %v4266 = vpop.xlane.xlu0 %4265
          %4267 = vadd.xlane.f32.xlu0 %v4140
          %v4268 = vpop.xlane.xlu0 %4267
          %4269 = vadd.xlane.f32.xlu0 %v4142
          %v4270 = vpop.xlane.xlu0 %4269
          %4271 = vadd.xlane.f32.xlu0 %v4144
          %v4272 = vpop.xlane.xlu0 %4271
          %4273 = vadd.xlane.f32.xlu0 %v4146
          %v4274 = vpop.xlane.xlu0 %4273
          %4275 = vadd.xlane.f32.xlu0 %v4148
          %v4276 = vpop.xlane.xlu0 %4275
          %4277 = vadd.xlane.f32.xlu0 %v4150
          %v4278 = vpop.xlane.xlu0 %4277
          %4279 = vadd.xlane.f32.xlu0 %v4152
          %v4280 = vpop.xlane.xlu0 %4279
          %4281 = vadd.xlane.f32.xlu0 %v4154
          %v4282 = vpop.xlane.xlu0 %4281
          %4283 = vadd.xlane.f32.xlu0 %v4156
          %v4284 = vpop.xlane.xlu0 %4283
          %4285 = vadd.xlane.f32.xlu0 %v4158
          %v4286 = vpop.xlane.xlu0 %4285
          %4287 = vadd.xlane.f32.xlu0 %v4160
          %v4288 = vpop.xlane.xlu0 %4287
          %4289 = vadd.xlane.f32.xlu0 %v4162
          %v4290 = vpop.xlane.xlu0 %4289
          %4291 = vadd.xlane.f32.xlu0 %v4164
          %v4292 = vpop.xlane.xlu0 %4291
          %4293 = vadd.xlane.f32.xlu0 %v4166
          %v4294 = vpop.xlane.xlu0 %4293
          %4295 = vadd.xlane.f32.xlu0 %v4168
          %v4296 = vpop.xlane.xlu0 %4295
          %4297 = vadd.xlane.f32.xlu0 %v4170
          %v4298 = vpop.xlane.xlu0 %4297
          %4299 = vadd.xlane.f32.xlu0 %v4172
          %v4300 = vpop.xlane.xlu0 %4299
          %4301 = vadd.xlane.f32.xlu0 %v4174
          %v4302 = vpop.xlane.xlu0 %4301
          %4303 = vadd.xlane.f32.xlu0 %v4176
          %v4304 = vpop.xlane.xlu0 %4303
          %v4305 = vpack.c.bf16 %v4052, %v4050
          %v4306 = vpack.c.bf16 %v4056, %v4054
          %v4307 = vpack.c.bf16 %v4060, %v4058
          %v4308 = vpack.c.bf16 %v4064, %v4062
          %v4309 = vpack.c.bf16 %v4068, %v4066
          %v4310 = vpack.c.bf16 %v4072, %v4070
          %v4311 = vpack.c.bf16 %v4076, %v4074
          %v4312 = vpack.c.bf16 %v4080, %v4078
          %v4313 = vpack.c.bf16 %v4084, %v4082
          %v4314 = vpack.c.bf16 %v4088, %v4086
          %v4315 = vpack.c.bf16 %v4092, %v4090
          %v4316 = vpack.c.bf16 %v4096, %v4094
          %v4317 = vpack.c.bf16 %v4100, %v4098
          %v4318 = vpack.c.bf16 %v4104, %v4102
          %v4319 = vpack.c.bf16 %v4108, %v4106
          %v4320 = vpack.c.bf16 %v4112, %v4110
          %v4321 = vpack.c.bf16 %v4116, %v4114
          %v4322 = vpack.c.bf16 %v4120, %v4118
          %v4323 = vpack.c.bf16 %v4124, %v4122
          %v4324 = vpack.c.bf16 %v4128, %v4126
          %v4325 = vpack.c.bf16 %v4132, %v4130
          %v4326 = vpack.c.bf16 %v4136, %v4134
          %v4327 = vpack.c.bf16 %v4140, %v4138
          %v4328 = vpack.c.bf16 %v4144, %v4142
          %v4329 = vpack.c.bf16 %v4148, %v4146
          %v4330 = vpack.c.bf16 %v4152, %v4150
          %v4331 = vpack.c.bf16 %v4156, %v4154
          %v4332 = vpack.c.bf16 %v4160, %v4158
          %v4333 = vpack.c.bf16 %v4164, %v4162
          %v4334 = vpack.c.bf16 %v4168, %v4166
          %v4335 = vpack.c.bf16 %v4172, %v4170
          %v4336 = vpack.c.bf16 %v4176, %v4174
          %v4337 = vld [vmem:[%s540] sm:$0xf]
          %v4338 = vld [vmem:[%s540 + $0x4] sm:$0xf]
          %v4339 = vld [vmem:[%s540 + $0x8] sm:$0xf]
          %v4340 = vld [vmem:[%s540 + $0xc] sm:$0xf]
          %v4341 = vld [vmem:[%s540 + $0x10] sm:$0xf]
          %v4342 = vld [vmem:[%s540 + $0x14] sm:$0xf]
          %v4343 = vld [vmem:[%s540 + $0x18] sm:$0xf]
          %v4344 = vld [vmem:[%s540 + $0x1c] sm:$0xf]
          %v4345 = vld [vmem:[%s540 + $0x20] sm:$0xf]
          %v4346 = vld [vmem:[%s540 + $0x24] sm:$0xf]
          %v4347 = vld [vmem:[%s540 + $0x28] sm:$0xf]
          %v4348 = vld [vmem:[%s540 + $0x2c] sm:$0xf]
          %v4349 = vld [vmem:[%s540 + $0x30] sm:$0xf]
          %v4350 = vld [vmem:[%s540 + $0x34] sm:$0xf]
          %v4351 = vld [vmem:[%s540 + $0x38] sm:$0xf]
          %v4352 = vld [vmem:[%s540 + $0x3c] sm:$0xf]
          %v4353 = vld [vmem:[%s540 + $0x40] sm:$0xf]
          %v4354 = vld [vmem:[%s540 + $0x44] sm:$0xf]
          %v4355 = vld [vmem:[%s540 + $0x48] sm:$0xf]
          %v4356 = vld [vmem:[%s540 + $0x4c] sm:$0xf]
          %v4357 = vld [vmem:[%s540 + $0x50] sm:$0xf]
          %v4358 = vld [vmem:[%s540 + $0x54] sm:$0xf]
          %v4359 = vld [vmem:[%s540 + $0x58] sm:$0xf]
          %v4360 = vld [vmem:[%s540 + $0x5c] sm:$0xf]
          %v4361 = vld [vmem:[%s540 + $0x60] sm:$0xf]
          %v4362 = vld [vmem:[%s540 + $0x64] sm:$0xf]
          %v4363 = vld [vmem:[%s540 + $0x68] sm:$0xf]
          %v4364 = vld [vmem:[%s540 + $0x6c] sm:$0xf]
          %v4365 = vld [vmem:[%s540 + $0x70] sm:$0xf]
          %v4366 = vld [vmem:[%s540 + $0x74] sm:$0xf]
          %v4367 = vld [vmem:[%s540 + $0x78] sm:$0xf]
          %v4368 = vld [vmem:[%s540 + $0x7c] sm:$0xf]
          %v4369 = vld [vmem:[%s540 + $0x80] sm:$0xf]
          %v4370 = vld [vmem:[%s540 + $0x84] sm:$0xf]
          %v4371 = vld [vmem:[%s540 + $0x88] sm:$0xf]
          %v4372 = vld [vmem:[%s540 + $0x8c] sm:$0xf]
          %v4373 = vld [vmem:[%s540 + $0x90] sm:$0xf]
          %v4374 = vld [vmem:[%s540 + $0x94] sm:$0xf]
          %v4375 = vld [vmem:[%s540 + $0x98] sm:$0xf]
          %v4376 = vld [vmem:[%s540 + $0x9c] sm:$0xf]
          %v4377 = vld [vmem:[%s540 + $0xa0] sm:$0xf]
          %v4378 = vld [vmem:[%s540 + $0xa4] sm:$0xf]
          %v4379 = vld [vmem:[%s540 + $0xa8] sm:$0xf]
          %v4380 = vld [vmem:[%s540 + $0xac] sm:$0xf]
          %v4381 = vld [vmem:[%s540 + $0xb0] sm:$0xf]
          %v4382 = vld [vmem:[%s540 + $0xb4] sm:$0xf]
          %v4383 = vld [vmem:[%s540 + $0xb8] sm:$0xf]
          %v4384 = vld [vmem:[%s540 + $0xbc] sm:$0xf]
          %v4385 = vld [vmem:[%s540 + $0xc0] sm:$0xf]
          %v4386 = vld [vmem:[%s540 + $0xc4] sm:$0xf]
          %v4387 = vld [vmem:[%s540 + $0xc8] sm:$0xf]
          %v4388 = vld [vmem:[%s540 + $0xcc] sm:$0xf]
          %v4389 = vld [vmem:[%s540 + $0xd0] sm:$0xf]
          %v4390 = vld [vmem:[%s540 + $0xd4] sm:$0xf]
          %v4391 = vld [vmem:[%s540 + $0xd8] sm:$0xf]
          %v4392 = vld [vmem:[%s540 + $0xdc] sm:$0xf]
          %v4393 = vld [vmem:[%s540 + $0xe0] sm:$0xf]
          %v4394 = vld [vmem:[%s540 + $0xe4] sm:$0xf]
          %v4395 = vld [vmem:[%s540 + $0xe8] sm:$0xf]
          %v4396 = vld [vmem:[%s540 + $0xec] sm:$0xf]
          %v4397 = vld [vmem:[%s540 + $0xf0] sm:$0xf]
          %v4398 = vld [vmem:[%s540 + $0xf4] sm:$0xf]
          %v4399 = vld [vmem:[%s540 + $0xf8] sm:$0xf]
          %v4400 = vld [vmem:[%s540 + $0xfc] sm:$0xf]
          %v4417 = vunpack.c.l.b16 %v4337
          %v4418 = vunpack.c.l.b16 %v4338
          %v4419 = vunpack.c.l.b16 %v4339
          %v4420 = vunpack.c.l.b16 %v4340
          %v4421 = vunpack.c.l.b16 %v4341
          %v4422 = vunpack.c.l.b16 %v4342
          %v4423 = vunpack.c.l.b16 %v4343
          %v4424 = vunpack.c.l.b16 %v4344
          %v4425 = vunpack.c.l.b16 %v4345
          %v4426 = vunpack.c.l.b16 %v4346
          %v4427 = vunpack.c.l.b16 %v4347
          %v4428 = vunpack.c.l.b16 %v4348
          %v4429 = vunpack.c.l.b16 %v4349
          %v4430 = vunpack.c.l.b16 %v4350
          %v4431 = vunpack.c.l.b16 %v4351
          %v4432 = vunpack.c.l.b16 %v4352
          %v4433 = vpack.c.b16 %v4418, %v4417
          %v4434 = vpack.c.b16 %v4420, %v4419
          %v4435 = vpack.c.b16 %v4422, %v4421
          %v4436 = vpack.c.b16 %v4424, %v4423
          %v4437 = vpack.c.b16 %v4426, %v4425
          %v4438 = vpack.c.b16 %v4428, %v4427
          %v4439 = vpack.c.b16 %v4430, %v4429
          %v4440 = vpack.c.b16 %v4432, %v4431
          %4449 = vmatprep.subr.bf16.mxu0 0
          %4450 = vmatpush1.bf16.msra.mxu0 %v4440
          %4451 = vmatprep.subr.bf16.mxu0 0
          %4452 = vmatpush1.bf16.msra.mxu0 %v4439
          %4453 = vmatprep.subr.bf16.mxu0 0
          %4454 = vmatpush1.bf16.msra.mxu0 %v4438
          %4455 = vmatprep.subr.bf16.mxu0 0
          %4456 = vmatpush1.bf16.msra.mxu0 %v4437
          %4457 = vmatprep.subr.bf16.mxu0 0
          %4458 = vmatpush1.bf16.msra.mxu0 %v4436
          %4459 = vmatprep.subr.bf16.mxu0 0
          %4460 = vmatpush1.bf16.msra.mxu0 %v4435
          %4461 = vmatprep.subr.bf16.mxu0 0
          %4462 = vmatpush1.bf16.msra.mxu0 %v4434
          %4463 = vmatprep.subr.bf16.mxu0 0
          %4464 = vmatpush1.bf16.msra.mxu0 %v4433
          %4465 = vmatprep.subr.bf16.mxu0 0
          %4466 = vmatpush2.bf16.msra.mxu0 0
          %4467 = vmatprep.subr.bf16.mxu0 0
          %4468 = vmatpush2.bf16.msra.mxu0 0
          %4469 = vmatprep.subr.bf16.mxu0 0
          %4470 = vmatpush2.bf16.msra.mxu0 0
          %4471 = vmatprep.subr.bf16.mxu0 0
          %4472 = vmatpush2.bf16.msra.mxu0 0
          %4473 = vmatprep.subr.bf16.mxu0 0
          %4474 = vmatpush2.bf16.msra.mxu0 0
          %4475 = vmatprep.subr.bf16.mxu0 0
          %4476 = vmatpush2.bf16.msra.mxu0 0
          %4477 = vmatprep.subr.bf16.mxu0 0
          %4478 = vmatpush2.bf16.msra.mxu0 0
          %4479 = vmatprep.subr.bf16.mxu0 0
          %4480 = vmatpush2.bf16.msra.mxu0 0
          %4481 = vmatprep.mubr.bf16.mxu0 0
          %4482 = vmatmul.mubr.bf16.gmra.mxu0 %v4305
          %v4483 = vpop.f32.mrf.mxu0
          %v4484 = vadd.f32 0.0, %v4483
          %v4485 = vpop.f32.mrf.mxu0
          %v4486 = vpop.f32.mrf.mxu0
          %v4487 = vadd.f32 0.0, %v4486
          %v4488 = vpop.f32.mrf.mxu0
          %4489 = vmatprep.mubr.bf16.mxu0 0
          %4490 = vmatmul.mubr.bf16.gmra.mxu0 %v4306
          %v4491 = vpop.f32.mrf.mxu0
          %v4492 = vadd.f32 0.0, %v4491
          %v4493 = vpop.f32.mrf.mxu0
          %v4494 = vpop.f32.mrf.mxu0
          %v4495 = vadd.f32 0.0, %v4494
          %v4496 = vpop.f32.mrf.mxu0
          %4497 = vmatprep.mubr.bf16.mxu0 0
          %4498 = vmatmul.mubr.bf16.gmra.mxu0 %v4307
          %v4499 = vpop.f32.mrf.mxu0
          %v4500 = vadd.f32 0.0, %v4499
          %v4501 = vpop.f32.mrf.mxu0
          %v4502 = vpop.f32.mrf.mxu0
          %v4503 = vadd.f32 0.0, %v4502
          %v4504 = vpop.f32.mrf.mxu0
          %4505 = vmatprep.mubr.bf16.mxu0 0
          %4506 = vmatmul.mubr.bf16.gmra.mxu0 %v4308
          %v4507 = vpop.f32.mrf.mxu0
          %v4508 = vadd.f32 0.0, %v4507
          %v4509 = vpop.f32.mrf.mxu0
          %v4510 = vpop.f32.mrf.mxu0
          %v4511 = vadd.f32 0.0, %v4510
          %v4512 = vpop.f32.mrf.mxu0
          %4513 = vmatprep.mubr.bf16.mxu0 0
          %4514 = vmatmul.mubr.bf16.gmra.mxu0 %v4309
          %v4515 = vpop.f32.mrf.mxu0
          %v4516 = vadd.f32 0.0, %v4515
          %v4517 = vpop.f32.mrf.mxu0
          %v4518 = vpop.f32.mrf.mxu0
          %v4519 = vadd.f32 0.0, %v4518
          %v4520 = vpop.f32.mrf.mxu0
          %4521 = vmatprep.mubr.bf16.mxu0 0
          %4522 = vmatmul.mubr.bf16.gmra.mxu0 %v4310
          %v4523 = vpop.f32.mrf.mxu0
          %v4524 = vadd.f32 0.0, %v4523
          %v4525 = vpop.f32.mrf.mxu0
          %v4526 = vpop.f32.mrf.mxu0
          %v4527 = vadd.f32 0.0, %v4526
          %v4528 = vpop.f32.mrf.mxu0
          %4529 = vmatprep.mubr.bf16.mxu0 0
          %4530 = vmatmul.mubr.bf16.gmra.mxu0 %v4311
          %v4531 = vpop.f32.mrf.mxu0
          %v4532 = vadd.f32 0.0, %v4531
          %v4533 = vpop.f32.mrf.mxu0
          %v4534 = vpop.f32.mrf.mxu0
          %v4535 = vadd.f32 0.0, %v4534
          %v4536 = vpop.f32.mrf.mxu0
          %4537 = vmatprep.mubr.bf16.mxu0 0
          %4538 = vmatmul.mubr.bf16.gmra.mxu0 %v4312
          %v4539 = vpop.f32.mrf.mxu0
          %v4540 = vadd.f32 0.0, %v4539
          %v4541 = vpop.f32.mrf.mxu0
          %v4542 = vpop.f32.mrf.mxu0
          %v4543 = vadd.f32 0.0, %v4542
          %v4544 = vpop.f32.mrf.mxu0
          %4545 = vdwg.mxu0
          %v4562 = vunpack.c.l.b16 %v4353
          %v4563 = vunpack.c.l.b16 %v4354
          %v4564 = vunpack.c.l.b16 %v4355
          %v4565 = vunpack.c.l.b16 %v4356
          %v4566 = vunpack.c.l.b16 %v4357
          %v4567 = vunpack.c.l.b16 %v4358
          %v4568 = vunpack.c.l.b16 %v4359
          %v4569 = vunpack.c.l.b16 %v4360
          %v4570 = vunpack.c.l.b16 %v4361
          %v4571 = vunpack.c.l.b16 %v4362
          %v4572 = vunpack.c.l.b16 %v4363
          %v4573 = vunpack.c.l.b16 %v4364
          %v4574 = vunpack.c.l.b16 %v4365
          %v4575 = vunpack.c.l.b16 %v4366
          %v4576 = vunpack.c.l.b16 %v4367
          %v4577 = vunpack.c.l.b16 %v4368
          %v4578 = vpack.c.b16 %v4563, %v4562
          %v4579 = vpack.c.b16 %v4565, %v4564
          %v4580 = vpack.c.b16 %v4567, %v4566
          %v4581 = vpack.c.b16 %v4569, %v4568
          %v4582 = vpack.c.b16 %v4571, %v4570
          %v4583 = vpack.c.b16 %v4573, %v4572
          %v4584 = vpack.c.b16 %v4575, %v4574
          %v4585 = vpack.c.b16 %v4577, %v4576
          %4594 = vmatprep.subr.bf16.mxu0 0
          %4595 = vmatpush1.bf16.msra.mxu0 %v4585
          %4596 = vmatprep.subr.bf16.mxu0 0
          %4597 = vmatpush1.bf16.msra.mxu0 %v4584
          %4598 = vmatprep.subr.bf16.mxu0 0
          %4599 = vmatpush1.bf16.msra.mxu0 %v4583
          %4600 = vmatprep.subr.bf16.mxu0 0
          %4601 = vmatpush1.bf16.msra.mxu0 %v4582
          %4602 = vmatprep.subr.bf16.mxu0 0
          %4603 = vmatpush1.bf16.msra.mxu0 %v4581
          %4604 = vmatprep.subr.bf16.mxu0 0
          %4605 = vmatpush1.bf16.msra.mxu0 %v4580
          %4606 = vmatprep.subr.bf16.mxu0 0
          %4607 = vmatpush1.bf16.msra.mxu0 %v4579
          %4608 = vmatprep.subr.bf16.mxu0 0
          %4609 = vmatpush1.bf16.msra.mxu0 %v4578
          %4610 = vmatprep.subr.bf16.mxu0 0
          %4611 = vmatpush2.bf16.msra.mxu0 0
          %4612 = vmatprep.subr.bf16.mxu0 0
          %4613 = vmatpush2.bf16.msra.mxu0 0
          %4614 = vmatprep.subr.bf16.mxu0 0
          %4615 = vmatpush2.bf16.msra.mxu0 0
          %4616 = vmatprep.subr.bf16.mxu0 0
          %4617 = vmatpush2.bf16.msra.mxu0 0
          %4618 = vmatprep.subr.bf16.mxu0 0
          %4619 = vmatpush2.bf16.msra.mxu0 0
          %4620 = vmatprep.subr.bf16.mxu0 0
          %4621 = vmatpush2.bf16.msra.mxu0 0
          %4622 = vmatprep.subr.bf16.mxu0 0
          %4623 = vmatpush2.bf16.msra.mxu0 0
          %4624 = vmatprep.subr.bf16.mxu0 0
          %4625 = vmatpush2.bf16.msra.mxu0 0
          %4626 = vmatprep.mubr.bf16.mxu0 0
          %4627 = vmatmul.mubr.bf16.gmra.mxu0 %v4313
          %v4628 = vpop.f32.mrf.mxu0
          %v4629 = vadd.f32 0.0, %v4628
          %v4630 = vpop.f32.mrf.mxu0
          %v4631 = vpop.f32.mrf.mxu0
          %v4632 = vadd.f32 0.0, %v4631
          %v4633 = vpop.f32.mrf.mxu0
          %4634 = vmatprep.mubr.bf16.mxu0 0
          %4635 = vmatmul.mubr.bf16.gmra.mxu0 %v4314
          %v4636 = vpop.f32.mrf.mxu0
          %v4637 = vadd.f32 0.0, %v4636
          %v4638 = vpop.f32.mrf.mxu0
          %v4639 = vpop.f32.mrf.mxu0
          %v4640 = vadd.f32 0.0, %v4639
          %v4641 = vpop.f32.mrf.mxu0
          %4642 = vmatprep.mubr.bf16.mxu0 0
          %4643 = vmatmul.mubr.bf16.gmra.mxu0 %v4315
          %v4644 = vpop.f32.mrf.mxu0
          %v4645 = vadd.f32 0.0, %v4644
          %v4646 = vpop.f32.mrf.mxu0
          %v4647 = vpop.f32.mrf.mxu0
          %v4648 = vadd.f32 0.0, %v4647
          %v4649 = vpop.f32.mrf.mxu0
          %4650 = vmatprep.mubr.bf16.mxu0 0
          %4651 = vmatmul.mubr.bf16.gmra.mxu0 %v4316
          %v4652 = vpop.f32.mrf.mxu0
          %v4653 = vadd.f32 0.0, %v4652
          %v4654 = vpop.f32.mrf.mxu0
          %v4655 = vpop.f32.mrf.mxu0
          %v4656 = vadd.f32 0.0, %v4655
          %v4657 = vpop.f32.mrf.mxu0
          %4658 = vmatprep.mubr.bf16.mxu0 0
          %4659 = vmatmul.mubr.bf16.gmra.mxu0 %v4317
          %v4660 = vpop.f32.mrf.mxu0
          %v4661 = vadd.f32 0.0, %v4660
          %v4662 = vpop.f32.mrf.mxu0
          %v4663 = vpop.f32.mrf.mxu0
          %v4664 = vadd.f32 0.0, %v4663
          %v4665 = vpop.f32.mrf.mxu0
          %4666 = vmatprep.mubr.bf16.mxu0 0
          %4667 = vmatmul.mubr.bf16.gmra.mxu0 %v4318
          %v4668 = vpop.f32.mrf.mxu0
          %v4669 = vadd.f32 0.0, %v4668
          %v4670 = vpop.f32.mrf.mxu0
          %v4671 = vpop.f32.mrf.mxu0
          %v4672 = vadd.f32 0.0, %v4671
          %v4673 = vpop.f32.mrf.mxu0
          %4674 = vmatprep.mubr.bf16.mxu0 0
          %4675 = vmatmul.mubr.bf16.gmra.mxu0 %v4319
          %v4676 = vpop.f32.mrf.mxu0
          %v4677 = vadd.f32 0.0, %v4676
          %v4678 = vpop.f32.mrf.mxu0
          %v4679 = vpop.f32.mrf.mxu0
          %v4680 = vadd.f32 0.0, %v4679
          %v4681 = vpop.f32.mrf.mxu0
          %4682 = vmatprep.mubr.bf16.mxu0 0
          %4683 = vmatmul.mubr.bf16.gmra.mxu0 %v4320
          %v4684 = vpop.f32.mrf.mxu0
          %v4685 = vadd.f32 0.0, %v4684
          %v4686 = vpop.f32.mrf.mxu0
          %v4687 = vpop.f32.mrf.mxu0
          %v4688 = vadd.f32 0.0, %v4687
          %v4689 = vpop.f32.mrf.mxu0
          %4690 = vdwg.mxu0
          %v4707 = vunpack.c.l.b16 %v4369
          %v4708 = vunpack.c.l.b16 %v4370
          %v4709 = vunpack.c.l.b16 %v4371
          %v4710 = vunpack.c.l.b16 %v4372
          %v4711 = vunpack.c.l.b16 %v4373
          %v4712 = vunpack.c.l.b16 %v4374
          %v4713 = vunpack.c.l.b16 %v4375
          %v4714 = vunpack.c.l.b16 %v4376
          %v4715 = vunpack.c.l.b16 %v4377
          %v4716 = vunpack.c.l.b16 %v4378
          %v4717 = vunpack.c.l.b16 %v4379
          %v4718 = vunpack.c.l.b16 %v4380
          %v4719 = vunpack.c.l.b16 %v4381
          %v4720 = vunpack.c.l.b16 %v4382
          %v4721 = vunpack.c.l.b16 %v4383
          %v4722 = vunpack.c.l.b16 %v4384
          %v4723 = vpack.c.b16 %v4708, %v4707
          %v4724 = vpack.c.b16 %v4710, %v4709
          %v4725 = vpack.c.b16 %v4712, %v4711
          %v4726 = vpack.c.b16 %v4714, %v4713
          %v4727 = vpack.c.b16 %v4716, %v4715
          %v4728 = vpack.c.b16 %v4718, %v4717
          %v4729 = vpack.c.b16 %v4720, %v4719
          %v4730 = vpack.c.b16 %v4722, %v4721
          %4739 = vmatprep.subr.bf16.mxu0 0
          %4740 = vmatpush1.bf16.msra.mxu0 %v4730
          %4741 = vmatprep.subr.bf16.mxu0 0
          %4742 = vmatpush1.bf16.msra.mxu0 %v4729
          %4743 = vmatprep.subr.bf16.mxu0 0
          %4744 = vmatpush1.bf16.msra.mxu0 %v4728
          %4745 = vmatprep.subr.bf16.mxu0 0
          %4746 = vmatpush1.bf16.msra.mxu0 %v4727
          %4747 = vmatprep.subr.bf16.mxu0 0
          %4748 = vmatpush1.bf16.msra.mxu0 %v4726
          %4749 = vmatprep.subr.bf16.mxu0 0
          %4750 = vmatpush1.bf16.msra.mxu0 %v4725
          %4751 = vmatprep.subr.bf16.mxu0 0
          %4752 = vmatpush1.bf16.msra.mxu0 %v4724
          %4753 = vmatprep.subr.bf16.mxu0 0
          %4754 = vmatpush1.bf16.msra.mxu0 %v4723
          %4755 = vmatprep.subr.bf16.mxu0 0
          %4756 = vmatpush2.bf16.msra.mxu0 0
          %4757 = vmatprep.subr.bf16.mxu0 0
          %4758 = vmatpush2.bf16.msra.mxu0 0
          %4759 = vmatprep.subr.bf16.mxu0 0
          %4760 = vmatpush2.bf16.msra.mxu0 0
          %4761 = vmatprep.subr.bf16.mxu0 0
          %4762 = vmatpush2.bf16.msra.mxu0 0
          %4763 = vmatprep.subr.bf16.mxu0 0
          %4764 = vmatpush2.bf16.msra.mxu0 0
          %4765 = vmatprep.subr.bf16.mxu0 0
          %4766 = vmatpush2.bf16.msra.mxu0 0
          %4767 = vmatprep.subr.bf16.mxu0 0
          %4768 = vmatpush2.bf16.msra.mxu0 0
          %4769 = vmatprep.subr.bf16.mxu0 0
          %4770 = vmatpush2.bf16.msra.mxu0 0
          %4771 = vmatprep.mubr.bf16.mxu0 0
          %4772 = vmatmul.mubr.bf16.gmra.mxu0 %v4321
          %v4773 = vpop.f32.mrf.mxu0
          %v4774 = vadd.f32 0.0, %v4773
          %v4775 = vpop.f32.mrf.mxu0
          %v4776 = vpop.f32.mrf.mxu0
          %v4777 = vadd.f32 0.0, %v4776
          %v4778 = vpop.f32.mrf.mxu0
          %4779 = vmatprep.mubr.bf16.mxu0 0
          %4780 = vmatmul.mubr.bf16.gmra.mxu0 %v4322
          %v4781 = vpop.f32.mrf.mxu0
          %v4782 = vadd.f32 0.0, %v4781
          %v4783 = vpop.f32.mrf.mxu0
          %v4784 = vpop.f32.mrf.mxu0
          %v4785 = vadd.f32 0.0, %v4784
          %v4786 = vpop.f32.mrf.mxu0
          %4787 = vmatprep.mubr.bf16.mxu0 0
          %4788 = vmatmul.mubr.bf16.gmra.mxu0 %v4323
          %v4789 = vpop.f32.mrf.mxu0
          %v4790 = vadd.f32 0.0, %v4789
          %v4791 = vpop.f32.mrf.mxu0
          %v4792 = vpop.f32.mrf.mxu0
          %v4793 = vadd.f32 0.0, %v4792
          %v4794 = vpop.f32.mrf.mxu0
          %4795 = vmatprep.mubr.bf16.mxu0 0
          %4796 = vmatmul.mubr.bf16.gmra.mxu0 %v4324
          %v4797 = vpop.f32.mrf.mxu0
          %v4798 = vadd.f32 0.0, %v4797
          %v4799 = vpop.f32.mrf.mxu0
          %v4800 = vpop.f32.mrf.mxu0
          %v4801 = vadd.f32 0.0, %v4800
          %v4802 = vpop.f32.mrf.mxu0
          %4803 = vmatprep.mubr.bf16.mxu0 0
          %4804 = vmatmul.mubr.bf16.gmra.mxu0 %v4325
          %v4805 = vpop.f32.mrf.mxu0
          %v4806 = vadd.f32 0.0, %v4805
          %v4807 = vpop.f32.mrf.mxu0
          %v4808 = vpop.f32.mrf.mxu0
          %v4809 = vadd.f32 0.0, %v4808
          %v4810 = vpop.f32.mrf.mxu0
          %4811 = vmatprep.mubr.bf16.mxu0 0
          %4812 = vmatmul.mubr.bf16.gmra.mxu0 %v4326
          %v4813 = vpop.f32.mrf.mxu0
          %v4814 = vadd.f32 0.0, %v4813
          %v4815 = vpop.f32.mrf.mxu0
          %v4816 = vpop.f32.mrf.mxu0
          %v4817 = vadd.f32 0.0, %v4816
          %v4818 = vpop.f32.mrf.mxu0
          %4819 = vmatprep.mubr.bf16.mxu0 0
          %4820 = vmatmul.mubr.bf16.gmra.mxu0 %v4327
          %v4821 = vpop.f32.mrf.mxu0
          %v4822 = vadd.f32 0.0, %v4821
          %v4823 = vpop.f32.mrf.mxu0
          %v4824 = vpop.f32.mrf.mxu0
          %v4825 = vadd.f32 0.0, %v4824
          %v4826 = vpop.f32.mrf.mxu0
          %4827 = vmatprep.mubr.bf16.mxu0 0
          %4828 = vmatmul.mubr.bf16.gmra.mxu0 %v4328
          %v4829 = vpop.f32.mrf.mxu0
          %v4830 = vadd.f32 0.0, %v4829
          %v4831 = vpop.f32.mrf.mxu0
          %v4832 = vpop.f32.mrf.mxu0
          %v4833 = vadd.f32 0.0, %v4832
          %v4834 = vpop.f32.mrf.mxu0
          %4835 = vdwg.mxu0
          %v4852 = vunpack.c.l.b16 %v4385
          %v4853 = vunpack.c.l.b16 %v4386
          %v4854 = vunpack.c.l.b16 %v4387
          %v4855 = vunpack.c.l.b16 %v4388
          %v4856 = vunpack.c.l.b16 %v4389
          %v4857 = vunpack.c.l.b16 %v4390
          %v4858 = vunpack.c.l.b16 %v4391
          %v4859 = vunpack.c.l.b16 %v4392
          %v4860 = vunpack.c.l.b16 %v4393
          %v4861 = vunpack.c.l.b16 %v4394
          %v4862 = vunpack.c.l.b16 %v4395
          %v4863 = vunpack.c.l.b16 %v4396
          %v4864 = vunpack.c.l.b16 %v4397
          %v4865 = vunpack.c.l.b16 %v4398
          %v4866 = vunpack.c.l.b16 %v4399
          %v4867 = vunpack.c.l.b16 %v4400
          %v4868 = vpack.c.b16 %v4853, %v4852
          %v4869 = vpack.c.b16 %v4855, %v4854
          %v4870 = vpack.c.b16 %v4857, %v4856
          %v4871 = vpack.c.b16 %v4859, %v4858
          %v4872 = vpack.c.b16 %v4861, %v4860
          %v4873 = vpack.c.b16 %v4863, %v4862
          %v4874 = vpack.c.b16 %v4865, %v4864
          %v4875 = vpack.c.b16 %v4867, %v4866
          %4884 = vmatprep.subr.bf16.mxu0 0
          %4885 = vmatpush1.bf16.msra.mxu0 %v4875
          %4886 = vmatprep.subr.bf16.mxu0 0
          %4887 = vmatpush1.bf16.msra.mxu0 %v4874
          %4888 = vmatprep.subr.bf16.mxu0 0
          %4889 = vmatpush1.bf16.msra.mxu0 %v4873
          %4890 = vmatprep.subr.bf16.mxu0 0
          %4891 = vmatpush1.bf16.msra.mxu0 %v4872
          %4892 = vmatprep.subr.bf16.mxu0 0
          %4893 = vmatpush1.bf16.msra.mxu0 %v4871
          %4894 = vmatprep.subr.bf16.mxu0 0
          %4895 = vmatpush1.bf16.msra.mxu0 %v4870
          %4896 = vmatprep.subr.bf16.mxu0 0
          %4897 = vmatpush1.bf16.msra.mxu0 %v4869
          %4898 = vmatprep.subr.bf16.mxu0 0
          %4899 = vmatpush1.bf16.msra.mxu0 %v4868
          %4900 = vmatprep.subr.bf16.mxu0 0
          %4901 = vmatpush2.bf16.msra.mxu0 0
          %4902 = vmatprep.subr.bf16.mxu0 0
          %4903 = vmatpush2.bf16.msra.mxu0 0
          %4904 = vmatprep.subr.bf16.mxu0 0
          %4905 = vmatpush2.bf16.msra.mxu0 0
          %4906 = vmatprep.subr.bf16.mxu0 0
          %4907 = vmatpush2.bf16.msra.mxu0 0
          %4908 = vmatprep.subr.bf16.mxu0 0
          %4909 = vmatpush2.bf16.msra.mxu0 0
          %4910 = vmatprep.subr.bf16.mxu0 0
          %4911 = vmatpush2.bf16.msra.mxu0 0
          %4912 = vmatprep.subr.bf16.mxu0 0
          %4913 = vmatpush2.bf16.msra.mxu0 0
          %4914 = vmatprep.subr.bf16.mxu0 0
          %4915 = vmatpush2.bf16.msra.mxu0 0
          %4916 = vmatprep.mubr.bf16.mxu0 0
          %4917 = vmatmul.mubr.bf16.gmra.mxu0 %v4329
          %v4918 = vpop.f32.mrf.mxu0
          %v4919 = vadd.f32 0.0, %v4918
          %v4920 = vpop.f32.mrf.mxu0
          %v4921 = vpop.f32.mrf.mxu0
          %v4922 = vadd.f32 0.0, %v4921
          %v4923 = vpop.f32.mrf.mxu0
          %4924 = vmatprep.mubr.bf16.mxu0 0
          %4925 = vmatmul.mubr.bf16.gmra.mxu0 %v4330
          %v4926 = vpop.f32.mrf.mxu0
          %v4927 = vadd.f32 0.0, %v4926
          %v4928 = vpop.f32.mrf.mxu0
          %v4929 = vpop.f32.mrf.mxu0
          %v4930 = vadd.f32 0.0, %v4929
          %v4931 = vpop.f32.mrf.mxu0
          %4932 = vmatprep.mubr.bf16.mxu0 0
          %4933 = vmatmul.mubr.bf16.gmra.mxu0 %v4331
          %v4934 = vpop.f32.mrf.mxu0
          %v4935 = vadd.f32 0.0, %v4934
          %v4936 = vpop.f32.mrf.mxu0
          %v4937 = vpop.f32.mrf.mxu0
          %v4938 = vadd.f32 0.0, %v4937
          %v4939 = vpop.f32.mrf.mxu0
          %4940 = vmatprep.mubr.bf16.mxu0 0
          %4941 = vmatmul.mubr.bf16.gmra.mxu0 %v4332
          %v4942 = vpop.f32.mrf.mxu0
          %v4943 = vadd.f32 0.0, %v4942
          %v4944 = vpop.f32.mrf.mxu0
          %v4945 = vpop.f32.mrf.mxu0
          %v4946 = vadd.f32 0.0, %v4945
          %v4947 = vpop.f32.mrf.mxu0
          %4948 = vmatprep.mubr.bf16.mxu0 0
          %4949 = vmatmul.mubr.bf16.gmra.mxu0 %v4333
          %v4950 = vpop.f32.mrf.mxu0
          %v4951 = vadd.f32 0.0, %v4950
          %v4952 = vpop.f32.mrf.mxu0
          %v4953 = vpop.f32.mrf.mxu0
          %v4954 = vadd.f32 0.0, %v4953
          %v4955 = vpop.f32.mrf.mxu0
          %4956 = vmatprep.mubr.bf16.mxu0 0
          %4957 = vmatmul.mubr.bf16.gmra.mxu0 %v4334
          %v4958 = vpop.f32.mrf.mxu0
          %v4959 = vadd.f32 0.0, %v4958
          %v4960 = vpop.f32.mrf.mxu0
          %v4961 = vpop.f32.mrf.mxu0
          %v4962 = vadd.f32 0.0, %v4961
          %v4963 = vpop.f32.mrf.mxu0
          %4964 = vmatprep.mubr.bf16.mxu0 0
          %4965 = vmatmul.mubr.bf16.gmra.mxu0 %v4335
          %v4966 = vpop.f32.mrf.mxu0
          %v4967 = vadd.f32 0.0, %v4966
          %v4968 = vpop.f32.mrf.mxu0
          %v4969 = vpop.f32.mrf.mxu0
          %v4970 = vadd.f32 0.0, %v4969
          %v4971 = vpop.f32.mrf.mxu0
          %4972 = vmatprep.mubr.bf16.mxu0 0
          %4973 = vmatmul.mubr.bf16.gmra.mxu0 %v4336
          %v4974 = vpop.f32.mrf.mxu0
          %v4975 = vadd.f32 0.0, %v4974
          %v4976 = vpop.f32.mrf.mxu0
          %v4977 = vpop.f32.mrf.mxu0
          %v4978 = vadd.f32 0.0, %v4977
          %v4979 = vpop.f32.mrf.mxu0
          %4980 = vdwg.mxu0
          %v4981 = vrcp.pop %v4178
          %v4982 = vrcp.pop %v4180
          %v4983 = vrcp.pop %v4182
          %v4984 = vrcp.pop %v4184
          %v4985 = vrcp.pop %v4186
          %v4986 = vrcp.pop %v4188
          %v4987 = vrcp.pop %v4190
          %v4988 = vrcp.pop %v4192
          %v4989 = vrcp.pop %v4194
          %v4990 = vrcp.pop %v4196
          %v4991 = vrcp.pop %v4198
          %v4992 = vrcp.pop %v4200
          %v4993 = vrcp.pop %v4202
          %v4994 = vrcp.pop %v4204
          %v4995 = vrcp.pop %v4206
          %v4996 = vrcp.pop %v4208
          %v4997 = vrcp.pop %v4210
          %v4998 = vrcp.pop %v4212
          %v4999 = vrcp.pop %v4214
          %v5000 = vrcp.pop %v4216
          %v5001 = vrcp.pop %v4218
          %v5002 = vrcp.pop %v4220
          %v5003 = vrcp.pop %v4222
          %v5004 = vrcp.pop %v4224
          %v5005 = vrcp.pop %v4226
          %v5006 = vrcp.pop %v4228
          %v5007 = vrcp.pop %v4230
          %v5008 = vrcp.pop %v4232
          %v5009 = vrcp.pop %v4234
          %v5010 = vrcp.pop %v4236
          %v5011 = vrcp.pop %v4238
          %v5012 = vrcp.pop %v4240
          %v5013 = vrcp.pop %v4242
          %v5014 = vrcp.pop %v4244
          %v5015 = vrcp.pop %v4246
          %v5016 = vrcp.pop %v4248
          %v5017 = vrcp.pop %v4250
          %v5018 = vrcp.pop %v4252
          %v5019 = vrcp.pop %v4254
          %v5020 = vrcp.pop %v4256
          %v5021 = vrcp.pop %v4258
          %v5022 = vrcp.pop %v4260
          %v5023 = vrcp.pop %v4262
          %v5024 = vrcp.pop %v4264
          %v5025 = vrcp.pop %v4266
          %v5026 = vrcp.pop %v4268
          %v5027 = vrcp.pop %v4270
          %v5028 = vrcp.pop %v4272
          %v5029 = vrcp.pop %v4274
          %v5030 = vrcp.pop %v4276
          %v5031 = vrcp.pop %v4278
          %v5032 = vrcp.pop %v4280
          %v5033 = vrcp.pop %v4282
          %v5034 = vrcp.pop %v4284
          %v5035 = vrcp.pop %v4286
          %v5036 = vrcp.pop %v4288
          %v5037 = vrcp.pop %v4290
          %v5038 = vrcp.pop %v4292
          %v5039 = vrcp.pop %v4294
          %v5040 = vrcp.pop %v4296
          %v5041 = vrcp.pop %v4298
          %v5042 = vrcp.pop %v4300
          %v5043 = vrcp.pop %v4302
          %v5044 = vrcp.pop %v4304
          %v5045 = vmul.f32 %v4484, %v4981
          %v5046 = vmul.f32 %v4487, %v4982
          %v5047 = vmul.f32 %v4492, %v4983
          %v5048 = vmul.f32 %v4495, %v4984
          %v5049 = vmul.f32 %v4500, %v4985
          %v5050 = vmul.f32 %v4503, %v4986
          %v5051 = vmul.f32 %v4508, %v4987
          %v5052 = vmul.f32 %v4511, %v4988
          %v5053 = vmul.f32 %v4516, %v4989
          %v5054 = vmul.f32 %v4519, %v4990
          %v5055 = vmul.f32 %v4524, %v4991
          %v5056 = vmul.f32 %v4527, %v4992
          %v5057 = vmul.f32 %v4532, %v4993
          %v5058 = vmul.f32 %v4535, %v4994
          %v5059 = vmul.f32 %v4540, %v4995
          %v5060 = vmul.f32 %v4543, %v4996
          %v5061 = vmul.f32 %v4629, %v4997
          %v5062 = vmul.f32 %v4632, %v4998
          %v5063 = vmul.f32 %v4637, %v4999
          %v5064 = vmul.f32 %v4640, %v5000
          %v5065 = vmul.f32 %v4645, %v5001
          %v5066 = vmul.f32 %v4648, %v5002
          %v5067 = vmul.f32 %v4653, %v5003
          %v5068 = vmul.f32 %v4656, %v5004
          %v5069 = vmul.f32 %v4661, %v5005
          %v5070 = vmul.f32 %v4664, %v5006
          %v5071 = vmul.f32 %v4669, %v5007
          %v5072 = vmul.f32 %v4672, %v5008
          %v5073 = vmul.f32 %v4677, %v5009
          %v5074 = vmul.f32 %v4680, %v5010
          %v5075 = vmul.f32 %v4685, %v5011
          %v5076 = vmul.f32 %v4688, %v5012
          %v5077 = vmul.f32 %v4774, %v5013
          %v5078 = vmul.f32 %v4777, %v5014
          %v5079 = vmul.f32 %v4782, %v5015
          %v5080 = vmul.f32 %v4785, %v5016
          %v5081 = vmul.f32 %v4790, %v5017
          %v5082 = vmul.f32 %v4793, %v5018
          %v5083 = vmul.f32 %v4798, %v5019
          %v5084 = vmul.f32 %v4801, %v5020
          %v5085 = vmul.f32 %v4806, %v5021
          %v5086 = vmul.f32 %v4809, %v5022
          %v5087 = vmul.f32 %v4814, %v5023
          %v5088 = vmul.f32 %v4817, %v5024
          %v5089 = vmul.f32 %v4822, %v5025
          %v5090 = vmul.f32 %v4825, %v5026
          %v5091 = vmul.f32 %v4830, %v5027
          %v5092 = vmul.f32 %v4833, %v5028
          %v5093 = vmul.f32 %v4919, %v5029
          %v5094 = vmul.f32 %v4922, %v5030
          %v5095 = vmul.f32 %v4927, %v5031
          %v5096 = vmul.f32 %v4930, %v5032
          %v5097 = vmul.f32 %v4935, %v5033
          %v5098 = vmul.f32 %v4938, %v5034
          %v5099 = vmul.f32 %v4943, %v5035
          %v5100 = vmul.f32 %v4946, %v5036
          %v5101 = vmul.f32 %v4951, %v5037
          %v5102 = vmul.f32 %v4954, %v5038
          %v5103 = vmul.f32 %v4959, %v5039
          %v5104 = vmul.f32 %v4962, %v5040
          %v5105 = vmul.f32 %v4967, %v5041
          %v5106 = vmul.f32 %v4970, %v5042
          %v5107 = vmul.f32 %v4975, %v5043
          %v5108 = vmul.f32 %v4978, %v5044
          %v5109 = vadd.f32 %v3085, %v5045
          %v5110 = vadd.f32 %v3086, %v5046
          %v5111 = vadd.f32 %v3087, %v5047
          %v5112 = vadd.f32 %v3088, %v5048
          %v5113 = vadd.f32 %v3089, %v5049
          %v5114 = vadd.f32 %v3090, %v5050
          %v5115 = vadd.f32 %v3091, %v5051
          %v5116 = vadd.f32 %v3092, %v5052
          %v5117 = vadd.f32 %v3093, %v5053
          %v5118 = vadd.f32 %v3094, %v5054
          %v5119 = vadd.f32 %v3095, %v5055
          %v5120 = vadd.f32 %v3096, %v5056
          %v5121 = vadd.f32 %v3097, %v5057
          %v5122 = vadd.f32 %v3098, %v5058
          %v5123 = vadd.f32 %v3099, %v5059
          %v5124 = vadd.f32 %v3100, %v5060
          %v5125 = vadd.f32 %v3101, %v5061
          %v5126 = vadd.f32 %v3102, %v5062
          %v5127 = vadd.f32 %v3103, %v5063
          %v5128 = vadd.f32 %v3104, %v5064
          %v5129 = vadd.f32 %v3105, %v5065
          %v5130 = vadd.f32 %v3106, %v5066
          %v5131 = vadd.f32 %v3107, %v5067
          %v5132 = vadd.f32 %v3108, %v5068
          %v5133 = vadd.f32 %v3109, %v5069
          %v5134 = vadd.f32 %v3110, %v5070
          %v5135 = vadd.f32 %v3111, %v5071
          %v5136 = vadd.f32 %v3112, %v5072
          %v5137 = vadd.f32 %v3113, %v5073
          %v5138 = vadd.f32 %v3114, %v5074
          %v5139 = vadd.f32 %v3115, %v5075
          %v5140 = vadd.f32 %v3116, %v5076
          %v5141 = vadd.f32 %v3117, %v5077
          %v5142 = vadd.f32 %v3118, %v5078
          %v5143 = vadd.f32 %v3119, %v5079
          %v5144 = vadd.f32 %v3120, %v5080
          %v5145 = vadd.f32 %v3121, %v5081
          %v5146 = vadd.f32 %v3122, %v5082
          %v5147 = vadd.f32 %v3123, %v5083
          %v5148 = vadd.f32 %v3124, %v5084
          %v5149 = vadd.f32 %v3125, %v5085
          %v5150 = vadd.f32 %v3126, %v5086
          %v5151 = vadd.f32 %v3127, %v5087
          %v5152 = vadd.f32 %v3128, %v5088
          %v5153 = vadd.f32 %v3129, %v5089
          %v5154 = vadd.f32 %v3130, %v5090
          %v5155 = vadd.f32 %v3131, %v5091
          %v5156 = vadd.f32 %v3132, %v5092
          %v5157 = vadd.f32 %v3133, %v5093
          %v5158 = vadd.f32 %v3134, %v5094
          %v5159 = vadd.f32 %v3135, %v5095
          %v5160 = vadd.f32 %v3136, %v5096
          %v5161 = vadd.f32 %v3137, %v5097
          %v5162 = vadd.f32 %v3138, %v5098
          %v5163 = vadd.f32 %v3139, %v5099
          %v5164 = vadd.f32 %v3140, %v5100
          %v5165 = vadd.f32 %v3141, %v5101
          %v5166 = vadd.f32 %v3142, %v5102
          %v5167 = vadd.f32 %v3143, %v5103
          %v5168 = vadd.f32 %v3144, %v5104
          %v5169 = vadd.f32 %v3145, %v5105
          %v5170 = vadd.f32 %v3146, %v5106
          %v5171 = vadd.f32 %v3147, %v5107
          %v5172 = vadd.f32 %v3148, %v5108
          %5173 = vst [vmem:[#allocation2] sm:$0xff] %v5109
          %5174 = vst [vmem:[#allocation2 + $0x8] sm:$0xff] %v5110
          %5175 = vst [vmem:[#allocation2 + $0x10] sm:$0xff] %v5111
          %5176 = vst [vmem:[#allocation2 + $0x18] sm:$0xff] %v5112
          %5177 = vst [vmem:[#allocation2 + $0x20] sm:$0xff] %v5113
          %5178 = vst [vmem:[#allocation2 + $0x28] sm:$0xff] %v5114
          %5179 = vst [vmem:[#allocation2 + $0x30] sm:$0xff] %v5115
          %5180 = vst [vmem:[#allocation2 + $0x38] sm:$0xff] %v5116
          %5181 = vst [vmem:[#allocation2 + $0x40] sm:$0xff] %v5117
          %5182 = vst [vmem:[#allocation2 + $0x48] sm:$0xff] %v5118
          %5183 = vst [vmem:[#allocation2 + $0x50] sm:$0xff] %v5119
          %5184 = vst [vmem:[#allocation2 + $0x58] sm:$0xff] %v5120
          %5185 = vst [vmem:[#allocation2 + $0x60] sm:$0xff] %v5121
          %5186 = vst [vmem:[#allocation2 + $0x68] sm:$0xff] %v5122
          %5187 = vst [vmem:[#allocation2 + $0x70] sm:$0xff] %v5123
          %5188 = vst [vmem:[#allocation2 + $0x78] sm:$0xff] %v5124
          %5189 = vst [vmem:[#allocation2 + $0x80] sm:$0xff] %v5125
          %5190 = vst [vmem:[#allocation2 + $0x88] sm:$0xff] %v5126
          %5191 = vst [vmem:[#allocation2 + $0x90] sm:$0xff] %v5127
          %5192 = vst [vmem:[#allocation2 + $0x98] sm:$0xff] %v5128
          %5193 = vst [vmem:[#allocation2 + $0xa0] sm:$0xff] %v5129
          %5194 = vst [vmem:[#allocation2 + $0xa8] sm:$0xff] %v5130
          %5195 = vst [vmem:[#allocation2 + $0xb0] sm:$0xff] %v5131
          %5196 = vst [vmem:[#allocation2 + $0xb8] sm:$0xff] %v5132
          %5197 = vst [vmem:[#allocation2 + $0xc0] sm:$0xff] %v5133
          %5198 = vst [vmem:[#allocation2 + $0xc8] sm:$0xff] %v5134
          %5199 = vst [vmem:[#allocation2 + $0xd0] sm:$0xff] %v5135
          %5200 = vst [vmem:[#allocation2 + $0xd8] sm:$0xff] %v5136
          %5201 = vst [vmem:[#allocation2 + $0xe0] sm:$0xff] %v5137
          %5202 = vst [vmem:[#allocation2 + $0xe8] sm:$0xff] %v5138
          %5203 = vst [vmem:[#allocation2 + $0xf0] sm:$0xff] %v5139
          %5204 = vst [vmem:[#allocation2 + $0xf8] sm:$0xff] %v5140
          %5205 = vst [vmem:[#allocation2 + $0x100] sm:$0xff] %v5141
          %5206 = vst [vmem:[#allocation2 + $0x108] sm:$0xff] %v5142
          %5207 = vst [vmem:[#allocation2 + $0x110] sm:$0xff] %v5143
          %5208 = vst [vmem:[#allocation2 + $0x118] sm:$0xff] %v5144
          %5209 = vst [vmem:[#allocation2 + $0x120] sm:$0xff] %v5145
          %5210 = vst [vmem:[#allocation2 + $0x128] sm:$0xff] %v5146
          %5211 = vst [vmem:[#allocation2 + $0x130] sm:$0xff] %v5147
          %5212 = vst [vmem:[#allocation2 + $0x138] sm:$0xff] %v5148
          %5213 = vst [vmem:[#allocation2 + $0x140] sm:$0xff] %v5149
          %5214 = vst [vmem:[#allocation2 + $0x148] sm:$0xff] %v5150
          %5215 = vst [vmem:[#allocation2 + $0x150] sm:$0xff] %v5151
          %5216 = vst [vmem:[#allocation2 + $0x158] sm:$0xff] %v5152
          %5217 = vst [vmem:[#allocation2 + $0x160] sm:$0xff] %v5153
          %5218 = vst [vmem:[#allocation2 + $0x168] sm:$0xff] %v5154
          %5219 = vst [vmem:[#allocation2 + $0x170] sm:$0xff] %v5155
          %5220 = vst [vmem:[#allocation2 + $0x178] sm:$0xff] %v5156
          %5221 = vst [vmem:[#allocation2 + $0x180] sm:$0xff] %v5157
          %5222 = vst [vmem:[#allocation2 + $0x188] sm:$0xff] %v5158
          %5223 = vst [vmem:[#allocation2 + $0x190] sm:$0xff] %v5159
          %5224 = vst [vmem:[#allocation2 + $0x198] sm:$0xff] %v5160
          %5225 = vst [vmem:[#allocation2 + $0x1a0] sm:$0xff] %v5161
          %5226 = vst [vmem:[#allocation2 + $0x1a8] sm:$0xff] %v5162
          %5227 = vst [vmem:[#allocation2 + $0x1b0] sm:$0xff] %v5163
          %5228 = vst [vmem:[#allocation2 + $0x1b8] sm:$0xff] %v5164
          %5229 = vst [vmem:[#allocation2 + $0x1c0] sm:$0xff] %v5165
          %5230 = vst [vmem:[#allocation2 + $0x1c8] sm:$0xff] %v5166
          %5231 = vst [vmem:[#allocation2 + $0x1d0] sm:$0xff] %v5167
          %5232 = vst [vmem:[#allocation2 + $0x1d8] sm:$0xff] %v5168
          %5233 = vst [vmem:[#allocation2 + $0x1e0] sm:$0xff] %v5169
          %5234 = vst [vmem:[#allocation2 + $0x1e8] sm:$0xff] %v5170
          %5235 = vst [vmem:[#allocation2 + $0x1f0] sm:$0xff] %v5171
          %5236 = vst [vmem:[#allocation2 + $0x1f8] sm:$0xff] %v5172
        $region68: #{tpu_custom_call.1} parent=39 // pred_fallthru
          _
        // Predicated region
        $region69: #{tpu_custom_call.1} parent=39 // pred_check
          %p5237 = pneg %p604
        $region70: #{tpu_custom_call.1} parent=39 // pred_check_branch
          %5239 = sbr.rel (%p5237) target = $region72
        $region71: #{tpu_custom_call.1} parent=39 // pred_region
          %v5240 = vld [vmem:[#allocation2] sm:$0xff]
          %v5241 = vld [vmem:[#allocation2 + $0x8] sm:$0xff]
          %v5242 = vld [vmem:[#allocation2 + $0x10] sm:$0xff]
          %v5243 = vld [vmem:[#allocation2 + $0x18] sm:$0xff]
          %v5244 = vld [vmem:[#allocation2 + $0x20] sm:$0xff]
          %v5245 = vld [vmem:[#allocation2 + $0x28] sm:$0xff]
          %v5246 = vld [vmem:[#allocation2 + $0x30] sm:$0xff]
          %v5247 = vld [vmem:[#allocation2 + $0x38] sm:$0xff]
          %v5248 = vld [vmem:[#allocation2 + $0x40] sm:$0xff]
          %v5249 = vld [vmem:[#allocation2 + $0x48] sm:$0xff]
          %v5250 = vld [vmem:[#allocation2 + $0x50] sm:$0xff]
          %v5251 = vld [vmem:[#allocation2 + $0x58] sm:$0xff]
          %v5252 = vld [vmem:[#allocation2 + $0x60] sm:$0xff]
          %v5253 = vld [vmem:[#allocation2 + $0x68] sm:$0xff]
          %v5254 = vld [vmem:[#allocation2 + $0x70] sm:$0xff]
          %v5255 = vld [vmem:[#allocation2 + $0x78] sm:$0xff]
          %v5256 = vld [vmem:[#allocation2 + $0x80] sm:$0xff]
          %v5257 = vld [vmem:[#allocation2 + $0x88] sm:$0xff]
          %v5258 = vld [vmem:[#allocation2 + $0x90] sm:$0xff]
          %v5259 = vld [vmem:[#allocation2 + $0x98] sm:$0xff]
          %v5260 = vld [vmem:[#allocation2 + $0xa0] sm:$0xff]
          %v5261 = vld [vmem:[#allocation2 + $0xa8] sm:$0xff]
          %v5262 = vld [vmem:[#allocation2 + $0xb0] sm:$0xff]
          %v5263 = vld [vmem:[#allocation2 + $0xb8] sm:$0xff]
          %v5264 = vld [vmem:[#allocation2 + $0xc0] sm:$0xff]
          %v5265 = vld [vmem:[#allocation2 + $0xc8] sm:$0xff]
          %v5266 = vld [vmem:[#allocation2 + $0xd0] sm:$0xff]
          %v5267 = vld [vmem:[#allocation2 + $0xd8] sm:$0xff]
          %v5268 = vld [vmem:[#allocation2 + $0xe0] sm:$0xff]
          %v5269 = vld [vmem:[#allocation2 + $0xe8] sm:$0xff]
          %v5270 = vld [vmem:[#allocation2 + $0xf0] sm:$0xff]
          %v5271 = vld [vmem:[#allocation2 + $0xf8] sm:$0xff]
          %v5272 = vld [vmem:[#allocation2 + $0x100] sm:$0xff]
          %v5273 = vld [vmem:[#allocation2 + $0x108] sm:$0xff]
          %v5274 = vld [vmem:[#allocation2 + $0x110] sm:$0xff]
          %v5275 = vld [vmem:[#allocation2 + $0x118] sm:$0xff]
          %v5276 = vld [vmem:[#allocation2 + $0x120] sm:$0xff]
          %v5277 = vld [vmem:[#allocation2 + $0x128] sm:$0xff]
          %v5278 = vld [vmem:[#allocation2 + $0x130] sm:$0xff]
          %v5279 = vld [vmem:[#allocation2 + $0x138] sm:$0xff]
          %v5280 = vld [vmem:[#allocation2 + $0x140] sm:$0xff]
          %v5281 = vld [vmem:[#allocation2 + $0x148] sm:$0xff]
          %v5282 = vld [vmem:[#allocation2 + $0x150] sm:$0xff]
          %v5283 = vld [vmem:[#allocation2 + $0x158] sm:$0xff]
          %v5284 = vld [vmem:[#allocation2 + $0x160] sm:$0xff]
          %v5285 = vld [vmem:[#allocation2 + $0x168] sm:$0xff]
          %v5286 = vld [vmem:[#allocation2 + $0x170] sm:$0xff]
          %v5287 = vld [vmem:[#allocation2 + $0x178] sm:$0xff]
          %v5288 = vld [vmem:[#allocation2 + $0x180] sm:$0xff]
          %v5289 = vld [vmem:[#allocation2 + $0x188] sm:$0xff]
          %v5290 = vld [vmem:[#allocation2 + $0x190] sm:$0xff]
          %v5291 = vld [vmem:[#allocation2 + $0x198] sm:$0xff]
          %v5292 = vld [vmem:[#allocation2 + $0x1a0] sm:$0xff]
          %v5293 = vld [vmem:[#allocation2 + $0x1a8] sm:$0xff]
          %v5294 = vld [vmem:[#allocation2 + $0x1b0] sm:$0xff]
          %v5295 = vld [vmem:[#allocation2 + $0x1b8] sm:$0xff]
          %v5296 = vld [vmem:[#allocation2 + $0x1c0] sm:$0xff]
          %v5297 = vld [vmem:[#allocation2 + $0x1c8] sm:$0xff]
          %v5298 = vld [vmem:[#allocation2 + $0x1d0] sm:$0xff]
          %v5299 = vld [vmem:[#allocation2 + $0x1d8] sm:$0xff]
          %v5300 = vld [vmem:[#allocation2 + $0x1e0] sm:$0xff]
          %v5301 = vld [vmem:[#allocation2 + $0x1e8] sm:$0xff]
          %v5302 = vld [vmem:[#allocation2 + $0x1f0] sm:$0xff]
          %v5303 = vld [vmem:[#allocation2 + $0x1f8] sm:$0xff]
          %5304 = vst [vmem:[%s586] sm:$0xff] %v5240
          %5305 = vst [vmem:[%s586 + $0x8] sm:$0xff] %v5241
          %5306 = vst [vmem:[%s586 + $0x10] sm:$0xff] %v5242
          %5307 = vst [vmem:[%s586 + $0x18] sm:$0xff] %v5243
          %5308 = vst [vmem:[%s586 + $0x20] sm:$0xff] %v5244
          %5309 = vst [vmem:[%s586 + $0x28] sm:$0xff] %v5245
          %5310 = vst [vmem:[%s586 + $0x30] sm:$0xff] %v5246
          %5311 = vst [vmem:[%s586 + $0x38] sm:$0xff] %v5247
          %5312 = vst [vmem:[%s586 + $0x40] sm:$0xff] %v5248
          %5313 = vst [vmem:[%s586 + $0x48] sm:$0xff] %v5249
          %5314 = vst [vmem:[%s586 + $0x50] sm:$0xff] %v5250
          %5315 = vst [vmem:[%s586 + $0x58] sm:$0xff] %v5251
          %5316 = vst [vmem:[%s586 + $0x60] sm:$0xff] %v5252
          %5317 = vst [vmem:[%s586 + $0x68] sm:$0xff] %v5253
          %5318 = vst [vmem:[%s586 + $0x70] sm:$0xff] %v5254
          %5319 = vst [vmem:[%s586 + $0x78] sm:$0xff] %v5255
          %5320 = vst [vmem:[%s586 + $0x80] sm:$0xff] %v5256
          %5321 = vst [vmem:[%s586 + $0x88] sm:$0xff] %v5257
          %5322 = vst [vmem:[%s586 + $0x90] sm:$0xff] %v5258
          %5323 = vst [vmem:[%s586 + $0x98] sm:$0xff] %v5259
          %5324 = vst [vmem:[%s586 + $0xa0] sm:$0xff] %v5260
          %5325 = vst [vmem:[%s586 + $0xa8] sm:$0xff] %v5261
          %5326 = vst [vmem:[%s586 + $0xb0] sm:$0xff] %v5262
          %5327 = vst [vmem:[%s586 + $0xb8] sm:$0xff] %v5263
          %5328 = vst [vmem:[%s586 + $0xc0] sm:$0xff] %v5264
          %5329 = vst [vmem:[%s586 + $0xc8] sm:$0xff] %v5265
          %5330 = vst [vmem:[%s586 + $0xd0] sm:$0xff] %v5266
          %5331 = vst [vmem:[%s586 + $0xd8] sm:$0xff] %v5267
          %5332 = vst [vmem:[%s586 + $0xe0] sm:$0xff] %v5268
          %5333 = vst [vmem:[%s586 + $0xe8] sm:$0xff] %v5269
          %5334 = vst [vmem:[%s586 + $0xf0] sm:$0xff] %v5270
          %5335 = vst [vmem:[%s586 + $0xf8] sm:$0xff] %v5271
          %5336 = vst [vmem:[%s586 + $0x100] sm:$0xff] %v5272
          %5337 = vst [vmem:[%s586 + $0x108] sm:$0xff] %v5273
          %5338 = vst [vmem:[%s586 + $0x110] sm:$0xff] %v5274
          %5339 = vst [vmem:[%s586 + $0x118] sm:$0xff] %v5275
          %5340 = vst [vmem:[%s586 + $0x120] sm:$0xff] %v5276
          %5341 = vst [vmem:[%s586 + $0x128] sm:$0xff] %v5277
          %5342 = vst [vmem:[%s586 + $0x130] sm:$0xff] %v5278
          %5343 = vst [vmem:[%s586 + $0x138] sm:$0xff] %v5279
          %5344 = vst [vmem:[%s586 + $0x140] sm:$0xff] %v5280
          %5345 = vst [vmem:[%s586 + $0x148] sm:$0xff] %v5281
          %5346 = vst [vmem:[%s586 + $0x150] sm:$0xff] %v5282
          %5347 = vst [vmem:[%s586 + $0x158] sm:$0xff] %v5283
          %5348 = vst [vmem:[%s586 + $0x160] sm:$0xff] %v5284
          %5349 = vst [vmem:[%s586 + $0x168] sm:$0xff] %v5285
          %5350 = vst [vmem:[%s586 + $0x170] sm:$0xff] %v5286
          %5351 = vst [vmem:[%s586 + $0x178] sm:$0xff] %v5287
          %5352 = vst [vmem:[%s586 + $0x180] sm:$0xff] %v5288
          %5353 = vst [vmem:[%s586 + $0x188] sm:$0xff] %v5289
          %5354 = vst [vmem:[%s586 + $0x190] sm:$0xff] %v5290
          %5355 = vst [vmem:[%s586 + $0x198] sm:$0xff] %v5291
          %5356 = vst [vmem:[%s586 + $0x1a0] sm:$0xff] %v5292
          %5357 = vst [vmem:[%s586 + $0x1a8] sm:$0xff] %v5293
          %5358 = vst [vmem:[%s586 + $0x1b0] sm:$0xff] %v5294
          %5359 = vst [vmem:[%s586 + $0x1b8] sm:$0xff] %v5295
          %5360 = vst [vmem:[%s586 + $0x1c0] sm:$0xff] %v5296
          %5361 = vst [vmem:[%s586 + $0x1c8] sm:$0xff] %v5297
          %5362 = vst [vmem:[%s586 + $0x1d0] sm:$0xff] %v5298
          %5363 = vst [vmem:[%s586 + $0x1d8] sm:$0xff] %v5299
          %5364 = vst [vmem:[%s586 + $0x1e0] sm:$0xff] %v5300
          %5365 = vst [vmem:[%s586 + $0x1e8] sm:$0xff] %v5301
          %5366 = vst [vmem:[%s586 + $0x1f0] sm:$0xff] %v5302
          %5367 = vst [vmem:[%s586 + $0x1f8] sm:$0xff] %v5303
        $region72: #{tpu_custom_call.1} parent=39 // pred_fallthru
          _
        %s5368 = sand.u32 %s216, 1
        %s5369 = scalar_lea.sflag [#allocation10], %s5368
        %s5370 = sand.u32 %s216, 1
        %s5371 = smul.addr %s5370, 512
        %s5372 = scalar_lea.vmem [#allocation17], %s5371
        // Predicated region
        $region73: #{tpu_custom_call.1} parent=39 // pred_check
          %p5373 = pneg %p226
        $region74: #{tpu_custom_call.1} parent=39 // pred_check_branch
          %5375 = sbr.rel (%p5373) target = $region76
        $region75: #{tpu_custom_call.1} parent=39 // pred_region
          #allocation29 [shape = 'u32[6]{0}', space=smem, size = 0x18, scoped, tag = 'DMA stride descriptor']
          %s5376 = sld [smem:[#allocation4 + %s47]]
          %s5377 = smul.u32 16, %s5376
          %s5379 = ssub.s32 8192, 8192
          %5380 = vsyncadd %s5369, %s5379
          %s5381 = smul.addr %s46, 256
          %s5382 = sadd.s32 %s5377, %s5381
          %s5383 = smul.addr %s5382, 128
          %s5384 = scalar_lea.hbm %s9, %s5383
          %s5386 = sshll.u32 1, 14
          %s5387 = sxor.u32 4294967295, %s5386
          %s5390 = sshll.u32 7, 18
          %s5391 = sxor.u32 4294967295, %s5390
          %s5392 = sand.u32 0, %s5391
          %s5394 = sor.u32 %s5392, 0
          %s5395 = sshll.u32 %s5372, 4
          %s5396 = int_to_ptr.vmem [resolvable:$true] %s5395
          %5402 = sst [smem:[#allocation29]] 2048
          %s5403 = scalar_lea.smem [#allocation29], 1
          %5404 = sst [smem:[%s5403]] 8192
          %s5405 = scalar_lea.smem [#allocation29], 2
          %5406 = sst [smem:[%s5405]] 16
          %s5407 = scalar_lea.smem [#allocation29], 3
          %5408 = sst [smem:[%s5407]] 128
          %s5409 = scalar_lea.smem [#allocation29], 4
          %5410 = sst [smem:[%s5409]] 128
          %s5411 = scalar_lea.smem [#allocation29], 5
          %5412 = sst [smem:[%s5411]] 8
          %5414 = dma.general %s5396, 8192, %s5384, %s5369, 131072, [#allocation29], %s5394, 0
        $region76: #{tpu_custom_call.1} parent=39 // pred_fallthru
          _
      $region40: #{tpu_custom_call.1} parent=5 // pred_fallthru
        _
      %p5415 = scmp.le.s32.totalorder 2, %s37
      // Predicated region
      $region77: #{tpu_custom_call.1} parent=5 // pred_check
        %p5416 = pneg %p5415
      $region78: #{tpu_custom_call.1} parent=5 // pred_check_branch
        %5418 = sbr.rel (%p5416) target = $region80
      $region79: #{tpu_custom_call.1} parent=5 // pred_region
        %s5419 = ssub.s32 %s37, 2
        // Predicated region
        $region81: #{tpu_custom_call.1} parent=79 // pred_check
          %p5420 = pneg %p232
        $region82: #{tpu_custom_call.1} parent=79 // pred_check_branch
          %5422 = sbr.rel (%p5420) target = $region84
        $region83: #{tpu_custom_call.1} parent=79 // pred_region
          %s5423 = sand.u32 %s217, 1
          %s5424 = scalar_lea.sflag [#allocation10], %s5423
          %s5425 = sand.u32 %s217, 1
          %s5426 = smul.addr %s5425, 512
          %s5427 = scalar_lea.vmem [#allocation17], %s5426
          %5428 = dma.done %s5424, 8192
        $region84: #{tpu_custom_call.1} parent=79 // pred_fallthru
          _
      $region80: #{tpu_custom_call.1} parent=5 // pred_fallthru
        _
    $region6: #{tpu_custom_call.1} parent=1 // loop_footer
      %s41 = sadd.s32 1, %s37
    $region7: #{tpu_custom_call.1} parent=1 // loop_footer_branch
      %36 = sbr.rel target = $region3
    $region8: #{tpu_custom_call.1} parent=1 // loop_exit
      _
    %5429 = vsyncpa [#allocation9], 1
    %s5430 = scalar_lea.sflag [#allocation9], 1
    %5431 = vsyncpa %s5430, 1
    %5432 = vsyncpa [#allocation12], 1
    %s5433 = scalar_lea.sflag [#allocation12], 1
    %5434 = vsyncpa %s5433, 1
    %5435 = vsyncpa [#allocation15], 1
    %s5436 = scalar_lea.sflag [#allocation15], 1
    %5437 = vsyncpa %s5436, 1
    %5438 = vsyncpa [#allocation10], 1
    %s5439 = scalar_lea.sflag [#allocation10], 1
    %5440 = vsyncpa %s5439, 1

</llo_original>
